<compile_context>
chip_gen: v6e
topology: v6e:2x2x1
jax: 0.10.0
libtpu: 0.0.40
codegen_flags: <defaults>
</compile_context>

<pallas_src>
import numpy as np
import jax
import jax.numpy as jnp
from jax.experimental import pallas as pl
from jax.experimental.pallas import tpu as pltpu


# ---------------------------- configuration ---------------------------------

class Cfg:
    strides = (4, 2)
    feature_channel = (8, 4)
    out_channel = 8


# ---------------------------- parameters ------------------------------------

def _kaiming_hwio(key, cin, cout, k):
    # kaiming_normal_(mode='fan_out', nonlinearity='relu')
    fan_out = cout * k * k
    std = float(np.sqrt(2.0 / fan_out))
    return std * jax.random.normal(key, (k, k, cin, cout), jnp.float32)


def _brn_affine(key, c, eps=1e-5):
    # BatchRenorm2d (inference) == per-channel affine from running stats.
    k1, k2, k3, k4 = jax.random.split(key, 4)
    gamma = 1.0 + 0.1 * jax.random.normal(k1, (c,), jnp.float32)
    beta = 0.1 * jax.random.normal(k2, (c,), jnp.float32)
    mean = 0.1 * jax.random.normal(k3, (c,), jnp.float32)
    var = 1.0 + 0.1 * jax.random.uniform(k4, (c,), jnp.float32)
    scale = gamma / jnp.sqrt(var + eps)
    shift = beta - mean * scale
    return scale, shift


def init_params(key, cfg):
    keys = iter(jax.random.split(key, 64))
    skip, up = [], []
    outc = None
    for i in range(len(cfg.strides)):
        cur = cfg.feature_channel[i]
        inc = cur if i == 0 else cur * 2
        outc = (cfg.feature_channel[i + 1]
                if i + 1 < len(cfg.feature_channel) else cfg.out_channel)
        sf = (cfg.strides[i] // cfg.strides[i + 1]
              if i + 1 < len(cfg.strides) else cfg.strides[i])
        w = _kaiming_hwio(next(keys), inc, cur, 3)
        s, b = _brn_affine(next(keys), cur)
        skip.append(dict(w=w, scale=s, shift=b))
        w2 = _kaiming_hwio(next(keys), cur, outc, 3)
        s2, b2 = _brn_affine(next(keys), outc)
        up.append(dict(w=w2, scale=s2, shift=b2, scale_factor=sf))
    f = {}
    w1 = _kaiming_hwio(next(keys), outc + 3, outc, 3)
    b1 = 0.05 * jax.random.normal(next(keys), (outc,), jnp.float32)
    s1, sh1 = _brn_affine(next(keys), outc)
    f['w1'], f['scale1'], f['shift1'] = w1, s1, sh1 + b1 * s1   # fold conv bias
    w2 = _kaiming_hwio(next(keys), outc, outc // 2, 3)
    b2 = 0.05 * jax.random.normal(next(keys), (outc // 2,), jnp.float32)
    s2, sh2 = _brn_affine(next(keys), outc // 2)
    f['w2'], f['scale2'], f['shift2'] = w2, s2, sh2 + b2 * s2
    f['w3'] = _kaiming_hwio(next(keys), outc // 2, 2, 1).reshape(outc // 2, 2)
    f['b3'] = 0.05 * jax.random.normal(next(keys), (2,), jnp.float32)
    return dict(skip=skip, up=up, final=f)


# -------------------- host-side matrix preparation --------------------------

def _interp_matrix(n_in, n_out):
    # PyTorch nn.UpsamplingBilinear2d => bilinear with align_corners=True.
    if n_out == 1 or n_in == 1:
        m = np.zeros((n_out, n_in), np.float64)
        m[:, 0] = 1.0
        return m.astype(np.float32)
    src = np.arange(n_out, dtype=np.float64) * (n_in - 1) / (n_out - 1)
    lo = np.clip(np.floor(src).astype(np.int64), 0, n_in - 1)
    hi = np.minimum(lo + 1, n_in - 1)
    frac = src - lo
    m = np.zeros((n_out, n_in), np.float64)
    m[np.arange(n_out), lo] += 1.0 - frac
    m[np.arange(n_out), hi] += frac
    return m.astype(np.float32)


def _shift_eye(h, dy):
    # (L_dy @ X)[y, :] = X[y + dy, :]  (zero rows at the image border).
    return np.eye(h, h, k=dy, dtype=np.float32)


def _row_weight(w_kw, w_pix):
    # w_kw: (3, cin, cout) = conv weight for one kh, over kw.
    # Returns banded (w_pix*cin, w_pix*cout) matrix applying the three kw taps
    # and the cin->cout mix in one matmul on the (H, W*C) layout.
    _, cin, cout = w_kw.shape
    m = np.zeros((w_pix * cin, w_pix * cout), np.float32)
    for xo in range(w_pix):
        for dx in (-1, 0, 1):
            xi = xo + dx
            if 0 <= xi < w_pix:
                m[xi * cin:(xi + 1) * cin, xo * cout:(xo + 1) * cout] = w_kw[dx + 1]
    return m


def prepare_fused_params(params, cfg, H, W):
    """Flat list of matrices, in the order the fused kernel consumes them."""
    mats = []
    n_stages = len(cfg.strides)
    for i in range(n_stages):
        cur = cfg.feature_channel[i]
        outc = (cfg.feature_channel[i + 1]
                if i + 1 < len(cfg.feature_channel) else cfg.out_channel)
        sf = (cfg.strides[i] // cfg.strides[i + 1]
              if i + 1 < len(cfg.strides) else cfg.strides[i])
        rh, rw = H // cfg.strides[i], W // cfg.strides[i]

        # --- skip conv (3x3, no bias) + BRN (scale folded into weights) ------
        sp = params['skip'][i]
        wf = (np.asarray(sp['w'], np.float32) *
              np.asarray(sp['scale'], np.float32)[None, None, None, :])
        mats.append(np.stack([_shift_eye(rh, -1), _shift_eye(rh, +1)]))
        if i == 0:
            srcs = [wf]
        else:  # torch.cat((x, features[i]), dim=1) -> [x part | feature part]
            srcs = [wf[:, :, :cur, :], wf[:, :, cur:, :]]
        mats.append(np.stack([_row_weight(s[kh], rw)
                              for s in srcs for kh in range(3)]))
        mats.append(np.tile(np.asarray(sp['shift'], np.float32), rw)[None, :])

        # --- bilinear upsample fused into the following 3x3 conv ------------
        up = params['up'][i]
        wuf = (np.asarray(up['w'], np.float32) *
               np.asarray(up['scale'], np.float32)[None, None, None, :])
        ho, wo = rh * sf, rw * sf
        mh = _interp_matrix(rh, ho)
        mw = _interp_matrix(rw, wo)
        mats.append(np.stack([_shift_eye(ho, d) @ mh for d in (-1, 0, 1)]))
        kw = np.kron(mw.T, np.eye(cur, dtype=np.float32))
        mats.append(np.stack([kw @ _row_weight(wuf[kh], wo) for kh in range(3)]))
        mats.append(np.tile(np.asarray(up['shift'], np.float32), wo)[None, :])

    # --- final block ---------------------------------------------------------
    f = params['final']
    outc = cfg.out_channel
    w1f = (np.asarray(f['w1'], np.float32) *
           np.asarray(f['scale1'], np.float32)[None, None, None, :])
    mats.append(np.stack([_shift_eye(H, -1), _shift_eye(H, +1)]))
    mats.append(np.stack([_row_weight(w1f[kh, :, :3, :], W) for kh in range(3)]))  # image part
    mats.append(np.stack([_row_weight(w1f[kh, :, 3:, :], W) for kh in range(3)]))  # x part
    mats.append(np.tile(np.asarray(f['shift1'], np.float32), W)[None, :])
    w2f = (np.asarray(f['w2'], np.float32) *
           np.asarray(f['scale2'], np.float32)[None, None, None, :])
    mats.append(np.stack([_row_weight(w2f[kh], W) for kh in range(3)]))
    mats.append(np.tile(np.asarray(f['shift2'], np.float32), W)[None, :])
    # 1x1 head; fold the 2-class pairwise-difference matrix so that
    # sigmoid(x @ wh + bh) is exactly softmax(logits, axis=channel).
    w3 = np.asarray(f['w3'], np.float32)
    b3 = np.asarray(f['b3'], np.float32)
    diff = np.kron(np.eye(W, dtype=np.float32),
                   np.array([[1.0, -1.0], [-1.0, 1.0]], np.float32))
    mats.append(np.kron(np.eye(W, dtype=np.float32), w3) @ diff)
    mats.append((np.tile(b3, W)[None, :] @ diff).astype(np.float32))
    return [np.ascontiguousarray(m, np.float32) for m in mats]


# ----------------------------- Pallas kernel --------------------------------

def _make_unet_kernel(n_stages):
    def kernel(*refs):
        f32 = jnp.float32
        o_ref = refs[-1]
        img_ref = refs[0]
        feat_refs = refs[1:1 + n_stages]
        mat_refs = list(refs[1 + n_stages:-1])
        cursor = [0]

        def take():
            r = mat_refs[cursor[0]]
            cursor[0] += 1
            return r

        def mm(a, b):
            return jnp.dot(a, b, preferred_element_type=f32)

        def rowconv3(x, l_ref, w_ref, off):
            # 3x3 conv on the (H, W*C) layout: sum_dy (L_dy @ x) @ Wrow_dy.
            acc = mm(x, w_ref[off + 1])                       # dy = 0
            acc = acc + mm(mm(l_ref[0], x), w_ref[off + 0])   # dy = -1
            acc = acc + mm(mm(l_ref[1], x), w_ref[off + 2])   # dy = +1
            return acc

        x = None
        for i in range(n_stages):
            l_ref, sw_ref, sb_ref = take(), take(), take()
            ua_ref, ub_ref, ubias_ref = take(), take(), take()
            feat = feat_refs[i][0]
            if i == 0:
                y = rowconv3(feat, l_ref, sw_ref, 0)
            else:
                y = rowconv3(x, l_ref, sw_ref, 0) + rowconv3(feat, l_ref, sw_ref, 3)
            x = jnp.maximum(y + sb_ref[...], 0.0)
            # bilinear upsample folded into the next 3x3 conv:
            y = (mm(mm(ua_ref[0], x), ub_ref[0]) +
                 mm(mm(ua_ref[1], x), ub_ref[1]) +
                 mm(mm(ua_ref[2], x), ub_ref[2]))
            x = jnp.maximum(y + ubias_ref[...], 0.0)

        lf_ref, f1i_ref, f1x_ref, f1b_ref = take(), take(), take(), take()
        f2w_ref, f2b_ref, hw_ref, hb_ref = take(), take(), take(), take()

        y = rowconv3(img_ref[0], lf_ref, f1i_ref, 0) + rowconv3(x, lf_ref, f1x_ref, 0)
        x = jnp.maximum(y + f1b_ref[...], 0.0)
        y = rowconv3(x, lf_ref, f2w_ref, 0)
        x = jnp.maximum(y + f2b_ref[...], 0.0)
        # 1x1 head; exact 2-class softmax as sigmoid of the logit difference
        # (difference matrix already folded into hw_ref / hb_ref).
        d = mm(x, hw_ref[...]) + hb_ref[...]
        o_ref[0] = 1.0 / (1.0 + jnp.exp(-d))
    return kernel


def unet_forward_pallas(image_nchw, features_nchw, mats):
    n, cimg, H, W = image_nchw.shape
    n_stages = len(features_nchw)

    img2d = jnp.transpose(image_nchw, (0, 2, 3, 1)).reshape(n, H, W * cimg)
    feats = list(features_nchw)[::-1]           # forward() reverses features
    feat2d = [jnp.transpose(f, (0, 2, 3, 1)).reshape(
        f.shape[0], f.shape[2], f.shape[3] * f.shape[1]) for f in feats]

    data_inputs = [img2d] + feat2d
    weight_inputs = [jnp.asarray(m) for m in mats]

    in_specs = []
    for a in data_inputs:
        in_specs.append(pl.BlockSpec((1,) + a.shape[1:], lambda i: (i, 0, 0)))
    for a in weight_inputs:
        if a.ndim == 2:
            in_specs.append(pl.BlockSpec(a.shape, lambda i: (0, 0)))
        else:
            in_specs.append(pl.BlockSpec(a.shape, lambda i: (0, 0, 0)))

    out = pl.pallas_call(
        _make_unet_kernel(n_stages),
        out_shape=jax.ShapeDtypeStruct((n, H, 2 * W), jnp.float32),
        grid=(n,),
        in_specs=in_specs,
        out_specs=pl.BlockSpec((1, H, 2 * W), lambda i: (i, 0, 0)),
        compiler_params=pltpu.CompilerParams(
            dimension_semantics=("parallel",)),
    )(*data_inputs, *weight_inputs)

    # (N, H, W*2) -> NCHW probabilities (matches torch softmax over dim=1).
    return out.reshape(n, H, W, 2).transpose(0, 3, 1, 2)


# --------------------------- pure-JAX reference ------------------------------

def _conv3x3_ref(x, w, scale, shift, relu=True):
    y = jax.lax.conv_general_dilated(
        x, w, (1, 1), 'SAME',
        dimension_numbers=('NHWC', 'HWIO', 'NHWC'),
        precision=jax.lax.Precision.HIGHEST)
    y = y * scale + shift
    return jnp.maximum(y, 0.0) if relu else y


def _upsample_ref(x, scale_factor):
    n, h, wd, c = x.shape
    mh = jnp.asarray(_interp_matrix(h, h * scale_factor))
    mw = jnp.asarray(_interp_matrix(wd, wd * scale_factor))
    y = jnp.einsum('oh,nhwc->nowc', mh, x, precision=jax.lax.Precision.HIGHEST)
    y = jnp.einsum('pw,nowc->nopc', mw, y, precision=jax.lax.Precision.HIGHEST)
    return y


def unet_forward_ref(image_nchw, features_nchw, params):
    image = jnp.transpose(image_nchw, (0, 2, 3, 1))
    feats = [jnp.transpose(f, (0, 2, 3, 1)) for f in features_nchw][::-1]
    x = None
    for i in range(len(feats)):
        inp = feats[i] if i == 0 else jnp.concatenate([x, feats[i]], axis=-1)
        sp = params['skip'][i]
        x = _conv3x3_ref(inp, sp['w'], sp['scale'], sp['shift'])
        upp = params['up'][i]
        x = _upsample_ref(x, upp['scale_factor'])
        x = _conv3x3_ref(x, upp['w'], upp['scale'], upp['shift'])
    x = jnp.concatenate([image, x], axis=-1)
    f = params['final']
    x = _conv3x3_ref(x, f['w1'], f['scale1'], f['shift1'])
    x = _conv3x3_ref(x, f['w2'], f['scale2'], f['shift2'])
    logits = jnp.einsum('nhwc,cd->nhwd', x, f['w3'],
                        precision=jax.lax.Precision.HIGHEST) + f['b3']
    prob = jax.nn.softmax(logits, axis=-1)
    return jnp.transpose(prob, (0, 3, 1, 2))


# --------------------------------- main --------------------------------------

if __name__ == "__main__":
    cfg = Cfg()
    key = jax.random.PRNGKey(0)
    kp, ki, kf1, kf2 = jax.random.split(key, 4)
    params = init_params(kp, cfg)

    N, H, W = 2, 16, 16
    image = jax.random.normal(ki, (N, 3, H, W), jnp.float32)
    # features as the PyTorch module receives them (shallowest first);
    # forward reverses them internally.
    features = [
        jax.random.normal(
            kf1, (N, cfg.feature_channel[1], H // cfg.strides[1], W // cfg.strides[1]),
            jnp.float32),
        jax.random.normal(
            kf2, (N, cfg.feature_channel[0], H // cfg.strides[0], W // cfg.strides[0]),
            jnp.float32),
    ]

    mats = prepare_fused_params(params, cfg, H, W)

    fwd = jax.jit(unet_forward_pallas)
    prob = jax.block_until_ready(fwd(image, features, mats))
    assert prob.shape == (N, 2, H, W)

    prob_ref = jax.block_until_ready(unet_forward_ref(image, features, params))
    np.testing.assert_allclose(np.asarray(prob), np.asarray(prob_ref),
                               atol=2e-3, rtol=2e-3)
    print("KERNEL_OK")
</pallas_src>

<mosaic_0001>
module attributes {stable_mosaic.version = 11 : i64} {
  func.func @kernel(%arg0: i32, %arg1: memref<1x16x48xf32, #tpu.memory_space<vmem>>, %arg2: memref<1x4x32xf32, #tpu.memory_space<vmem>>, %arg3: memref<1x8x32xf32, #tpu.memory_space<vmem>>, %arg4: memref<2x4x4xf32, #tpu.memory_space<vmem>>, %arg5: memref<3x32x32xf32, #tpu.memory_space<vmem>>, %arg6: memref<1x32xf32, #tpu.memory_space<vmem>>, %arg7: memref<3x8x4xf32, #tpu.memory_space<vmem>>, %arg8: memref<3x32x32xf32, #tpu.memory_space<vmem>>, %arg9: memref<1x32xf32, #tpu.memory_space<vmem>>, %arg10: memref<2x8x8xf32, #tpu.memory_space<vmem>>, %arg11: memref<6x32x32xf32, #tpu.memory_space<vmem>>, %arg12: memref<1x32xf32, #tpu.memory_space<vmem>>, %arg13: memref<3x16x8xf32, #tpu.memory_space<vmem>>, %arg14: memref<3x32x128xf32, #tpu.memory_space<vmem>>, %arg15: memref<1x128xf32, #tpu.memory_space<vmem>>, %arg16: memref<2x16x16xf32, #tpu.memory_space<vmem>>, %arg17: memref<3x48x128xf32, #tpu.memory_space<vmem>>, %arg18: memref<3x128x128xf32, #tpu.memory_space<vmem>>, %arg19: memref<1x128xf32, #tpu.memory_space<vmem>>, %arg20: memref<3x128x64xf32, #tpu.memory_space<vmem>>, %arg21: memref<1x64xf32, #tpu.memory_space<vmem>>, %arg22: memref<64x32xf32, #tpu.memory_space<vmem>>, %arg23: memref<1x32xf32, #tpu.memory_space<vmem>>, %arg24: memref<1x16x32xf32, #tpu.memory_space<vmem>>) attributes {dimension_semantics = [#tpu.dimension_semantics<parallel>], iteration_bounds = array<i64: 2>, scalar_prefetch = 0 : i64, scratch_operands = 0 : i64, tpu.core_type = #tpu.core_type<tc>, window_params = [{transform_indices = @transform_0, window_bounds = array<i64: 1, 16, 48>}, {transform_indices = @transform_1, window_bounds = array<i64: 1, 4, 32>}, {transform_indices = @transform_2, window_bounds = array<i64: 1, 8, 32>}, {pipeline_mode = #tpu.pipeline_mode<synchronous>, transform_indices = @transform_3, window_bounds = array<i64: 2, 4, 4>}, {pipeline_mode = #tpu.pipeline_mode<synchronous>, transform_indices = @transform_4, window_bounds = array<i64: 3, 32, 32>}, {pipeline_mode = #tpu.pipeline_mode<synchronous>, transform_indices = @transform_5, window_bounds = array<i64: 1, 32>}, {pipeline_mode = #tpu.pipeline_mode<synchronous>, transform_indices = @transform_6, window_bounds = array<i64: 3, 8, 4>}, {pipeline_mode = #tpu.pipeline_mode<synchronous>, transform_indices = @transform_7, window_bounds = array<i64: 3, 32, 32>}, {pipeline_mode = #tpu.pipeline_mode<synchronous>, transform_indices = @transform_8, window_bounds = array<i64: 1, 32>}, {pipeline_mode = #tpu.pipeline_mode<synchronous>, transform_indices = @transform_9, window_bounds = array<i64: 2, 8, 8>}, {pipeline_mode = #tpu.pipeline_mode<synchronous>, transform_indices = @transform_10, window_bounds = array<i64: 6, 32, 32>}, {pipeline_mode = #tpu.pipeline_mode<synchronous>, transform_indices = @transform_11, window_bounds = array<i64: 1, 32>}, {pipeline_mode = #tpu.pipeline_mode<synchronous>, transform_indices = @transform_12, window_bounds = array<i64: 3, 16, 8>}, {pipeline_mode = #tpu.pipeline_mode<synchronous>, transform_indices = @transform_13, window_bounds = array<i64: 3, 32, 128>}, {pipeline_mode = #tpu.pipeline_mode<synchronous>, transform_indices = @transform_14, window_bounds = array<i64: 1, 128>}, {pipeline_mode = #tpu.pipeline_mode<synchronous>, transform_indices = @transform_15, window_bounds = array<i64: 2, 16, 16>}, {pipeline_mode = #tpu.pipeline_mode<synchronous>, transform_indices = @transform_16, window_bounds = array<i64: 3, 48, 128>}, {pipeline_mode = #tpu.pipeline_mode<synchronous>, transform_indices = @transform_17, window_bounds = array<i64: 3, 128, 128>}, {pipeline_mode = #tpu.pipeline_mode<synchronous>, transform_indices = @transform_18, window_bounds = array<i64: 1, 128>}, {pipeline_mode = #tpu.pipeline_mode<synchronous>, transform_indices = @transform_19, window_bounds = array<i64: 3, 128, 64>}, {pipeline_mode = #tpu.pipeline_mode<synchronous>, transform_indices = @transform_20, window_bounds = array<i64: 1, 64>}, {pipeline_mode = #tpu.pipeline_mode<synchronous>, transform_indices = @transform_21, window_bounds = array<i64: 64, 32>}, {pipeline_mode = #tpu.pipeline_mode<synchronous>, transform_indices = @transform_22, window_bounds = array<i64: 1, 32>}, {transform_indices = @transform_23, window_bounds = array<i64: 1, 16, 32>}]} {
    %c0 = arith.constant 0 : index
    %c0_0 = arith.constant 0 : index
    %c0_1 = arith.constant 0 : index
    %0 = vector.load %arg2[%c0, %c0_0, %c0_1] : memref<1x4x32xf32, #tpu.memory_space<vmem>>, vector<1x4x32xf32>
    %1 = vector.shape_cast %0 : vector<1x4x32xf32> to vector<4x32xf32>
    %c1 = arith.constant 1 : index
    %c0_2 = arith.constant 0 : index
    %c0_3 = arith.constant 0 : index
    %2 = vector.load %arg5[%c1, %c0_2, %c0_3] : memref<3x32x32xf32, #tpu.memory_space<vmem>>, vector<1x32x32xf32>
    %3 = vector.shape_cast %2 : vector<1x32x32xf32> to vector<32x32xf32>
    %cst = arith.constant dense<0.000000e+00> : vector<4x32xf32>
    %4 = tpu.matmul %1, %3, %cst {dimension_numbers = #tpu.dot_dimension_numbers<[1], [0], [0], [1], [0, 0, 1, 1], [], []>} : vector<4x32xf32>, vector<32x32xf32>, vector<4x32xf32> -> vector<4x32xf32>
    %c0_4 = arith.constant 0 : index
    %c0_5 = arith.constant 0 : index
    %c0_6 = arith.constant 0 : index
    %5 = vector.load %arg4[%c0_4, %c0_5, %c0_6] : memref<2x4x4xf32, #tpu.memory_space<vmem>>, vector<1x4x4xf32>
    %6 = vector.shape_cast %5 : vector<1x4x4xf32> to vector<4x4xf32>
    %cst_7 = arith.constant dense<0.000000e+00> : vector<4x32xf32>
    %7 = tpu.matmul %6, %1, %cst_7 {dimension_numbers = #tpu.dot_dimension_numbers<[1], [0], [0], [1], [0, 0, 1, 1], [], []>} : vector<4x4xf32>, vector<4x32xf32>, vector<4x32xf32> -> vector<4x32xf32>
    %c0_8 = arith.constant 0 : index
    %c0_9 = arith.constant 0 : index
    %c0_10 = arith.constant 0 : index
    %8 = vector.load %arg5[%c0_8, %c0_9, %c0_10] : memref<3x32x32xf32, #tpu.memory_space<vmem>>, vector<1x32x32xf32>
    %9 = vector.shape_cast %8 : vector<1x32x32xf32> to vector<32x32xf32>
    %cst_11 = arith.constant dense<0.000000e+00> : vector<4x32xf32>
    %10 = tpu.matmul %7, %9, %cst_11 {dimension_numbers = #tpu.dot_dimension_numbers<[1], [0], [0], [1], [0, 0, 1, 1], [], []>} : vector<4x32xf32>, vector<32x32xf32>, vector<4x32xf32> -> vector<4x32xf32>
    %11 = arith.addf %4, %10 : vector<4x32xf32>
    %c1_12 = arith.constant 1 : index
    %c0_13 = arith.constant 0 : index
    %c0_14 = arith.constant 0 : index
    %12 = vector.load %arg4[%c1_12, %c0_13, %c0_14] : memref<2x4x4xf32, #tpu.memory_space<vmem>>, vector<1x4x4xf32>
    %13 = vector.shape_cast %12 : vector<1x4x4xf32> to vector<4x4xf32>
    %cst_15 = arith.constant dense<0.000000e+00> : vector<4x32xf32>
    %14 = tpu.matmul %13, %1, %cst_15 {dimension_numbers = #tpu.dot_dimension_numbers<[1], [0], [0], [1], [0, 0, 1, 1], [], []>} : vector<4x4xf32>, vector<4x32xf32>, vector<4x32xf32> -> vector<4x32xf32>
    %c2 = arith.constant 2 : index
    %c0_16 = arith.constant 0 : index
    %c0_17 = arith.constant 0 : index
    %15 = vector.load %arg5[%c2, %c0_16, %c0_17] : memref<3x32x32xf32, #tpu.memory_space<vmem>>, vector<1x32x32xf32>
    %16 = vector.shape_cast %15 : vector<1x32x32xf32> to vector<32x32xf32>
    %cst_18 = arith.constant dense<0.000000e+00> : vector<4x32xf32>
    %17 = tpu.matmul %14, %16, %cst_18 {dimension_numbers = #tpu.dot_dimension_numbers<[1], [0], [0], [1], [0, 0, 1, 1], [], []>} : vector<4x32xf32>, vector<32x32xf32>, vector<4x32xf32> -> vector<4x32xf32>
    %18 = arith.addf %11, %17 : vector<4x32xf32>
    %c0_19 = arith.constant 0 : index
    %c0_20 = arith.constant 0 : index
    %19 = vector.load %arg6[%c0_19, %c0_20] : memref<1x32xf32, #tpu.memory_space<vmem>>, vector<1x32xf32>
    %20 = vector.broadcast %19 : vector<1x32xf32> to vector<4x32xf32>
    %21 = arith.addf %18, %20 : vector<4x32xf32>
    %cst_21 = arith.constant 0.000000e+00 : f32
    %22 = vector.broadcast %cst_21 : f32 to vector<4x32xf32>
    %23 = arith.maximumf %21, %22 : vector<4x32xf32>
    %c0_22 = arith.constant 0 : index
    %c0_23 = arith.constant 0 : index
    %c0_24 = arith.constant 0 : index
    %24 = vector.load %arg7[%c0_22, %c0_23, %c0_24] : memref<3x8x4xf32, #tpu.memory_space<vmem>>, vector<1x8x4xf32>
    %25 = vector.shape_cast %24 : vector<1x8x4xf32> to vector<8x4xf32>
    %cst_25 = arith.constant dense<0.000000e+00> : vector<8x32xf32>
    %26 = tpu.matmul %25, %23, %cst_25 {dimension_numbers = #tpu.dot_dimension_numbers<[1], [0], [0], [1], [0, 0, 1, 1], [], []>} : vector<8x4xf32>, vector<4x32xf32>, vector<8x32xf32> -> vector<8x32xf32>
    %c0_26 = arith.constant 0 : index
    %c0_27 = arith.constant 0 : index
    %c0_28 = arith.constant 0 : index
    %27 = vector.load %arg8[%c0_26, %c0_27, %c0_28] : memref<3x32x32xf32, #tpu.memory_space<vmem>>, vector<1x32x32xf32>
    %28 = vector.shape_cast %27 : vector<1x32x32xf32> to vector<32x32xf32>
    %cst_29 = arith.constant dense<0.000000e+00> : vector<8x32xf32>
    %29 = tpu.matmul %26, %28, %cst_29 {dimension_numbers = #tpu.dot_dimension_numbers<[1], [0], [0], [1], [0, 0, 1, 1], [], []>} : vector<8x32xf32>, vector<32x32xf32>, vector<8x32xf32> -> vector<8x32xf32>
    %c1_30 = arith.constant 1 : index
    %c0_31 = arith.constant 0 : index
    %c0_32 = arith.constant 0 : index
    %30 = vector.load %arg7[%c1_30, %c0_31, %c0_32] : memref<3x8x4xf32, #tpu.memory_space<vmem>>, vector<1x8x4xf32>
    %31 = vector.shape_cast %30 : vector<1x8x4xf32> to vector<8x4xf32>
    %cst_33 = arith.constant dense<0.000000e+00> : vector<8x32xf32>
    %32 = tpu.matmul %31, %23, %cst_33 {dimension_numbers = #tpu.dot_dimension_numbers<[1], [0], [0], [1], [0, 0, 1, 1], [], []>} : vector<8x4xf32>, vector<4x32xf32>, vector<8x32xf32> -> vector<8x32xf32>
    %c1_34 = arith.constant 1 : index
    %c0_35 = arith.constant 0 : index
    %c0_36 = arith.constant 0 : index
    %33 = vector.load %arg8[%c1_34, %c0_35, %c0_36] : memref<3x32x32xf32, #tpu.memory_space<vmem>>, vector<1x32x32xf32>
    %34 = vector.shape_cast %33 : vector<1x32x32xf32> to vector<32x32xf32>
    %cst_37 = arith.constant dense<0.000000e+00> : vector<8x32xf32>
    %35 = tpu.matmul %32, %34, %cst_37 {dimension_numbers = #tpu.dot_dimension_numbers<[1], [0], [0], [1], [0, 0, 1, 1], [], []>} : vector<8x32xf32>, vector<32x32xf32>, vector<8x32xf32> -> vector<8x32xf32>
    %36 = arith.addf %29, %35 : vector<8x32xf32>
    %c2_38 = arith.constant 2 : index
    %c0_39 = arith.constant 0 : index
    %c0_40 = arith.constant 0 : index
    %37 = vector.load %arg7[%c2_38, %c0_39, %c0_40] : memref<3x8x4xf32, #tpu.memory_space<vmem>>, vector<1x8x4xf32>
    %38 = vector.shape_cast %37 : vector<1x8x4xf32> to vector<8x4xf32>
    %cst_41 = arith.constant dense<0.000000e+00> : vector<8x32xf32>
    %39 = tpu.matmul %38, %23, %cst_41 {dimension_numbers = #tpu.dot_dimension_numbers<[1], [0], [0], [1], [0, 0, 1, 1], [], []>} : vector<8x4xf32>, vector<4x32xf32>, vector<8x32xf32> -> vector<8x32xf32>
    %c2_42 = arith.constant 2 : index
    %c0_43 = arith.constant 0 : index
    %c0_44 = arith.constant 0 : index
    %40 = vector.load %arg8[%c2_42, %c0_43, %c0_44] : memref<3x32x32xf32, #tpu.memory_space<vmem>>, vector<1x32x32xf32>
    %41 = vector.shape_cast %40 : vector<1x32x32xf32> to vector<32x32xf32>
    %cst_45 = arith.constant dense<0.000000e+00> : vector<8x32xf32>
    %42 = tpu.matmul %39, %41, %cst_45 {dimension_numbers = #tpu.dot_dimension_numbers<[1], [0], [0], [1], [0, 0, 1, 1], [], []>} : vector<8x32xf32>, vector<32x32xf32>, vector<8x32xf32> -> vector<8x32xf32>
    %43 = arith.addf %36, %42 : vector<8x32xf32>
    %c0_46 = arith.constant 0 : index
    %c0_47 = arith.constant 0 : index
    %44 = vector.load %arg9[%c0_46, %c0_47] : memref<1x32xf32, #tpu.memory_space<vmem>>, vector<1x32xf32>
    %45 = vector.broadcast %44 : vector<1x32xf32> to vector<8x32xf32>
    %46 = arith.addf %43, %45 : vector<8x32xf32>
    %cst_48 = arith.constant 0.000000e+00 : f32
    %47 = vector.broadcast %cst_48 : f32 to vector<8x32xf32>
    %48 = arith.maximumf %46, %47 : vector<8x32xf32>
    %c0_49 = arith.constant 0 : index
    %c0_50 = arith.constant 0 : index
    %c0_51 = arith.constant 0 : index
    %49 = vector.load %arg3[%c0_49, %c0_50, %c0_51] : memref<1x8x32xf32, #tpu.memory_space<vmem>>, vector<1x8x32xf32>
    %50 = vector.shape_cast %49 : vector<1x8x32xf32> to vector<8x32xf32>
    %c1_52 = arith.constant 1 : index
    %c0_53 = arith.constant 0 : index
    %c0_54 = arith.constant 0 : index
    %51 = vector.load %arg11[%c1_52, %c0_53, %c0_54] : memref<6x32x32xf32, #tpu.memory_space<vmem>>, vector<1x32x32xf32>
    %52 = vector.shape_cast %51 : vector<1x32x32xf32> to vector<32x32xf32>
    %cst_55 = arith.constant dense<0.000000e+00> : vector<8x32xf32>
    %53 = tpu.matmul %48, %52, %cst_55 {dimension_numbers = #tpu.dot_dimension_numbers<[1], [0], [0], [1], [0, 0, 1, 1], [], []>} : vector<8x32xf32>, vector<32x32xf32>, vector<8x32xf32> -> vector<8x32xf32>
    %c0_56 = arith.constant 0 : index
    %c0_57 = arith.constant 0 : index
    %c0_58 = arith.constant 0 : index
    %54 = vector.load %arg10[%c0_56, %c0_57, %c0_58] : memref<2x8x8xf32, #tpu.memory_space<vmem>>, vector<1x8x8xf32>
    %55 = vector.shape_cast %54 : vector<1x8x8xf32> to vector<8x8xf32>
    %cst_59 = arith.constant dense<0.000000e+00> : vector<8x32xf32>
    %56 = tpu.matmul %55, %48, %cst_59 {dimension_numbers = #tpu.dot_dimension_numbers<[1], [0], [0], [1], [0, 0, 1, 1], [], []>} : vector<8x8xf32>, vector<8x32xf32>, vector<8x32xf32> -> vector<8x32xf32>
    %c0_60 = arith.constant 0 : index
    %c0_61 = arith.constant 0 : index
    %c0_62 = arith.constant 0 : index
    %57 = vector.load %arg11[%c0_60, %c0_61, %c0_62] : memref<6x32x32xf32, #tpu.memory_space<vmem>>, vector<1x32x32xf32>
    %58 = vector.shape_cast %57 : vector<1x32x32xf32> to vector<32x32xf32>
    %cst_63 = arith.constant dense<0.000000e+00> : vector<8x32xf32>
    %59 = tpu.matmul %56, %58, %cst_63 {dimension_numbers = #tpu.dot_dimension_numbers<[1], [0], [0], [1], [0, 0, 1, 1], [], []>} : vector<8x32xf32>, vector<32x32xf32>, vector<8x32xf32> -> vector<8x32xf32>
    %60 = arith.addf %53, %59 : vector<8x32xf32>
    %c1_64 = arith.constant 1 : index
    %c0_65 = arith.constant 0 : index
    %c0_66 = arith.constant 0 : index
    %61 = vector.load %arg10[%c1_64, %c0_65, %c0_66] : memref<2x8x8xf32, #tpu.memory_space<vmem>>, vector<1x8x8xf32>
    %62 = vector.shape_cast %61 : vector<1x8x8xf32> to vector<8x8xf32>
    %cst_67 = arith.constant dense<0.000000e+00> : vector<8x32xf32>
    %63 = tpu.matmul %62, %48, %cst_67 {dimension_numbers = #tpu.dot_dimension_numbers<[1], [0], [0], [1], [0, 0, 1, 1], [], []>} : vector<8x8xf32>, vector<8x32xf32>, vector<8x32xf32> -> vector<8x32xf32>
    %c2_68 = arith.constant 2 : index
    %c0_69 = arith.constant 0 : index
    %c0_70 = arith.constant 0 : index
    %64 = vector.load %arg11[%c2_68, %c0_69, %c0_70] : memref<6x32x32xf32, #tpu.memory_space<vmem>>, vector<1x32x32xf32>
    %65 = vector.shape_cast %64 : vector<1x32x32xf32> to vector<32x32xf32>
    %cst_71 = arith.constant dense<0.000000e+00> : vector<8x32xf32>
    %66 = tpu.matmul %63, %65, %cst_71 {dimension_numbers = #tpu.dot_dimension_numbers<[1], [0], [0], [1], [0, 0, 1, 1], [], []>} : vector<8x32xf32>, vector<32x32xf32>, vector<8x32xf32> -> vector<8x32xf32>
    %67 = arith.addf %60, %66 : vector<8x32xf32>
    %c4 = arith.constant 4 : index
    %c0_72 = arith.constant 0 : index
    %c0_73 = arith.constant 0 : index
    %68 = vector.load %arg11[%c4, %c0_72, %c0_73] : memref<6x32x32xf32, #tpu.memory_space<vmem>>, vector<1x32x32xf32>
    %69 = vector.shape_cast %68 : vector<1x32x32xf32> to vector<32x32xf32>
    %cst_74 = arith.constant dense<0.000000e+00> : vector<8x32xf32>
    %70 = tpu.matmul %50, %69, %cst_74 {dimension_numbers = #tpu.dot_dimension_numbers<[1], [0], [0], [1], [0, 0, 1, 1], [], []>} : vector<8x32xf32>, vector<32x32xf32>, vector<8x32xf32> -> vector<8x32xf32>
    %c0_75 = arith.constant 0 : index
    %c0_76 = arith.constant 0 : index
    %c0_77 = arith.constant 0 : index
    %71 = vector.load %arg10[%c0_75, %c0_76, %c0_77] : memref<2x8x8xf32, #tpu.memory_space<vmem>>, vector<1x8x8xf32>
    %72 = vector.shape_cast %71 : vector<1x8x8xf32> to vector<8x8xf32>
    %cst_78 = arith.constant dense<0.000000e+00> : vector<8x32xf32>
    %73 = tpu.matmul %72, %50, %cst_78 {dimension_numbers = #tpu.dot_dimension_numbers<[1], [0], [0], [1], [0, 0, 1, 1], [], []>} : vector<8x8xf32>, vector<8x32xf32>, vector<8x32xf32> -> vector<8x32xf32>
    %c3 = arith.constant 3 : index
    %c0_79 = arith.constant 0 : index
    %c0_80 = arith.constant 0 : index
    %74 = vector.load %arg11[%c3, %c0_79, %c0_80] : memref<6x32x32xf32, #tpu.memory_space<vmem>>, vector<1x32x32xf32>
    %75 = vector.shape_cast %74 : vector<1x32x32xf32> to vector<32x32xf32>
    %cst_81 = arith.constant dense<0.000000e+00> : vector<8x32xf32>
    %76 = tpu.matmul %73, %75, %cst_81 {dimension_numbers = #tpu.dot_dimension_numbers<[1], [0], [0], [1], [0, 0, 1, 1], [], []>} : vector<8x32xf32>, vector<32x32xf32>, vector<8x32xf32> -> vector<8x32xf32>
    %77 = arith.addf %70, %76 : vector<8x32xf32>
    %c1_82 = arith.constant 1 : index
    %c0_83 = arith.constant 0 : index
    %c0_84 = arith.constant 0 : index
    %78 = vector.load %arg10[%c1_82, %c0_83, %c0_84] : memref<2x8x8xf32, #tpu.memory_space<vmem>>, vector<1x8x8xf32>
    %79 = vector.shape_cast %78 : vector<1x8x8xf32> to vector<8x8xf32>
    %cst_85 = arith.constant dense<0.000000e+00> : vector<8x32xf32>
    %80 = tpu.matmul %79, %50, %cst_85 {dimension_numbers = #tpu.dot_dimension_numbers<[1], [0], [0], [1], [0, 0, 1, 1], [], []>} : vector<8x8xf32>, vector<8x32xf32>, vector<8x32xf32> -> vector<8x32xf32>
    %c5 = arith.constant 5 : index
    %c0_86 = arith.constant 0 : index
    %c0_87 = arith.constant 0 : index
    %81 = vector.load %arg11[%c5, %c0_86, %c0_87] : memref<6x32x32xf32, #tpu.memory_space<vmem>>, vector<1x32x32xf32>
    %82 = vector.shape_cast %81 : vector<1x32x32xf32> to vector<32x32xf32>
    %cst_88 = arith.constant dense<0.000000e+00> : vector<8x32xf32>
    %83 = tpu.matmul %80, %82, %cst_88 {dimension_numbers = #tpu.dot_dimension_numbers<[1], [0], [0], [1], [0, 0, 1, 1], [], []>} : vector<8x32xf32>, vector<32x32xf32>, vector<8x32xf32> -> vector<8x32xf32>
    %84 = arith.addf %77, %83 : vector<8x32xf32>
    %85 = arith.addf %67, %84 : vector<8x32xf32>
    %c0_89 = arith.constant 0 : index
    %c0_90 = arith.constant 0 : index
    %86 = vector.load %arg12[%c0_89, %c0_90] : memref<1x32xf32, #tpu.memory_space<vmem>>, vector<1x32xf32>
    %87 = vector.broadcast %86 : vector<1x32xf32> to vector<8x32xf32>
    %88 = arith.addf %85, %87 : vector<8x32xf32>
    %cst_91 = arith.constant 0.000000e+00 : f32
    %89 = vector.broadcast %cst_91 : f32 to vector<8x32xf32>
    %90 = arith.maximumf %88, %89 : vector<8x32xf32>
    %c0_92 = arith.constant 0 : index
    %c0_93 = arith.constant 0 : index
    %c0_94 = arith.constant 0 : index
    %91 = vector.load %arg13[%c0_92, %c0_93, %c0_94] : memref<3x16x8xf32, #tpu.memory_space<vmem>>, vector<1x16x8xf32>
    %92 = vector.shape_cast %91 : vector<1x16x8xf32> to vector<16x8xf32>
    %cst_95 = arith.constant dense<0.000000e+00> : vector<16x32xf32>
    %93 = tpu.matmul %92, %90, %cst_95 {dimension_numbers = #tpu.dot_dimension_numbers<[1], [0], [0], [1], [0, 0, 1, 1], [], []>} : vector<16x8xf32>, vector<8x32xf32>, vector<16x32xf32> -> vector<16x32xf32>
    %c0_96 = arith.constant 0 : index
    %c0_97 = arith.constant 0 : index
    %c0_98 = arith.constant 0 : index
    %94 = vector.load %arg14[%c0_96, %c0_97, %c0_98] : memref<3x32x128xf32, #tpu.memory_space<vmem>>, vector<1x32x128xf32>
    %95 = vector.shape_cast %94 : vector<1x32x128xf32> to vector<32x128xf32>
    %cst_99 = arith.constant dense<0.000000e+00> : vector<16x128xf32>
    %96 = tpu.matmul %93, %95, %cst_99 {dimension_numbers = #tpu.dot_dimension_numbers<[1], [0], [0], [1], [0, 0, 1, 1], [], []>} : vector<16x32xf32>, vector<32x128xf32>, vector<16x128xf32> -> vector<16x128xf32>
    %c1_100 = arith.constant 1 : index
    %c0_101 = arith.constant 0 : index
    %c0_102 = arith.constant 0 : index
    %97 = vector.load %arg13[%c1_100, %c0_101, %c0_102] : memref<3x16x8xf32, #tpu.memory_space<vmem>>, vector<1x16x8xf32>
    %98 = vector.shape_cast %97 : vector<1x16x8xf32> to vector<16x8xf32>
    %cst_103 = arith.constant dense<0.000000e+00> : vector<16x32xf32>
    %99 = tpu.matmul %98, %90, %cst_103 {dimension_numbers = #tpu.dot_dimension_numbers<[1], [0], [0], [1], [0, 0, 1, 1], [], []>} : vector<16x8xf32>, vector<8x32xf32>, vector<16x32xf32> -> vector<16x32xf32>
    %c1_104 = arith.constant 1 : index
    %c0_105 = arith.constant 0 : index
    %c0_106 = arith.constant 0 : index
    %100 = vector.load %arg14[%c1_104, %c0_105, %c0_106] : memref<3x32x128xf32, #tpu.memory_space<vmem>>, vector<1x32x128xf32>
    %101 = vector.shape_cast %100 : vector<1x32x128xf32> to vector<32x128xf32>
    %cst_107 = arith.constant dense<0.000000e+00> : vector<16x128xf32>
    %102 = tpu.matmul %99, %101, %cst_107 {dimension_numbers = #tpu.dot_dimension_numbers<[1], [0], [0], [1], [0, 0, 1, 1], [], []>} : vector<16x32xf32>, vector<32x128xf32>, vector<16x128xf32> -> vector<16x128xf32>
    %103 = arith.addf %96, %102 : vector<16x128xf32>
    %c2_108 = arith.constant 2 : index
    %c0_109 = arith.constant 0 : index
    %c0_110 = arith.constant 0 : index
    %104 = vector.load %arg13[%c2_108, %c0_109, %c0_110] : memref<3x16x8xf32, #tpu.memory_space<vmem>>, vector<1x16x8xf32>
    %105 = vector.shape_cast %104 : vector<1x16x8xf32> to vector<16x8xf32>
    %cst_111 = arith.constant dense<0.000000e+00> : vector<16x32xf32>
    %106 = tpu.matmul %105, %90, %cst_111 {dimension_numbers = #tpu.dot_dimension_numbers<[1], [0], [0], [1], [0, 0, 1, 1], [], []>} : vector<16x8xf32>, vector<8x32xf32>, vector<16x32xf32> -> vector<16x32xf32>
    %c2_112 = arith.constant 2 : index
    %c0_113 = arith.constant 0 : index
    %c0_114 = arith.constant 0 : index
    %107 = vector.load %arg14[%c2_112, %c0_113, %c0_114] : memref<3x32x128xf32, #tpu.memory_space<vmem>>, vector<1x32x128xf32>
    %108 = vector.shape_cast %107 : vector<1x32x128xf32> to vector<32x128xf32>
    %cst_115 = arith.constant dense<0.000000e+00> : vector<16x128xf32>
    %109 = tpu.matmul %106, %108, %cst_115 {dimension_numbers = #tpu.dot_dimension_numbers<[1], [0], [0], [1], [0, 0, 1, 1], [], []>} : vector<16x32xf32>, vector<32x128xf32>, vector<16x128xf32> -> vector<16x128xf32>
    %110 = arith.addf %103, %109 : vector<16x128xf32>
    %c0_116 = arith.constant 0 : index
    %c0_117 = arith.constant 0 : index
    %111 = vector.load %arg15[%c0_116, %c0_117] : memref<1x128xf32, #tpu.memory_space<vmem>>, vector<1x128xf32>
    %112 = vector.broadcast %111 : vector<1x128xf32> to vector<16x128xf32>
    %113 = arith.addf %110, %112 : vector<16x128xf32>
    %cst_118 = arith.constant 0.000000e+00 : f32
    %114 = vector.broadcast %cst_118 : f32 to vector<16x128xf32>
    %115 = arith.maximumf %113, %114 : vector<16x128xf32>
    %c0_119 = arith.constant 0 : index
    %c0_120 = arith.constant 0 : index
    %c0_121 = arith.constant 0 : index
    %116 = vector.load %arg1[%c0_119, %c0_120, %c0_121] : memref<1x16x48xf32, #tpu.memory_space<vmem>>, vector<1x16x48xf32>
    %117 = vector.shape_cast %116 : vector<1x16x48xf32> to vector<16x48xf32>
    %c1_122 = arith.constant 1 : index
    %c0_123 = arith.constant 0 : index
    %c0_124 = arith.constant 0 : index
    %118 = vector.load %arg17[%c1_122, %c0_123, %c0_124] : memref<3x48x128xf32, #tpu.memory_space<vmem>>, vector<1x48x128xf32>
    %119 = vector.shape_cast %118 : vector<1x48x128xf32> to vector<48x128xf32>
    %cst_125 = arith.constant dense<0.000000e+00> : vector<16x128xf32>
    %120 = tpu.matmul %117, %119, %cst_125 {dimension_numbers = #tpu.dot_dimension_numbers<[1], [0], [0], [1], [0, 0, 1, 1], [], []>} : vector<16x48xf32>, vector<48x128xf32>, vector<16x128xf32> -> vector<16x128xf32>
    %c0_126 = arith.constant 0 : index
    %c0_127 = arith.constant 0 : index
    %c0_128 = arith.constant 0 : index
    %121 = vector.load %arg16[%c0_126, %c0_127, %c0_128] : memref<2x16x16xf32, #tpu.memory_space<vmem>>, vector<1x16x16xf32>
    %122 = vector.shape_cast %121 : vector<1x16x16xf32> to vector<16x16xf32>
    %cst_129 = arith.constant dense<0.000000e+00> : vector<16x48xf32>
    %123 = tpu.matmul %122, %117, %cst_129 {dimension_numbers = #tpu.dot_dimension_numbers<[1], [0], [0], [1], [0, 0, 1, 1], [], []>} : vector<16x16xf32>, vector<16x48xf32>, vector<16x48xf32> -> vector<16x48xf32>
    %c0_130 = arith.constant 0 : index
    %c0_131 = arith.constant 0 : index
    %c0_132 = arith.constant 0 : index
    %124 = vector.load %arg17[%c0_130, %c0_131, %c0_132] : memref<3x48x128xf32, #tpu.memory_space<vmem>>, vector<1x48x128xf32>
    %125 = vector.shape_cast %124 : vector<1x48x128xf32> to vector<48x128xf32>
    %cst_133 = arith.constant dense<0.000000e+00> : vector<16x128xf32>
    %126 = tpu.matmul %123, %125, %cst_133 {dimension_numbers = #tpu.dot_dimension_numbers<[1], [0], [0], [1], [0, 0, 1, 1], [], []>} : vector<16x48xf32>, vector<48x128xf32>, vector<16x128xf32> -> vector<16x128xf32>
    %127 = arith.addf %120, %126 : vector<16x128xf32>
    %c1_134 = arith.constant 1 : index
    %c0_135 = arith.constant 0 : index
    %c0_136 = arith.constant 0 : index
    %128 = vector.load %arg16[%c1_134, %c0_135, %c0_136] : memref<2x16x16xf32, #tpu.memory_space<vmem>>, vector<1x16x16xf32>
    %129 = vector.shape_cast %128 : vector<1x16x16xf32> to vector<16x16xf32>
    %cst_137 = arith.constant dense<0.000000e+00> : vector<16x48xf32>
    %130 = tpu.matmul %129, %117, %cst_137 {dimension_numbers = #tpu.dot_dimension_numbers<[1], [0], [0], [1], [0, 0, 1, 1], [], []>} : vector<16x16xf32>, vector<16x48xf32>, vector<16x48xf32> -> vector<16x48xf32>
    %c2_138 = arith.constant 2 : index
    %c0_139 = arith.constant 0 : index
    %c0_140 = arith.constant 0 : index
    %131 = vector.load %arg17[%c2_138, %c0_139, %c0_140] : memref<3x48x128xf32, #tpu.memory_space<vmem>>, vector<1x48x128xf32>
    %132 = vector.shape_cast %131 : vector<1x48x128xf32> to vector<48x128xf32>
    %cst_141 = arith.constant dense<0.000000e+00> : vector<16x128xf32>
    %133 = tpu.matmul %130, %132, %cst_141 {dimension_numbers = #tpu.dot_dimension_numbers<[1], [0], [0], [1], [0, 0, 1, 1], [], []>} : vector<16x48xf32>, vector<48x128xf32>, vector<16x128xf32> -> vector<16x128xf32>
    %134 = arith.addf %127, %133 : vector<16x128xf32>
    %c1_142 = arith.constant 1 : index
    %c0_143 = arith.constant 0 : index
    %c0_144 = arith.constant 0 : index
    %135 = vector.load %arg18[%c1_142, %c0_143, %c0_144] : memref<3x128x128xf32, #tpu.memory_space<vmem>>, vector<1x128x128xf32>
    %136 = vector.shape_cast %135 : vector<1x128x128xf32> to vector<128x128xf32>
    %cst_145 = arith.constant dense<0.000000e+00> : vector<16x128xf32>
    %137 = tpu.matmul %115, %136, %cst_145 {dimension_numbers = #tpu.dot_dimension_numbers<[1], [0], [0], [1], [0, 0, 1, 1], [], []>} : vector<16x128xf32>, vector<128x128xf32>, vector<16x128xf32> -> vector<16x128xf32>
    %c0_146 = arith.constant 0 : index
    %c0_147 = arith.constant 0 : index
    %c0_148 = arith.constant 0 : index
    %138 = vector.load %arg16[%c0_146, %c0_147, %c0_148] : memref<2x16x16xf32, #tpu.memory_space<vmem>>, vector<1x16x16xf32>
    %139 = vector.shape_cast %138 : vector<1x16x16xf32> to vector<16x16xf32>
    %cst_149 = arith.constant dense<0.000000e+00> : vector<16x128xf32>
    %140 = tpu.matmul %139, %115, %cst_149 {dimension_numbers = #tpu.dot_dimension_numbers<[1], [0], [0], [1], [0, 0, 1, 1], [], []>} : vector<16x16xf32>, vector<16x128xf32>, vector<16x128xf32> -> vector<16x128xf32>
    %c0_150 = arith.constant 0 : index
    %c0_151 = arith.constant 0 : index
    %c0_152 = arith.constant 0 : index
    %141 = vector.load %arg18[%c0_150, %c0_151, %c0_152] : memref<3x128x128xf32, #tpu.memory_space<vmem>>, vector<1x128x128xf32>
    %142 = vector.shape_cast %141 : vector<1x128x128xf32> to vector<128x128xf32>
    %cst_153 = arith.constant dense<0.000000e+00> : vector<16x128xf32>
    %143 = tpu.matmul %140, %142, %cst_153 {dimension_numbers = #tpu.dot_dimension_numbers<[1], [0], [0], [1], [0, 0, 1, 1], [], []>} : vector<16x128xf32>, vector<128x128xf32>, vector<16x128xf32> -> vector<16x128xf32>
    %144 = arith.addf %137, %143 : vector<16x128xf32>
    %c1_154 = arith.constant 1 : index
    %c0_155 = arith.constant 0 : index
    %c0_156 = arith.constant 0 : index
    %145 = vector.load %arg16[%c1_154, %c0_155, %c0_156] : memref<2x16x16xf32, #tpu.memory_space<vmem>>, vector<1x16x16xf32>
    %146 = vector.shape_cast %145 : vector<1x16x16xf32> to vector<16x16xf32>
    %cst_157 = arith.constant dense<0.000000e+00> : vector<16x128xf32>
    %147 = tpu.matmul %146, %115, %cst_157 {dimension_numbers = #tpu.dot_dimension_numbers<[1], [0], [0], [1], [0, 0, 1, 1], [], []>} : vector<16x16xf32>, vector<16x128xf32>, vector<16x128xf32> -> vector<16x128xf32>
    %c2_158 = arith.constant 2 : index
    %c0_159 = arith.constant 0 : index
    %c0_160 = arith.constant 0 : index
    %148 = vector.load %arg18[%c2_158, %c0_159, %c0_160] : memref<3x128x128xf32, #tpu.memory_space<vmem>>, vector<1x128x128xf32>
    %149 = vector.shape_cast %148 : vector<1x128x128xf32> to vector<128x128xf32>
    %cst_161 = arith.constant dense<0.000000e+00> : vector<16x128xf32>
    %150 = tpu.matmul %147, %149, %cst_161 {dimension_numbers = #tpu.dot_dimension_numbers<[1], [0], [0], [1], [0, 0, 1, 1], [], []>} : vector<16x128xf32>, vector<128x128xf32>, vector<16x128xf32> -> vector<16x128xf32>
    %151 = arith.addf %144, %150 : vector<16x128xf32>
    %152 = arith.addf %134, %151 : vector<16x128xf32>
    %c0_162 = arith.constant 0 : index
    %c0_163 = arith.constant 0 : index
    %153 = vector.load %arg19[%c0_162, %c0_163] : memref<1x128xf32, #tpu.memory_space<vmem>>, vector<1x128xf32>
    %154 = vector.broadcast %153 : vector<1x128xf32> to vector<16x128xf32>
    %155 = arith.addf %152, %154 : vector<16x128xf32>
    %cst_164 = arith.constant 0.000000e+00 : f32
    %156 = vector.broadcast %cst_164 : f32 to vector<16x128xf32>
    %157 = arith.maximumf %155, %156 : vector<16x128xf32>
    %c1_165 = arith.constant 1 : index
    %c0_166 = arith.constant 0 : index
    %c0_167 = arith.constant 0 : index
    %158 = vector.load %arg20[%c1_165, %c0_166, %c0_167] : memref<3x128x64xf32, #tpu.memory_space<vmem>>, vector<1x128x64xf32>
    %159 = vector.shape_cast %158 : vector<1x128x64xf32> to vector<128x64xf32>
    %cst_168 = arith.constant dense<0.000000e+00> : vector<16x64xf32>
    %160 = tpu.matmul %157, %159, %cst_168 {dimension_numbers = #tpu.dot_dimension_numbers<[1], [0], [0], [1], [0, 0, 1, 1], [], []>} : vector<16x128xf32>, vector<128x64xf32>, vector<16x64xf32> -> vector<16x64xf32>
    %c0_169 = arith.constant 0 : index
    %c0_170 = arith.constant 0 : index
    %c0_171 = arith.constant 0 : index
    %161 = vector.load %arg16[%c0_169, %c0_170, %c0_171] : memref<2x16x16xf32, #tpu.memory_space<vmem>>, vector<1x16x16xf32>
    %162 = vector.shape_cast %161 : vector<1x16x16xf32> to vector<16x16xf32>
    %cst_172 = arith.constant dense<0.000000e+00> : vector<16x128xf32>
    %163 = tpu.matmul %162, %157, %cst_172 {dimension_numbers = #tpu.dot_dimension_numbers<[1], [0], [0], [1], [0, 0, 1, 1], [], []>} : vector<16x16xf32>, vector<16x128xf32>, vector<16x128xf32> -> vector<16x128xf32>
    %c0_173 = arith.constant 0 : index
    %c0_174 = arith.constant 0 : index
    %c0_175 = arith.constant 0 : index
    %164 = vector.load %arg20[%c0_173, %c0_174, %c0_175] : memref<3x128x64xf32, #tpu.memory_space<vmem>>, vector<1x128x64xf32>
    %165 = vector.shape_cast %164 : vector<1x128x64xf32> to vector<128x64xf32>
    %cst_176 = arith.constant dense<0.000000e+00> : vector<16x64xf32>
    %166 = tpu.matmul %163, %165, %cst_176 {dimension_numbers = #tpu.dot_dimension_numbers<[1], [0], [0], [1], [0, 0, 1, 1], [], []>} : vector<16x128xf32>, vector<128x64xf32>, vector<16x64xf32> -> vector<16x64xf32>
    %167 = arith.addf %160, %166 : vector<16x64xf32>
    %c1_177 = arith.constant 1 : index
    %c0_178 = arith.constant 0 : index
    %c0_179 = arith.constant 0 : index
    %168 = vector.load %arg16[%c1_177, %c0_178, %c0_179] : memref<2x16x16xf32, #tpu.memory_space<vmem>>, vector<1x16x16xf32>
    %169 = vector.shape_cast %168 : vector<1x16x16xf32> to vector<16x16xf32>
    %cst_180 = arith.constant dense<0.000000e+00> : vector<16x128xf32>
    %170 = tpu.matmul %169, %157, %cst_180 {dimension_numbers = #tpu.dot_dimension_numbers<[1], [0], [0], [1], [0, 0, 1, 1], [], []>} : vector<16x16xf32>, vector<16x128xf32>, vector<16x128xf32> -> vector<16x128xf32>
    %c2_181 = arith.constant 2 : index
    %c0_182 = arith.constant 0 : index
    %c0_183 = arith.constant 0 : index
    %171 = vector.load %arg20[%c2_181, %c0_182, %c0_183] : memref<3x128x64xf32, #tpu.memory_space<vmem>>, vector<1x128x64xf32>
    %172 = vector.shape_cast %171 : vector<1x128x64xf32> to vector<128x64xf32>
    %cst_184 = arith.constant dense<0.000000e+00> : vector<16x64xf32>
    %173 = tpu.matmul %170, %172, %cst_184 {dimension_numbers = #tpu.dot_dimension_numbers<[1], [0], [0], [1], [0, 0, 1, 1], [], []>} : vector<16x128xf32>, vector<128x64xf32>, vector<16x64xf32> -> vector<16x64xf32>
    %174 = arith.addf %167, %173 : vector<16x64xf32>
    %c0_185 = arith.constant 0 : index
    %c0_186 = arith.constant 0 : index
    %175 = vector.load %arg21[%c0_185, %c0_186] : memref<1x64xf32, #tpu.memory_space<vmem>>, vector<1x64xf32>
    %176 = vector.broadcast %175 : vector<1x64xf32> to vector<16x64xf32>
    %177 = arith.addf %174, %176 : vector<16x64xf32>
    %cst_187 = arith.constant 0.000000e+00 : f32
    %178 = vector.broadcast %cst_187 : f32 to vector<16x64xf32>
    %179 = arith.maximumf %177, %178 : vector<16x64xf32>
    %c0_188 = arith.constant 0 : index
    %c0_189 = arith.constant 0 : index
    %180 = vector.load %arg22[%c0_188, %c0_189] : memref<64x32xf32, #tpu.memory_space<vmem>>, vector<64x32xf32>
    %cst_190 = arith.constant dense<0.000000e+00> : vector<16x32xf32>
    %181 = tpu.matmul %179, %180, %cst_190 {dimension_numbers = #tpu.dot_dimension_numbers<[1], [0], [0], [1], [0, 0, 1, 1], [], []>} : vector<16x64xf32>, vector<64x32xf32>, vector<16x32xf32> -> vector<16x32xf32>
    %c0_191 = arith.constant 0 : index
    %c0_192 = arith.constant 0 : index
    %182 = vector.load %arg23[%c0_191, %c0_192] : memref<1x32xf32, #tpu.memory_space<vmem>>, vector<1x32xf32>
    %183 = vector.broadcast %182 : vector<1x32xf32> to vector<16x32xf32>
    %184 = arith.addf %181, %183 : vector<16x32xf32>
    %cst_193 = arith.constant 0.000000e+00 : f32
    %185 = vector.broadcast %cst_193 : f32 to vector<16x32xf32>
    %186 = arith.subf %185, %184 : vector<16x32xf32>
    %187 = math.exp %186 : vector<16x32xf32>
    %cst_194 = arith.constant 1.000000e+00 : f32
    %188 = vector.broadcast %cst_194 : f32 to vector<16x32xf32>
    %189 = arith.addf %188, %187 : vector<16x32xf32>
    %cst_195 = arith.constant 1.000000e+00 : f32
    %190 = vector.broadcast %cst_195 : f32 to vector<16x32xf32>
    %191 = arith.divf %190, %189 : vector<16x32xf32>
    %c0_196 = arith.constant 0 : index
    %c0_197 = arith.constant 0 : index
    %c0_198 = arith.constant 0 : index
    %192 = vector.load %arg24[%c0_196, %c0_197, %c0_198] : memref<1x16x32xf32, #tpu.memory_space<vmem>>, vector<1x16x32xf32>
    %193 = vector.shape_cast %192 : vector<1x16x32xf32> to vector<16x32xf32>
    %194 = vector.shape_cast %191 : vector<16x32xf32> to vector<1x16x32xf32>
    tpu.vector_store %arg24[%c0_196, %c0_197, %c0_198], %194 {strides = array<i32>} : memref<1x16x32xf32, #tpu.memory_space<vmem>>, vector<1x16x32xf32>,
    return
  }
  func.func @transform_0(%arg0: i32) -> (i32, i32, i32) {
    %c0_i32 = arith.constant 0 : i32
    %c0_i32_0 = arith.constant 0 : i32
    %c0_i32_1 = arith.constant 0 : i32
    return %arg0, %c0_i32, %c0_i32_0 : i32, i32, i32
  }
  func.func @transform_1(%arg0: i32) -> (i32, i32, i32) {
    %c0_i32 = arith.constant 0 : i32
    %c0_i32_0 = arith.constant 0 : i32
    %c0_i32_1 = arith.constant 0 : i32
    return %arg0, %c0_i32, %c0_i32_0 : i32, i32, i32
  }
  func.func @transform_2(%arg0: i32) -> (i32, i32, i32) {
    %c0_i32 = arith.constant 0 : i32
    %c0_i32_0 = arith.constant 0 : i32
    %c0_i32_1 = arith.constant 0 : i32
    return %arg0, %c0_i32, %c0_i32_0 : i32, i32, i32
  }
  func.func @transform_3(%arg0: i32) -> (i32, i32, i32) {
    %c0_i32 = arith.constant 0 : i32
    %c0_i32_0 = arith.constant 0 : i32
    %c0_i32_1 = arith.constant 0 : i32
    %c0_i32_2 = arith.constant 0 : i32
    return %c0_i32, %c0_i32_0, %c0_i32_1 : i32, i32, i32
  }
  func.func @transform_4(%arg0: i32) -> (i32, i32, i32) {
    %c0_i32 = arith.constant 0 : i32
    %c0_i32_0 = arith.constant 0 : i32
    %c0_i32_1 = arith.constant 0 : i32
    %c0_i32_2 = arith.constant 0 : i32
    return %c0_i32, %c0_i32_0, %c0_i32_1 : i32, i32, i32
  }
  func.func @transform_5(%arg0: i32) -> (i32, i32) {
    %c0_i32 = arith.constant 0 : i32
    %c0_i32_0 = arith.constant 0 : i32
    %c0_i32_1 = arith.constant 0 : i32
    return %c0_i32, %c0_i32_0 : i32, i32
  }
  func.func @transform_6(%arg0: i32) -> (i32, i32, i32) {
    %c0_i32 = arith.constant 0 : i32
    %c0_i32_0 = arith.constant 0 : i32
    %c0_i32_1 = arith.constant 0 : i32
    %c0_i32_2 = arith.constant 0 : i32
    return %c0_i32, %c0_i32_0, %c0_i32_1 : i32, i32, i32
  }
  func.func @transform_7(%arg0: i32) -> (i32, i32, i32) {
    %c0_i32 = arith.constant 0 : i32
    %c0_i32_0 = arith.constant 0 : i32
    %c0_i32_1 = arith.constant 0 : i32
    %c0_i32_2 = arith.constant 0 : i32
    return %c0_i32, %c0_i32_0, %c0_i32_1 : i32, i32, i32
  }
  func.func @transform_8(%arg0: i32) -> (i32, i32) {
    %c0_i32 = arith.constant 0 : i32
    %c0_i32_0 = arith.constant 0 : i32
    %c0_i32_1 = arith.constant 0 : i32
    return %c0_i32, %c0_i32_0 : i32, i32
  }
  func.func @transform_9(%arg0: i32) -> (i32, i32, i32) {
    %c0_i32 = arith.constant 0 : i32
    %c0_i32_0 = arith.constant 0 : i32
    %c0_i32_1 = arith.constant 0 : i32
    %c0_i32_2 = arith.constant 0 : i32
    return %c0_i32, %c0_i32_0, %c0_i32_1 : i32, i32, i32
  }
  func.func @transform_10(%arg0: i32) -> (i32, i32, i32) {
    %c0_i32 = arith.constant 0 : i32
    %c0_i32_0 = arith.constant 0 : i32
    %c0_i32_1 = arith.constant 0 : i32
    %c0_i32_2 = arith.constant 0 : i32
    return %c0_i32, %c0_i32_0, %c0_i32_1 : i32, i32, i32
  }
  func.func @transform_11(%arg0: i32) -> (i32, i32) {
    %c0_i32 = arith.constant 0 : i32
    %c0_i32_0 = arith.constant 0 : i32
    %c0_i32_1 = arith.constant 0 : i32
    return %c0_i32, %c0_i32_0 : i32, i32
  }
  func.func @transform_12(%arg0: i32) -> (i32, i32, i32) {
    %c0_i32 = arith.constant 0 : i32
    %c0_i32_0 = arith.constant 0 : i32
    %c0_i32_1 = arith.constant 0 : i32
    %c0_i32_2 = arith.constant 0 : i32
    return %c0_i32, %c0_i32_0, %c0_i32_1 : i32, i32, i32
  }
  func.func @transform_13(%arg0: i32) -> (i32, i32, i32) {
    %c0_i32 = arith.constant 0 : i32
    %c0_i32_0 = arith.constant 0 : i32
    %c0_i32_1 = arith.constant 0 : i32
    %c0_i32_2 = arith.constant 0 : i32
    return %c0_i32, %c0_i32_0, %c0_i32_1 : i32, i32, i32
  }
  func.func @transform_14(%arg0: i32) -> (i32, i32) {
    %c0_i32 = arith.constant 0 : i32
    %c0_i32_0 = arith.constant 0 : i32
    %c0_i32_1 = arith.constant 0 : i32
    return %c0_i32, %c0_i32_0 : i32, i32
  }
  func.func @transform_15(%arg0: i32) -> (i32, i32, i32) {
    %c0_i32 = arith.constant 0 : i32
    %c0_i32_0 = arith.constant 0 : i32
    %c0_i32_1 = arith.constant 0 : i32
    %c0_i32_2 = arith.constant 0 : i32
    return %c0_i32, %c0_i32_0, %c0_i32_1 : i32, i32, i32
  }
  func.func @transform_16(%arg0: i32) -> (i32, i32, i32) {
    %c0_i32 = arith.constant 0 : i32
    %c0_i32_0 = arith.constant 0 : i32
    %c0_i32_1 = arith.constant 0 : i32
    %c0_i32_2 = arith.constant 0 : i32
    return %c0_i32, %c0_i32_0, %c0_i32_1 : i32, i32, i32
  }
  func.func @transform_17(%arg0: i32) -> (i32, i32, i32) {
    %c0_i32 = arith.constant 0 : i32
    %c0_i32_0 = arith.constant 0 : i32
    %c0_i32_1 = arith.constant 0 : i32
    %c0_i32_2 = arith.constant 0 : i32
    return %c0_i32, %c0_i32_0, %c0_i32_1 : i32, i32, i32
  }
  func.func @transform_18(%arg0: i32) -> (i32, i32) {
    %c0_i32 = arith.constant 0 : i32
    %c0_i32_0 = arith.constant 0 : i32
    %c0_i32_1 = arith.constant 0 : i32
    return %c0_i32, %c0_i32_0 : i32, i32
  }
  func.func @transform_19(%arg0: i32) -> (i32, i32, i32) {
    %c0_i32 = arith.constant 0 : i32
    %c0_i32_0 = arith.constant 0 : i32
    %c0_i32_1 = arith.constant 0 : i32
    %c0_i32_2 = arith.constant 0 : i32
    return %c0_i32, %c0_i32_0, %c0_i32_1 : i32, i32, i32
  }
  func.func @transform_20(%arg0: i32) -> (i32, i32) {
    %c0_i32 = arith.constant 0 : i32
    %c0_i32_0 = arith.constant 0 : i32
    %c0_i32_1 = arith.constant 0 : i32
    return %c0_i32, %c0_i32_0 : i32, i32
  }
  func.func @transform_21(%arg0: i32) -> (i32, i32) {
    %c0_i32 = arith.constant 0 : i32
    %c0_i32_0 = arith.constant 0 : i32
    %c0_i32_1 = arith.constant 0 : i32
    return %c0_i32, %c0_i32_0 : i32, i32
  }
  func.func @transform_22(%arg0: i32) -> (i32, i32) {
    %c0_i32 = arith.constant 0 : i32
    %c0_i32_0 = arith.constant 0 : i32
    %c0_i32_1 = arith.constant 0 : i32
    return %c0_i32, %c0_i32_0 : i32, i32
  }
  func.func @transform_23(%arg0: i32) -> (i32, i32, i32) {
    %c0_i32 = arith.constant 0 : i32
    %c0_i32_0 = arith.constant 0 : i32
    %c0_i32_1 = arith.constant 0 : i32
    return %arg0, %c0_i32, %c0_i32_0 : i32, i32, i32
  }
}

</mosaic_0001>

<llo_original>
// kernel: unet_forward_pallas.1
$region0: #{unet_forward_pallas.1}
  #allocation0 [shape = 'u32[]', space=smem, size = 0x4, offset = 0x4, fixed_abs, tag = 'smem constant byte address 0x4 - core index']
  #allocation1 [shape = 'u32[144,128]{1,0:T(1,128)}', space=vmem, size = 0x12000, scoped, tag = 'internal scratch']
  %s0 = inlined_call_operand.vmem [shape: f32[2,16,48], index: 0, kind: input, shape index: {}]
  %s1 = inlined_call_operand.vmem [shape: f32[2,4,32], index: 1, kind: input, shape index: {}]
  %s2 = inlined_call_operand.vmem [shape: f32[2,8,32], index: 2, kind: input, shape index: {}]
  %s3 = inlined_call_operand.hbm [shape: f32[2,4,4], index: 3, kind: input, shape index: {}]
  %s4 = inlined_call_operand.vmem [shape: f32[3,32,32], index: 4, kind: input, shape index: {}]
  %s5 = inlined_call_operand.vmem [shape: f32[1,32], index: 5, kind: input, shape index: {}]
  %s6 = inlined_call_operand.vmem [shape: f32[3,8,4], index: 6, kind: input, shape index: {}]
  %s7 = inlined_call_operand.vmem [shape: f32[3,32,32], index: 7, kind: input, shape index: {}]
  %s8 = inlined_call_operand.vmem [shape: f32[1,32], index: 8, kind: input, shape index: {}]
  %s9 = inlined_call_operand.hbm [shape: f32[2,8,8], index: 9, kind: input, shape index: {}]
  %s10 = inlined_call_operand.vmem [shape: f32[6,32,32], index: 10, kind: input, shape index: {}]
  %s11 = inlined_call_operand.vmem [shape: f32[1,32], index: 11, kind: input, shape index: {}]
  %s12 = inlined_call_operand.vmem [shape: f32[3,16,8], index: 12, kind: input, shape index: {}]
  %s13 = inlined_call_operand.vmem [shape: f32[3,32,128], index: 13, kind: input, shape index: {}]
  %s14 = inlined_call_operand.vmem [shape: f32[1,128], index: 14, kind: input, shape index: {}]
  %s15 = inlined_call_operand.vmem [shape: f32[2,16,16], index: 15, kind: input, shape index: {}]
  %s16 = inlined_call_operand.vmem [shape: f32[3,48,128], index: 16, kind: input, shape index: {}]
  %s17 = inlined_call_operand.vmem [shape: f32[3,128,128], index: 17, kind: input, shape index: {}]
  %s18 = inlined_call_operand.vmem [shape: f32[1,128], index: 18, kind: input, shape index: {}]
  %s19 = inlined_call_operand.vmem [shape: f32[3,128,64], index: 19, kind: input, shape index: {}]
  %s20 = inlined_call_operand.vmem [shape: f32[1,64], index: 20, kind: input, shape index: {}]
  %s21 = inlined_call_operand.vmem [shape: f32[64,32], index: 21, kind: input, shape index: {}]
  %s22 = inlined_call_operand.vmem [shape: f32[1,32], index: 22, kind: input, shape index: {}]
  %s23 = inlined_call_operand.vmem [shape: f32[2,16,32], index: 23, kind: output, shape index: {}]
  %s24 = sld [smem:[#allocation0]]
  $region133: #{unet_forward_pallas.1} parent=0
    _
  %s26 = ssub.s32 1, %s24
  %s27 = scalar_select 0, %s26, %s24
  $region1: #{unet_forward_pallas.1} parent=0
    #allocation2 [shape = 'u8[4096]{0}', space=vmem, size = 0x1000, scoped, tag = 'input window, operand 3, single buffered']
    #allocation3 [shape = 's32[2]{0}', space=sflag, size = 0x8, scoped, tag = 'scoped memory for unet_forward_pallas.1']
    #allocation4 [shape = 'u8[8192]{0}', space=vmem, size = 0x2000, scoped, tag = 'input window, operand 9, single buffered']
    #allocation5 [shape = 's32[1]{0}', space=sflag, size = 0x4, scoped, tag = 'scoped memory for unet_forward_pallas.1']
    %28 = vsyncpa [#allocation3], 0
    %29 = vsyncpa [#allocation5], 0
    loop: start=0, step=1, limit=4
    $region2: #{unet_forward_pallas.1} parent=1 // loop_pre_header
      _
    $region3: #{unet_forward_pallas.1} parent=1 // loop_header
      %s31 = sphi 0, %s35
      %p32 = scmp.ge.s32.totalorder %s31, 4
      %s41 = sphi 0, %s43
      %s44 = sphi 0, %s41
      %s45 = sphi 0, %s44
      %s61 = sphi 0, %s45
      %s67 = sphi 0, %s69
      %s70 = sphi 0, %s67
      %s71 = sphi 0, %s70
      %s87 = sphi 0, %s71
      %s93 = sphi 0, %s95
      %s96 = sphi 0, %s93
      %s97 = sphi 0, %s96
      %s113 = sphi 0, %s97
      %s117 = sphi 0, %s117
      %s119 = sphi 0, %s117
      %s120 = sphi 0, %s119
      %s134 = sphi 0, %s120
      %s138 = sphi 0, %s138
      %s140 = sphi 0, %s138
      %s141 = sphi 0, %s140
      %s155 = sphi 0, %s141
      %s159 = sphi 0, %s159
      %s161 = sphi 0, %s159
      %s162 = sphi 0, %s161
      %s176 = sphi 0, %s162
      %s180 = sphi 0, %s180
      %s182 = sphi 0, %s180
      %s183 = sphi 0, %s182
      %s197 = sphi 0, %s183
      %s201 = sphi 0, %s201
      %s203 = sphi 0, %s201
      %s204 = sphi 0, %s203
      %s218 = sphi 0, %s204
      %s222 = sphi 0, %s222
      %s224 = sphi 0, %s222
      %s225 = sphi 0, %s224
      %s239 = sphi 0, %s225
      %s243 = sphi 0, %s243
      %s245 = sphi 0, %s243
      %s246 = sphi 0, %s245
      %s260 = sphi 0, %s246
      %s264 = sphi 0, %s264
      %s266 = sphi 0, %s264
      %s267 = sphi 0, %s266
      %s281 = sphi 0, %s267
      %s285 = sphi 0, %s285
      %s287 = sphi 0, %s285
      %s288 = sphi 0, %s287
      %s302 = sphi 0, %s288
      %s306 = sphi 0, %s306
      %s308 = sphi 0, %s306
      %s309 = sphi 0, %s308
      %s323 = sphi 0, %s309
      %s327 = sphi 0, %s327
      %s329 = sphi 0, %s327
      %s330 = sphi 0, %s329
      %s344 = sphi 0, %s330
      %s348 = sphi 0, %s348
      %s350 = sphi 0, %s348
      %s351 = sphi 0, %s350
      %s365 = sphi 0, %s351
      %s369 = sphi 0, %s369
      %s371 = sphi 0, %s369
      %s372 = sphi 0, %s371
      %s386 = sphi 0, %s372
      %s390 = sphi 0, %s390
      %s392 = sphi 0, %s390
      %s393 = sphi 0, %s392
      %s407 = sphi 0, %s393
      %s411 = sphi 0, %s411
      %s413 = sphi 0, %s411
      %s414 = sphi 0, %s413
      %s428 = sphi 0, %s414
      %s432 = sphi 0, %s432
      %s434 = sphi 0, %s432
      %s435 = sphi 0, %s434
      %s449 = sphi 0, %s435
      %s453 = sphi 0, %s453
      %s455 = sphi 0, %s453
      %s456 = sphi 0, %s455
      %s470 = sphi 0, %s456
      %s474 = sphi 0, %s474
      %s476 = sphi 0, %s474
      %s477 = sphi 0, %s476
      %s491 = sphi 0, %s477
      %s495 = sphi 0, %s495
      %s497 = sphi 0, %s495
      %s498 = sphi 0, %s497
      %s512 = sphi 0, %s498
      %s516 = sphi 0, %s516
      %s518 = sphi 0, %s516
      %s519 = sphi 0, %s518
      %s533 = sphi 0, %s519
      %s539 = sphi 0, %s541
      %s542 = sphi 0, %s539
      %s543 = sphi 0, %s542
      %s559 = sphi 0, %s543
    $region4: #{unet_forward_pallas.1} parent=1 // loop_header_branch
      %34 = sbr.rel (%p32) target = $region8
    $region5: #{unet_forward_pallas.1} parent=1 // loop_body
      %s36 = ssub.s32 %s31, 1
      %s37 = ssub.s32 %s31, 2
      %s38 = sadd.s32 %s31, 1
      %s39 = ssub.s32 %s31, %s38
      %p40 = scmp.eq.s32.totalorder %s39, 0
      %s42 = sadd.s32 %s41, 1
      %s43 = scalar_select %p40, %s41, %s42
      %p46 = pneg %p40
      %p47 = scmp.eq.s32.totalorder %s31, 1
      %p48 = por %p46, %p47
      %p49 = scmp.ne.s32.totalorder %s41, %s44
      %p50 = scmp.eq.s32.totalorder %s31, 0
      %p51 = por %p49, %p50
      %p52 = scmp.ne.s32.totalorder %s41, %s44
      %p53 = scmp.eq.s32.totalorder %s36, 1
      %p54 = por %p52, %p53
      %p55 = scmp.ne.s32.totalorder %s44, %s45
      %p56 = scmp.eq.s32.totalorder %s36, 0
      %p57 = por %p55, %p56
      %p58 = scmp.ne.s32.totalorder %s44, %s45
      %p59 = scmp.eq.s32.totalorder %s37, 1
      %p60 = por %p58, %p59
      %p62 = scmp.ne.s32.totalorder %s45, %s61
      %p63 = scmp.eq.s32.totalorder %s37, 0
      %p64 = por %p62, %p63
      %s65 = ssub.s32 %s31, %s38
      %p66 = scmp.eq.s32.totalorder %s65, 0
      %s68 = sadd.s32 %s67, 1
      %s69 = scalar_select %p66, %s67, %s68
      %p72 = pneg %p66
      %p73 = scmp.eq.s32.totalorder %s31, 1
      %p74 = por %p72, %p73
      %p75 = scmp.ne.s32.totalorder %s67, %s70
      %p76 = scmp.eq.s32.totalorder %s31, 0
      %p77 = por %p75, %p76
      %p78 = scmp.ne.s32.totalorder %s67, %s70
      %p79 = scmp.eq.s32.totalorder %s36, 1
      %p80 = por %p78, %p79
      %p81 = scmp.ne.s32.totalorder %s70, %s71
      %p82 = scmp.eq.s32.totalorder %s36, 0
      %p83 = por %p81, %p82
      %p84 = scmp.ne.s32.totalorder %s70, %s71
      %p85 = scmp.eq.s32.totalorder %s37, 1
      %p86 = por %p84, %p85
      %p88 = scmp.ne.s32.totalorder %s71, %s87
      %p89 = scmp.eq.s32.totalorder %s37, 0
      %p90 = por %p88, %p89
      %s91 = ssub.s32 %s31, %s38
      %p92 = scmp.eq.s32.totalorder %s91, 0
      %s94 = sadd.s32 %s93, 1
      %s95 = scalar_select %p92, %s93, %s94
      %p98 = pneg %p92
      %p99 = scmp.eq.s32.totalorder %s31, 1
      %p100 = por %p98, %p99
      %p101 = scmp.ne.s32.totalorder %s93, %s96
      %p102 = scmp.eq.s32.totalorder %s31, 0
      %p103 = por %p101, %p102
      %p104 = scmp.ne.s32.totalorder %s93, %s96
      %p105 = scmp.eq.s32.totalorder %s36, 1
      %p106 = por %p104, %p105
      %p107 = scmp.ne.s32.totalorder %s96, %s97
      %p108 = scmp.eq.s32.totalorder %s36, 0
      %p109 = por %p107, %p108
      %p110 = scmp.ne.s32.totalorder %s96, %s97
      %p111 = scmp.eq.s32.totalorder %s37, 1
      %p112 = por %p110, %p111
      %p114 = scmp.ne.s32.totalorder %s97, %s113
      %p115 = scmp.eq.s32.totalorder %s37, 0
      %p116 = por %p114, %p115
      %s118 = sadd.s32 %s117, 1
      %p121 = scmp.eq.s32.totalorder %s31, 1
      %p122 = scmp.ne.s32.totalorder %s117, %s119
      %p123 = scmp.eq.s32.totalorder %s31, 0
      %p124 = por %p122, %p123
      %p125 = scmp.ne.s32.totalorder %s117, %s119
      %p126 = scmp.eq.s32.totalorder %s36, 1
      %p127 = por %p125, %p126
      %p128 = scmp.ne.s32.totalorder %s119, %s120
      %p129 = scmp.eq.s32.totalorder %s36, 0
      %p130 = por %p128, %p129
      %p131 = scmp.ne.s32.totalorder %s119, %s120
      %p132 = scmp.eq.s32.totalorder %s37, 1
      %p133 = por %p131, %p132
      %p135 = scmp.ne.s32.totalorder %s120, %s134
      %p136 = scmp.eq.s32.totalorder %s37, 0
      %p137 = por %p135, %p136
      %s139 = sadd.s32 %s138, 1
      %p142 = scmp.eq.s32.totalorder %s31, 1
      %p143 = scmp.ne.s32.totalorder %s138, %s140
      %p144 = scmp.eq.s32.totalorder %s31, 0
      %p145 = por %p143, %p144
      %p146 = scmp.ne.s32.totalorder %s138, %s140
      %p147 = scmp.eq.s32.totalorder %s36, 1
      %p148 = por %p146, %p147
      %p149 = scmp.ne.s32.totalorder %s140, %s141
      %p150 = scmp.eq.s32.totalorder %s36, 0
      %p151 = por %p149, %p150
      %p152 = scmp.ne.s32.totalorder %s140, %s141
      %p153 = scmp.eq.s32.totalorder %s37, 1
      %p154 = por %p152, %p153
      %p156 = scmp.ne.s32.totalorder %s141, %s155
      %p157 = scmp.eq.s32.totalorder %s37, 0
      %p158 = por %p156, %p157
      %s160 = sadd.s32 %s159, 1
      %p163 = scmp.eq.s32.totalorder %s31, 1
      %p164 = scmp.ne.s32.totalorder %s159, %s161
      %p165 = scmp.eq.s32.totalorder %s31, 0
      %p166 = por %p164, %p165
      %p167 = scmp.ne.s32.totalorder %s159, %s161
      %p168 = scmp.eq.s32.totalorder %s36, 1
      %p169 = por %p167, %p168
      %p170 = scmp.ne.s32.totalorder %s161, %s162
      %p171 = scmp.eq.s32.totalorder %s36, 0
      %p172 = por %p170, %p171
      %p173 = scmp.ne.s32.totalorder %s161, %s162
      %p174 = scmp.eq.s32.totalorder %s37, 1
      %p175 = por %p173, %p174
      %p177 = scmp.ne.s32.totalorder %s162, %s176
      %p178 = scmp.eq.s32.totalorder %s37, 0
      %p179 = por %p177, %p178
      %s181 = sadd.s32 %s180, 1
      %p184 = scmp.eq.s32.totalorder %s31, 1
      %p185 = scmp.ne.s32.totalorder %s180, %s182
      %p186 = scmp.eq.s32.totalorder %s31, 0
      %p187 = por %p185, %p186
      %p188 = scmp.ne.s32.totalorder %s180, %s182
      %p189 = scmp.eq.s32.totalorder %s36, 1
      %p190 = por %p188, %p189
      %p191 = scmp.ne.s32.totalorder %s182, %s183
      %p192 = scmp.eq.s32.totalorder %s36, 0
      %p193 = por %p191, %p192
      %p194 = scmp.ne.s32.totalorder %s182, %s183
      %p195 = scmp.eq.s32.totalorder %s37, 1
      %p196 = por %p194, %p195
      %p198 = scmp.ne.s32.totalorder %s183, %s197
      %p199 = scmp.eq.s32.totalorder %s37, 0
      %p200 = por %p198, %p199
      %s202 = sadd.s32 %s201, 1
      %p205 = scmp.eq.s32.totalorder %s31, 1
      %p206 = scmp.ne.s32.totalorder %s201, %s203
      %p207 = scmp.eq.s32.totalorder %s31, 0
      %p208 = por %p206, %p207
      %p209 = scmp.ne.s32.totalorder %s201, %s203
      %p210 = scmp.eq.s32.totalorder %s36, 1
      %p211 = por %p209, %p210
      %p212 = scmp.ne.s32.totalorder %s203, %s204
      %p213 = scmp.eq.s32.totalorder %s36, 0
      %p214 = por %p212, %p213
      %p215 = scmp.ne.s32.totalorder %s203, %s204
      %p216 = scmp.eq.s32.totalorder %s37, 1
      %p217 = por %p215, %p216
      %p219 = scmp.ne.s32.totalorder %s204, %s218
      %p220 = scmp.eq.s32.totalorder %s37, 0
      %p221 = por %p219, %p220
      %s223 = sadd.s32 %s222, 1
      %p226 = scmp.eq.s32.totalorder %s31, 1
      %p227 = scmp.ne.s32.totalorder %s222, %s224
      %p228 = scmp.eq.s32.totalorder %s31, 0
      %p229 = por %p227, %p228
      %p230 = scmp.ne.s32.totalorder %s222, %s224
      %p231 = scmp.eq.s32.totalorder %s36, 1
      %p232 = por %p230, %p231
      %p233 = scmp.ne.s32.totalorder %s224, %s225
      %p234 = scmp.eq.s32.totalorder %s36, 0
      %p235 = por %p233, %p234
      %p236 = scmp.ne.s32.totalorder %s224, %s225
      %p237 = scmp.eq.s32.totalorder %s37, 1
      %p238 = por %p236, %p237
      %p240 = scmp.ne.s32.totalorder %s225, %s239
      %p241 = scmp.eq.s32.totalorder %s37, 0
      %p242 = por %p240, %p241
      %s244 = sadd.s32 %s243, 1
      %p247 = scmp.eq.s32.totalorder %s31, 1
      %p248 = scmp.ne.s32.totalorder %s243, %s245
      %p249 = scmp.eq.s32.totalorder %s31, 0
      %p250 = por %p248, %p249
      %p251 = scmp.ne.s32.totalorder %s243, %s245
      %p252 = scmp.eq.s32.totalorder %s36, 1
      %p253 = por %p251, %p252
      %p254 = scmp.ne.s32.totalorder %s245, %s246
      %p255 = scmp.eq.s32.totalorder %s36, 0
      %p256 = por %p254, %p255
      %p257 = scmp.ne.s32.totalorder %s245, %s246
      %p258 = scmp.eq.s32.totalorder %s37, 1
      %p259 = por %p257, %p258
      %p261 = scmp.ne.s32.totalorder %s246, %s260
      %p262 = scmp.eq.s32.totalorder %s37, 0
      %p263 = por %p261, %p262
      %s265 = sadd.s32 %s264, 1
      %p268 = scmp.eq.s32.totalorder %s31, 1
      %p269 = scmp.ne.s32.totalorder %s264, %s266
      %p270 = scmp.eq.s32.totalorder %s31, 0
      %p271 = por %p269, %p270
      %p272 = scmp.ne.s32.totalorder %s264, %s266
      %p273 = scmp.eq.s32.totalorder %s36, 1
      %p274 = por %p272, %p273
      %p275 = scmp.ne.s32.totalorder %s266, %s267
      %p276 = scmp.eq.s32.totalorder %s36, 0
      %p277 = por %p275, %p276
      %p278 = scmp.ne.s32.totalorder %s266, %s267
      %p279 = scmp.eq.s32.totalorder %s37, 1
      %p280 = por %p278, %p279
      %p282 = scmp.ne.s32.totalorder %s267, %s281
      %p283 = scmp.eq.s32.totalorder %s37, 0
      %p284 = por %p282, %p283
      %s286 = sadd.s32 %s285, 1
      %p289 = scmp.eq.s32.totalorder %s31, 1
      %p290 = scmp.ne.s32.totalorder %s285, %s287
      %p291 = scmp.eq.s32.totalorder %s31, 0
      %p292 = por %p290, %p291
      %p293 = scmp.ne.s32.totalorder %s285, %s287
      %p294 = scmp.eq.s32.totalorder %s36, 1
      %p295 = por %p293, %p294
      %p296 = scmp.ne.s32.totalorder %s287, %s288
      %p297 = scmp.eq.s32.totalorder %s36, 0
      %p298 = por %p296, %p297
      %p299 = scmp.ne.s32.totalorder %s287, %s288
      %p300 = scmp.eq.s32.totalorder %s37, 1
      %p301 = por %p299, %p300
      %p303 = scmp.ne.s32.totalorder %s288, %s302
      %p304 = scmp.eq.s32.totalorder %s37, 0
      %p305 = por %p303, %p304
      %s307 = sadd.s32 %s306, 1
      %p310 = scmp.eq.s32.totalorder %s31, 1
      %p311 = scmp.ne.s32.totalorder %s306, %s308
      %p312 = scmp.eq.s32.totalorder %s31, 0
      %p313 = por %p311, %p312
      %p314 = scmp.ne.s32.totalorder %s306, %s308
      %p315 = scmp.eq.s32.totalorder %s36, 1
      %p316 = por %p314, %p315
      %p317 = scmp.ne.s32.totalorder %s308, %s309
      %p318 = scmp.eq.s32.totalorder %s36, 0
      %p319 = por %p317, %p318
      %p320 = scmp.ne.s32.totalorder %s308, %s309
      %p321 = scmp.eq.s32.totalorder %s37, 1
      %p322 = por %p320, %p321
      %p324 = scmp.ne.s32.totalorder %s309, %s323
      %p325 = scmp.eq.s32.totalorder %s37, 0
      %p326 = por %p324, %p325
      %s328 = sadd.s32 %s327, 1
      %p331 = scmp.eq.s32.totalorder %s31, 1
      %p332 = scmp.ne.s32.totalorder %s327, %s329
      %p333 = scmp.eq.s32.totalorder %s31, 0
      %p334 = por %p332, %p333
      %p335 = scmp.ne.s32.totalorder %s327, %s329
      %p336 = scmp.eq.s32.totalorder %s36, 1
      %p337 = por %p335, %p336
      %p338 = scmp.ne.s32.totalorder %s329, %s330
      %p339 = scmp.eq.s32.totalorder %s36, 0
      %p340 = por %p338, %p339
      %p341 = scmp.ne.s32.totalorder %s329, %s330
      %p342 = scmp.eq.s32.totalorder %s37, 1
      %p343 = por %p341, %p342
      %p345 = scmp.ne.s32.totalorder %s330, %s344
      %p346 = scmp.eq.s32.totalorder %s37, 0
      %p347 = por %p345, %p346
      %s349 = sadd.s32 %s348, 1
      %p352 = scmp.eq.s32.totalorder %s31, 1
      %p353 = scmp.ne.s32.totalorder %s348, %s350
      %p354 = scmp.eq.s32.totalorder %s31, 0
      %p355 = por %p353, %p354
      %p356 = scmp.ne.s32.totalorder %s348, %s350
      %p357 = scmp.eq.s32.totalorder %s36, 1
      %p358 = por %p356, %p357
      %p359 = scmp.ne.s32.totalorder %s350, %s351
      %p360 = scmp.eq.s32.totalorder %s36, 0
      %p361 = por %p359, %p360
      %p362 = scmp.ne.s32.totalorder %s350, %s351
      %p363 = scmp.eq.s32.totalorder %s37, 1
      %p364 = por %p362, %p363
      %p366 = scmp.ne.s32.totalorder %s351, %s365
      %p367 = scmp.eq.s32.totalorder %s37, 0
      %p368 = por %p366, %p367
      %s370 = sadd.s32 %s369, 1
      %p373 = scmp.eq.s32.totalorder %s31, 1
      %p374 = scmp.ne.s32.totalorder %s369, %s371
      %p375 = scmp.eq.s32.totalorder %s31, 0
      %p376 = por %p374, %p375
      %p377 = scmp.ne.s32.totalorder %s369, %s371
      %p378 = scmp.eq.s32.totalorder %s36, 1
      %p379 = por %p377, %p378
      %p380 = scmp.ne.s32.totalorder %s371, %s372
      %p381 = scmp.eq.s32.totalorder %s36, 0
      %p382 = por %p380, %p381
      %p383 = scmp.ne.s32.totalorder %s371, %s372
      %p384 = scmp.eq.s32.totalorder %s37, 1
      %p385 = por %p383, %p384
      %p387 = scmp.ne.s32.totalorder %s372, %s386
      %p388 = scmp.eq.s32.totalorder %s37, 0
      %p389 = por %p387, %p388
      %s391 = sadd.s32 %s390, 1
      %p394 = scmp.eq.s32.totalorder %s31, 1
      %p395 = scmp.ne.s32.totalorder %s390, %s392
      %p396 = scmp.eq.s32.totalorder %s31, 0
      %p397 = por %p395, %p396
      %p398 = scmp.ne.s32.totalorder %s390, %s392
      %p399 = scmp.eq.s32.totalorder %s36, 1
      %p400 = por %p398, %p399
      %p401 = scmp.ne.s32.totalorder %s392, %s393
      %p402 = scmp.eq.s32.totalorder %s36, 0
      %p403 = por %p401, %p402
      %p404 = scmp.ne.s32.totalorder %s392, %s393
      %p405 = scmp.eq.s32.totalorder %s37, 1
      %p406 = por %p404, %p405
      %p408 = scmp.ne.s32.totalorder %s393, %s407
      %p409 = scmp.eq.s32.totalorder %s37, 0
      %p410 = por %p408, %p409
      %s412 = sadd.s32 %s411, 1
      %p415 = scmp.eq.s32.totalorder %s31, 1
      %p416 = scmp.ne.s32.totalorder %s411, %s413
      %p417 = scmp.eq.s32.totalorder %s31, 0
      %p418 = por %p416, %p417
      %p419 = scmp.ne.s32.totalorder %s411, %s413
      %p420 = scmp.eq.s32.totalorder %s36, 1
      %p421 = por %p419, %p420
      %p422 = scmp.ne.s32.totalorder %s413, %s414
      %p423 = scmp.eq.s32.totalorder %s36, 0
      %p424 = por %p422, %p423
      %p425 = scmp.ne.s32.totalorder %s413, %s414
      %p426 = scmp.eq.s32.totalorder %s37, 1
      %p427 = por %p425, %p426
      %p429 = scmp.ne.s32.totalorder %s414, %s428
      %p430 = scmp.eq.s32.totalorder %s37, 0
      %p431 = por %p429, %p430
      %s433 = sadd.s32 %s432, 1
      %p436 = scmp.eq.s32.totalorder %s31, 1
      %p437 = scmp.ne.s32.totalorder %s432, %s434
      %p438 = scmp.eq.s32.totalorder %s31, 0
      %p439 = por %p437, %p438
      %p440 = scmp.ne.s32.totalorder %s432, %s434
      %p441 = scmp.eq.s32.totalorder %s36, 1
      %p442 = por %p440, %p441
      %p443 = scmp.ne.s32.totalorder %s434, %s435
      %p444 = scmp.eq.s32.totalorder %s36, 0
      %p445 = por %p443, %p444
      %p446 = scmp.ne.s32.totalorder %s434, %s435
      %p447 = scmp.eq.s32.totalorder %s37, 1
      %p448 = por %p446, %p447
      %p450 = scmp.ne.s32.totalorder %s435, %s449
      %p451 = scmp.eq.s32.totalorder %s37, 0
      %p452 = por %p450, %p451
      %s454 = sadd.s32 %s453, 1
      %p457 = scmp.eq.s32.totalorder %s31, 1
      %p458 = scmp.ne.s32.totalorder %s453, %s455
      %p459 = scmp.eq.s32.totalorder %s31, 0
      %p460 = por %p458, %p459
      %p461 = scmp.ne.s32.totalorder %s453, %s455
      %p462 = scmp.eq.s32.totalorder %s36, 1
      %p463 = por %p461, %p462
      %p464 = scmp.ne.s32.totalorder %s455, %s456
      %p465 = scmp.eq.s32.totalorder %s36, 0
      %p466 = por %p464, %p465
      %p467 = scmp.ne.s32.totalorder %s455, %s456
      %p468 = scmp.eq.s32.totalorder %s37, 1
      %p469 = por %p467, %p468
      %p471 = scmp.ne.s32.totalorder %s456, %s470
      %p472 = scmp.eq.s32.totalorder %s37, 0
      %p473 = por %p471, %p472
      %s475 = sadd.s32 %s474, 1
      %p478 = scmp.eq.s32.totalorder %s31, 1
      %p479 = scmp.ne.s32.totalorder %s474, %s476
      %p480 = scmp.eq.s32.totalorder %s31, 0
      %p481 = por %p479, %p480
      %p482 = scmp.ne.s32.totalorder %s474, %s476
      %p483 = scmp.eq.s32.totalorder %s36, 1
      %p484 = por %p482, %p483
      %p485 = scmp.ne.s32.totalorder %s476, %s477
      %p486 = scmp.eq.s32.totalorder %s36, 0
      %p487 = por %p485, %p486
      %p488 = scmp.ne.s32.totalorder %s476, %s477
      %p489 = scmp.eq.s32.totalorder %s37, 1
      %p490 = por %p488, %p489
      %p492 = scmp.ne.s32.totalorder %s477, %s491
      %p493 = scmp.eq.s32.totalorder %s37, 0
      %p494 = por %p492, %p493
      %s496 = sadd.s32 %s495, 1
      %p499 = scmp.eq.s32.totalorder %s31, 1
      %p500 = scmp.ne.s32.totalorder %s495, %s497
      %p501 = scmp.eq.s32.totalorder %s31, 0
      %p502 = por %p500, %p501
      %p503 = scmp.ne.s32.totalorder %s495, %s497
      %p504 = scmp.eq.s32.totalorder %s36, 1
      %p505 = por %p503, %p504
      %p506 = scmp.ne.s32.totalorder %s497, %s498
      %p507 = scmp.eq.s32.totalorder %s36, 0
      %p508 = por %p506, %p507
      %p509 = scmp.ne.s32.totalorder %s497, %s498
      %p510 = scmp.eq.s32.totalorder %s37, 1
      %p511 = por %p509, %p510
      %p513 = scmp.ne.s32.totalorder %s498, %s512
      %p514 = scmp.eq.s32.totalorder %s37, 0
      %p515 = por %p513, %p514
      %s517 = sadd.s32 %s516, 1
      %p520 = scmp.eq.s32.totalorder %s31, 1
      %p521 = scmp.ne.s32.totalorder %s516, %s518
      %p522 = scmp.eq.s32.totalorder %s31, 0
      %p523 = por %p521, %p522
      %p524 = scmp.ne.s32.totalorder %s516, %s518
      %p525 = scmp.eq.s32.totalorder %s36, 1
      %p526 = por %p524, %p525
      %p527 = scmp.ne.s32.totalorder %s518, %s519
      %p528 = scmp.eq.s32.totalorder %s36, 0
      %p529 = por %p527, %p528
      %p530 = scmp.ne.s32.totalorder %s518, %s519
      %p531 = scmp.eq.s32.totalorder %s37, 1
      %p532 = por %p530, %p531
      %p534 = scmp.ne.s32.totalorder %s519, %s533
      %p535 = scmp.eq.s32.totalorder %s37, 0
      %p536 = por %p534, %p535
      %s537 = ssub.s32 %s31, %s38
      %p538 = scmp.eq.s32.totalorder %s537, 0
      %s540 = sadd.s32 %s539, 1
      %s541 = scalar_select %p538, %s539, %s540
      %p544 = pneg %p538
      %p545 = scmp.eq.s32.totalorder %s31, 1
      %p546 = por %p544, %p545
      %p547 = scmp.ne.s32.totalorder %s539, %s542
      %p548 = scmp.eq.s32.totalorder %s31, 0
      %p549 = por %p547, %p548
      %p550 = scmp.ne.s32.totalorder %s539, %s542
      %p551 = scmp.eq.s32.totalorder %s36, 1
      %p552 = por %p550, %p551
      %p553 = scmp.ne.s32.totalorder %s542, %s543
      %p554 = scmp.eq.s32.totalorder %s36, 0
      %p555 = por %p553, %p554
      %p556 = scmp.ne.s32.totalorder %s542, %s543
      %p557 = scmp.eq.s32.totalorder %s37, 1
      %p558 = por %p556, %p557
      %p560 = scmp.ne.s32.totalorder %s543, %s559
      %p561 = scmp.eq.s32.totalorder %s37, 0
      %p562 = por %p560, %p561
      %p563 = scmp.le.s32.totalorder 1, %s31
      %p564 = scmp.lt.s32.totalorder %s31, 3
      %p565 = pnand %p563, %p564
      %p566 = pneg %p565
      // Predicated region
      $region9: #{unet_forward_pallas.1} parent=5 // pred_check
        _
      $region10: #{unet_forward_pallas.1} parent=5 // pred_check_branch
        %568 = sbr.rel (%p565) target = $region12
      $region11: #{unet_forward_pallas.1} parent=5 // pred_region
        %s569 = ssub.s32 %s31, 1
        // Predicated region
        $region13: #{unet_forward_pallas.1} parent=11 // pred_check
          %p570 = pneg %p130
        $region14: #{unet_forward_pallas.1} parent=11 // pred_check_branch
          %572 = sbr.rel (%p570) target = $region16
        $region15: #{unet_forward_pallas.1} parent=11 // pred_region
          %s574 = ssub.s32 128, 128
          %575 = vsyncadd [#allocation3], %s574
          %s576 = sshll.u32 [#allocation2], 4
          %s577 = int_to_ptr.vmem [resolvable:$true] %s576
          %582 = dma.hbm_to_vmem [thread:$0]  %s3, 128, %s577, [#allocation3], 64, 64, 4
        $region16: #{unet_forward_pallas.1} parent=11 // pred_fallthru
          _
        // Predicated region
        $region17: #{unet_forward_pallas.1} parent=11 // pred_check
          %p583 = pneg %p151
        $region18: #{unet_forward_pallas.1} parent=11 // pred_check_branch
          %585 = sbr.rel (%p583) target = $region20
        $region19: #{unet_forward_pallas.1} parent=11 // pred_region
          _
        $region20: #{unet_forward_pallas.1} parent=11 // pred_fallthru
          _
        // Predicated region
        $region21: #{unet_forward_pallas.1} parent=11 // pred_check
          %p586 = pneg %p172
        $region22: #{unet_forward_pallas.1} parent=11 // pred_check_branch
          %588 = sbr.rel (%p586) target = $region24
        $region23: #{unet_forward_pallas.1} parent=11 // pred_region
          _
        $region24: #{unet_forward_pallas.1} parent=11 // pred_fallthru
          _
        // Predicated region
        $region25: #{unet_forward_pallas.1} parent=11 // pred_check
          %p589 = pneg %p193
        $region26: #{unet_forward_pallas.1} parent=11 // pred_check_branch
          %591 = sbr.rel (%p589) target = $region28
        $region27: #{unet_forward_pallas.1} parent=11 // pred_region
          _
        $region28: #{unet_forward_pallas.1} parent=11 // pred_fallthru
          _
        // Predicated region
        $region29: #{unet_forward_pallas.1} parent=11 // pred_check
          %p592 = pneg %p214
        $region30: #{unet_forward_pallas.1} parent=11 // pred_check_branch
          %594 = sbr.rel (%p592) target = $region32
        $region31: #{unet_forward_pallas.1} parent=11 // pred_region
          _
        $region32: #{unet_forward_pallas.1} parent=11 // pred_fallthru
          _
        // Predicated region
        $region33: #{unet_forward_pallas.1} parent=11 // pred_check
          %p595 = pneg %p235
        $region34: #{unet_forward_pallas.1} parent=11 // pred_check_branch
          %597 = sbr.rel (%p595) target = $region36
        $region35: #{unet_forward_pallas.1} parent=11 // pred_region
          _
        $region36: #{unet_forward_pallas.1} parent=11 // pred_fallthru
          _
        // Predicated region
        $region37: #{unet_forward_pallas.1} parent=11 // pred_check
          %p598 = pneg %p256
        $region38: #{unet_forward_pallas.1} parent=11 // pred_check_branch
          %600 = sbr.rel (%p598) target = $region40
        $region39: #{unet_forward_pallas.1} parent=11 // pred_region
          %s602 = ssub.s32 256, 256
          %603 = vsyncadd [#allocation5], %s602
          %s604 = sshll.u32 [#allocation4], 4
          %s605 = int_to_ptr.vmem [resolvable:$true] %s604
          %610 = dma.hbm_to_vmem [thread:$0]  %s9, 256, %s605, [#allocation5], 128, 128, 8
        $region40: #{unet_forward_pallas.1} parent=11 // pred_fallthru
          _
        // Predicated region
        $region41: #{unet_forward_pallas.1} parent=11 // pred_check
          %p611 = pneg %p277
        $region42: #{unet_forward_pallas.1} parent=11 // pred_check_branch
          %613 = sbr.rel (%p611) target = $region44
        $region43: #{unet_forward_pallas.1} parent=11 // pred_region
          _
        $region44: #{unet_forward_pallas.1} parent=11 // pred_fallthru
          _
        // Predicated region
        $region45: #{unet_forward_pallas.1} parent=11 // pred_check
          %p614 = pneg %p298
        $region46: #{unet_forward_pallas.1} parent=11 // pred_check_branch
          %616 = sbr.rel (%p614) target = $region48
        $region47: #{unet_forward_pallas.1} parent=11 // pred_region
          _
        $region48: #{unet_forward_pallas.1} parent=11 // pred_fallthru
          _
        // Predicated region
        $region49: #{unet_forward_pallas.1} parent=11 // pred_check
          %p617 = pneg %p319
        $region50: #{unet_forward_pallas.1} parent=11 // pred_check_branch
          %619 = sbr.rel (%p617) target = $region52
        $region51: #{unet_forward_pallas.1} parent=11 // pred_region
          _
        $region52: #{unet_forward_pallas.1} parent=11 // pred_fallthru
          _
        // Predicated region
        $region53: #{unet_forward_pallas.1} parent=11 // pred_check
          %p620 = pneg %p340
        $region54: #{unet_forward_pallas.1} parent=11 // pred_check_branch
          %622 = sbr.rel (%p620) target = $region56
        $region55: #{unet_forward_pallas.1} parent=11 // pred_region
          _
        $region56: #{unet_forward_pallas.1} parent=11 // pred_fallthru
          _
        // Predicated region
        $region57: #{unet_forward_pallas.1} parent=11 // pred_check
          %p623 = pneg %p361
        $region58: #{unet_forward_pallas.1} parent=11 // pred_check_branch
          %625 = sbr.rel (%p623) target = $region60
        $region59: #{unet_forward_pallas.1} parent=11 // pred_region
          _
        $region60: #{unet_forward_pallas.1} parent=11 // pred_fallthru
          _
        // Predicated region
        $region61: #{unet_forward_pallas.1} parent=11 // pred_check
          %p626 = pneg %p382
        $region62: #{unet_forward_pallas.1} parent=11 // pred_check_branch
          %628 = sbr.rel (%p626) target = $region64
        $region63: #{unet_forward_pallas.1} parent=11 // pred_region
          _
        $region64: #{unet_forward_pallas.1} parent=11 // pred_fallthru
          _
        // Predicated region
        $region65: #{unet_forward_pallas.1} parent=11 // pred_check
          %p629 = pneg %p403
        $region66: #{unet_forward_pallas.1} parent=11 // pred_check_branch
          %631 = sbr.rel (%p629) target = $region68
        $region67: #{unet_forward_pallas.1} parent=11 // pred_region
          _
        $region68: #{unet_forward_pallas.1} parent=11 // pred_fallthru
          _
        // Predicated region
        $region69: #{unet_forward_pallas.1} parent=11 // pred_check
          %p632 = pneg %p424
        $region70: #{unet_forward_pallas.1} parent=11 // pred_check_branch
          %634 = sbr.rel (%p632) target = $region72
        $region71: #{unet_forward_pallas.1} parent=11 // pred_region
          _
        $region72: #{unet_forward_pallas.1} parent=11 // pred_fallthru
          _
        // Predicated region
        $region73: #{unet_forward_pallas.1} parent=11 // pred_check
          %p635 = pneg %p445
        $region74: #{unet_forward_pallas.1} parent=11 // pred_check_branch
          %637 = sbr.rel (%p635) target = $region76
        $region75: #{unet_forward_pallas.1} parent=11 // pred_region
          _
        $region76: #{unet_forward_pallas.1} parent=11 // pred_fallthru
          _
        // Predicated region
        $region77: #{unet_forward_pallas.1} parent=11 // pred_check
          %p638 = pneg %p466
        $region78: #{unet_forward_pallas.1} parent=11 // pred_check_branch
          %640 = sbr.rel (%p638) target = $region80
        $region79: #{unet_forward_pallas.1} parent=11 // pred_region
          _
        $region80: #{unet_forward_pallas.1} parent=11 // pred_fallthru
          _
        // Predicated region
        $region81: #{unet_forward_pallas.1} parent=11 // pred_check
          %p641 = pneg %p487
        $region82: #{unet_forward_pallas.1} parent=11 // pred_check_branch
          %643 = sbr.rel (%p641) target = $region84
        $region83: #{unet_forward_pallas.1} parent=11 // pred_region
          _
        $region84: #{unet_forward_pallas.1} parent=11 // pred_fallthru
          _
        // Predicated region
        $region85: #{unet_forward_pallas.1} parent=11 // pred_check
          %p644 = pneg %p508
        $region86: #{unet_forward_pallas.1} parent=11 // pred_check_branch
          %646 = sbr.rel (%p644) target = $region88
        $region87: #{unet_forward_pallas.1} parent=11 // pred_region
          _
        $region88: #{unet_forward_pallas.1} parent=11 // pred_fallthru
          _
        // Predicated region
        $region89: #{unet_forward_pallas.1} parent=11 // pred_check
          %p647 = pneg %p529
        $region90: #{unet_forward_pallas.1} parent=11 // pred_check_branch
          %649 = sbr.rel (%p647) target = $region92
        $region91: #{unet_forward_pallas.1} parent=11 // pred_region
          _
        $region92: #{unet_forward_pallas.1} parent=11 // pred_fallthru
          _
      $region12: #{unet_forward_pallas.1} parent=5 // pred_fallthru
        _
      %p650 = scmp.lt.s32.totalorder %s31, 2
      // Predicated region
      $region93: #{unet_forward_pallas.1} parent=5 // pred_check
        %p651 = pneg %p650
      $region94: #{unet_forward_pallas.1} parent=5 // pred_check_branch
        %653 = sbr.rel (%p651) target = $region96
      $region95: #{unet_forward_pallas.1} parent=5 // pred_region
        // Predicated region
        $region97: #{unet_forward_pallas.1} parent=95 // pred_check
          %p654 = pneg %p51
        $region98: #{unet_forward_pallas.1} parent=95 // pred_check_branch
          %656 = sbr.rel (%p654) target = $region100
        $region99: #{unet_forward_pallas.1} parent=95 // pred_region
          %p657 = scmp.lt.s32.totalorder %s31, 1
          %s658 = scalar_select %p657, %s31, 1
          %s659 = smul.addr %s658, 2
          %s660 = smul.addr %s659, 8
          %s661 = scalar_lea.vmem %s0, %s660
        $region100: #{unet_forward_pallas.1} parent=95 // pred_fallthru
          _
        // Predicated region
        $region101: #{unet_forward_pallas.1} parent=95 // pred_check
          %p662 = pneg %p77
        $region102: #{unet_forward_pallas.1} parent=95 // pred_check_branch
          %664 = sbr.rel (%p662) target = $region104
        $region103: #{unet_forward_pallas.1} parent=95 // pred_region
          %p665 = scmp.lt.s32.totalorder %s31, 1
          %s666 = scalar_select %p665, %s31, 1
          %s667 = smul.addr %s666, 4
          %s668 = scalar_lea.vmem %s1, %s667
        $region104: #{unet_forward_pallas.1} parent=95 // pred_fallthru
          _
        // Predicated region
        $region105: #{unet_forward_pallas.1} parent=95 // pred_check
          %p669 = pneg %p103
        $region106: #{unet_forward_pallas.1} parent=95 // pred_check_branch
          %671 = sbr.rel (%p669) target = $region108
        $region107: #{unet_forward_pallas.1} parent=95 // pred_region
          %p672 = scmp.lt.s32.totalorder %s31, 1
          %s673 = scalar_select %p672, %s31, 1
          %s674 = smul.addr %s673, 8
          %s675 = scalar_lea.vmem %s2, %s674
        $region108: #{unet_forward_pallas.1} parent=95 // pred_fallthru
          _
      $region96: #{unet_forward_pallas.1} parent=5 // pred_fallthru
        _
      %p676 = scmp.le.s32.totalorder 1, %s31
      %p677 = scmp.lt.s32.totalorder %s31, 3
      %p678 = pnand %p676, %p677
      %p679 = pneg %p678
      // Predicated region
      $region109: #{unet_forward_pallas.1} parent=5 // pred_check
        _
      $region110: #{unet_forward_pallas.1} parent=5 // pred_check_branch
        %681 = sbr.rel (%p678) target = $region112
      $region111: #{unet_forward_pallas.1} parent=5 // pred_region
        %s682 = ssub.s32 %s31, 1
        // Predicated region
        $region113: #{unet_forward_pallas.1} parent=111 // pred_check
          %p683 = pneg %p130
        $region114: #{unet_forward_pallas.1} parent=111 // pred_check_branch
          %685 = sbr.rel (%p683) target = $region116
        $region115: #{unet_forward_pallas.1} parent=111 // pred_region
          %686 = dma.done [#allocation3], 128
        $region116: #{unet_forward_pallas.1} parent=111 // pred_fallthru
          _
        // Predicated region
        $region117: #{unet_forward_pallas.1} parent=111 // pred_check
          %p687 = pneg %p256
        $region118: #{unet_forward_pallas.1} parent=111 // pred_check_branch
          %689 = sbr.rel (%p687) target = $region120
        $region119: #{unet_forward_pallas.1} parent=111 // pred_region
          %690 = dma.done [#allocation5], 256
        $region120: #{unet_forward_pallas.1} parent=111 // pred_fallthru
          _
        %p691 = scmp.lt.s32.totalorder %s36, 1
        %s692 = scalar_select %p691, %s36, 1
        %s693 = smul.addr %s692, 2
        %s694 = smul.addr %s693, 8
        %s695 = scalar_lea.vmem %s0, %s694
        %p696 = pneg %p57
        %p697 = pneg %p54
        %p698 = scmp.lt.s32.totalorder %s36, 1
        %s699 = scalar_select %p698, %s36, 1
        %s700 = smul.addr %s699, 4
        %s701 = scalar_lea.vmem %s1, %s700
        %p702 = pneg %p83
        %p703 = pneg %p80
        %p704 = scmp.lt.s32.totalorder %s36, 1
        %s705 = scalar_select %p704, %s36, 1
        %s706 = smul.addr %s705, 8
        %s707 = scalar_lea.vmem %s2, %s706
        %p708 = pneg %p109
        %p709 = pneg %p106
        %p710 = pneg %p130
        %p711 = pneg %p127
        %p712 = pneg %p151
        %p713 = pneg %p148
        %p714 = pneg %p172
        %p715 = pneg %p169
        %p716 = pneg %p193
        %p717 = pneg %p190
        %p718 = pneg %p214
        %p719 = pneg %p211
        %p720 = pneg %p235
        %p721 = pneg %p232
        %p722 = pneg %p256
        %p723 = pneg %p253
        %p724 = pneg %p277
        %p725 = pneg %p274
        %p726 = pneg %p298
        %p727 = pneg %p295
        %p728 = pneg %p319
        %p729 = pneg %p316
        %p730 = pneg %p340
        %p731 = pneg %p337
        %p732 = pneg %p361
        %p733 = pneg %p358
        %p734 = pneg %p382
        %p735 = pneg %p379
        %p736 = pneg %p403
        %p737 = pneg %p400
        %p738 = pneg %p424
        %p739 = pneg %p421
        %p740 = pneg %p445
        %p741 = pneg %p442
        %p742 = pneg %p466
        %p743 = pneg %p463
        %p744 = pneg %p487
        %p745 = pneg %p484
        %p746 = pneg %p508
        %p747 = pneg %p505
        %p748 = pneg %p529
        %p749 = pneg %p526
        %p750 = pneg %p555
        %p751 = pneg %p552
        %p752 = scmp.lt.s32.totalorder %s36, 1
        %s753 = scalar_select %p752, %s36, 1
        %s754 = smul.addr %s753, 2
        %s755 = smul.addr %s754, 8
        %s756 = scalar_lea.vmem %s23, %s755
        %p757 = scmp.lt.s32.totalorder %s36, 1
        %s758 = scalar_select %p757, %s36, 1
        %s759 = smul.addr %s758, 2
        %s760 = smul.addr %s759, 8
        %s761 = scalar_lea.vmem %s0, %s760
        %p762 = scmp.lt.s32.totalorder %s36, 1
        %s763 = scalar_select %p762, %s36, 1
        %s764 = smul.addr %s763, 4
        %s765 = scalar_lea.vmem %s1, %s764
        %p766 = scmp.lt.s32.totalorder %s36, 1
        %s767 = scalar_select %p766, %s36, 1
        %s768 = smul.addr %s767, 8
        %s769 = scalar_lea.vmem %s2, %s768
        %p770 = scmp.lt.s32.totalorder %s36, 1
        %s771 = scalar_select %p770, %s36, 1
        %s772 = smul.addr %s771, 2
        %s773 = smul.addr %s772, 8
        %s774 = scalar_lea.vmem %s23, %s773
        %v775 = vld [vmem:[%s765] sm:$0xf]
        %s776 = scalar_lea.vmem %s4, 32
        %v777 = vld [vmem:[%s776] sm:$0xff]
        %v778 = vld [vmem:[%s776 + $0x8] sm:$0xff]
        %v779 = vld [vmem:[%s776 + $0x10] sm:$0xff]
        %v780 = vld [vmem:[%s776 + $0x18] sm:$0xff]
        %v781 = vld [vmem:[#allocation2] sm:$0xf]
        %vm782 = vcmask 31744
        %v784 = vsel %vm782, %v781, 0
        %vm786 = vcmask 1043456
        %v788 = vsel %vm786, %v775, 0
        %790 = vmatprep.subr.mxu0 0.0
        %791 = vmatpush1.msra.mxu0 0.0
        %792 = vmatprep.subr.mxu0 0.0
        %793 = vmatpush1.msra.mxu0 0.0
        %794 = vmatprep.subr.mxu0 0.0
        %795 = vmatpush1.msra.mxu0 0.0
        %796 = vmatprep.subr.mxu0 0.0
        %797 = vmatpush1.msra.mxu0 0.0
        %798 = vmatprep.subr.mxu0 0.0
        %799 = vmatpush1.msra.mxu0 0.0
        %800 = vmatprep.subr.mxu0 0.0
        %801 = vmatpush1.msra.mxu0 0.0
        %802 = vmatprep.subr.mxu0 0.0
        %803 = vmatpush1.msra.mxu0 0.0
        %804 = vmatprep.subr.mxu0 0.0
        %805 = vmatpush1.msra.mxu0 0.0
        %806 = vmatprep.subr.mxu0 0.0
        %807 = vmatpush1.msra.mxu0 0.0
        %808 = vmatprep.subr.mxu0 0.0
        %809 = vmatpush1.msra.mxu0 0.0
        %810 = vmatprep.subr.mxu0 0.0
        %811 = vmatpush1.msra.mxu0 0.0
        %812 = vmatprep.subr.mxu0 0.0
        %813 = vmatpush1.msra.mxu0 0.0
        %814 = vmatprep.subr.mxu0 0.0
        %815 = vmatpush1.msra.mxu0 0.0
        %816 = vmatprep.subr.mxu0 0.0
        %817 = vmatpush1.msra.mxu0 0.0
        %818 = vmatprep.subr.mxu0 0.0
        %819 = vmatpush1.msra.mxu0 0.0
        %820 = vmatprep.subr.mxu0 0.0
        %821 = vmatpush1.msra.mxu0 %v788
        %822 = vmatprep.subr.mxu0 0.0
        %823 = vmatpush2.msra.mxu0 0.0
        %824 = vmatprep.subr.mxu0 0.0
        %825 = vmatpush2.msra.mxu0 0.0
        %826 = vmatprep.subr.mxu0 0.0
        %827 = vmatpush2.msra.mxu0 0.0
        %828 = vmatprep.subr.mxu0 0.0
        %829 = vmatpush2.msra.mxu0 0.0
        %830 = vmatprep.subr.mxu0 0.0
        %831 = vmatpush2.msra.mxu0 0.0
        %832 = vmatprep.subr.mxu0 0.0
        %833 = vmatpush2.msra.mxu0 0.0
        %834 = vmatprep.subr.mxu0 0.0
        %835 = vmatpush2.msra.mxu0 0.0
        %836 = vmatprep.subr.mxu0 0.0
        %837 = vmatpush2.msra.mxu0 0.0
        %838 = vmatprep.subr.mxu0 0.0
        %839 = vmatpush2.msra.mxu0 0.0
        %840 = vmatprep.subr.mxu0 0.0
        %841 = vmatpush2.msra.mxu0 0.0
        %842 = vmatprep.subr.mxu0 0.0
        %843 = vmatpush2.msra.mxu0 0.0
        %844 = vmatprep.subr.mxu0 0.0
        %845 = vmatpush2.msra.mxu0 0.0
        %846 = vmatprep.subr.mxu0 0.0
        %847 = vmatpush2.msra.mxu0 0.0
        %848 = vmatprep.subr.mxu0 0.0
        %849 = vmatpush2.msra.mxu0 0.0
        %850 = vmatprep.subr.mxu0 0.0
        %851 = vmatpush2.msra.mxu0 0.0
        %852 = vmatprep.subr.mxu0 0.0
        %853 = vmatpush2.msra.mxu0 0.0
        %854 = vmatprep.mubr.f32.mxu0 0.0
        %855 = vmatmul.mubr.f32.gmra.mxu0 %v784
        %v856 = vpop.f32.mrf.mxu0
        %v857 = vadd.f32 0.0, %v856
        %v858 = vpop.f32.mrf.mxu0
        %859 = vdwg.mxu0
        %v860 = vld [vmem:[%s4] sm:$0xff]
        %v861 = vld [vmem:[%s4 + $0x8] sm:$0xff]
        %v862 = vld [vmem:[%s4 + $0x10] sm:$0xff]
        %v863 = vld [vmem:[%s4 + $0x18] sm:$0xff]
        %vm864 = vcmask 261120
        %v866 = vsel %vm864, %v857, 0
        %868 = vmatprep.subr.mxu0 0.0
        %869 = vmatpush1.msra.mxu0 0.0
        %870 = vmatprep.subr.mxu0 0.0
        %871 = vmatpush1.msra.mxu0 0.0
        %872 = vmatprep.subr.mxu0 0.0
        %873 = vmatpush1.msra.mxu0 0.0
        %874 = vmatprep.subr.mxu0 0.0
        %875 = vmatpush1.msra.mxu0 0.0
        %876 = vmatprep.subr.mxu0 0.0
        %877 = vmatpush1.msra.mxu0 0.0
        %878 = vmatprep.subr.mxu0 0.0
        %879 = vmatpush1.msra.mxu0 0.0
        %880 = vmatprep.subr.mxu0 0.0
        %881 = vmatpush1.msra.mxu0 0.0
        %882 = vmatprep.subr.mxu0 0.0
        %883 = vmatpush1.msra.mxu0 0.0
        %884 = vmatprep.subr.mxu0 0.0
        %885 = vmatpush1.msra.mxu0 0.0
        %886 = vmatprep.subr.mxu0 0.0
        %887 = vmatpush1.msra.mxu0 0.0
        %888 = vmatprep.subr.mxu0 0.0
        %889 = vmatpush1.msra.mxu0 0.0
        %890 = vmatprep.subr.mxu0 0.0
        %891 = vmatpush1.msra.mxu0 0.0
        %892 = vmatprep.subr.mxu0 0.0
        %893 = vmatpush1.msra.mxu0 %v863
        %894 = vmatprep.subr.mxu0 0.0
        %895 = vmatpush1.msra.mxu0 %v862
        %896 = vmatprep.subr.mxu0 0.0
        %897 = vmatpush1.msra.mxu0 %v861
        %898 = vmatprep.subr.mxu0 0.0
        %899 = vmatpush1.msra.mxu0 %v860
        %900 = vmatprep.subr.mxu0 0.0
        %901 = vmatpush2.msra.mxu0 0.0
        %902 = vmatprep.subr.mxu0 0.0
        %903 = vmatpush2.msra.mxu0 0.0
        %904 = vmatprep.subr.mxu0 0.0
        %905 = vmatpush2.msra.mxu0 0.0
        %906 = vmatprep.subr.mxu0 0.0
        %907 = vmatpush2.msra.mxu0 0.0
        %908 = vmatprep.subr.mxu0 0.0
        %909 = vmatpush2.msra.mxu0 0.0
        %910 = vmatprep.subr.mxu0 0.0
        %911 = vmatpush2.msra.mxu0 0.0
        %912 = vmatprep.subr.mxu0 0.0
        %913 = vmatpush2.msra.mxu0 0.0
        %914 = vmatprep.subr.mxu0 0.0
        %915 = vmatpush2.msra.mxu0 0.0
        %916 = vmatprep.subr.mxu0 0.0
        %917 = vmatpush2.msra.mxu0 0.0
        %918 = vmatprep.subr.mxu0 0.0
        %919 = vmatpush2.msra.mxu0 0.0
        %920 = vmatprep.subr.mxu0 0.0
        %921 = vmatpush2.msra.mxu0 0.0
        %922 = vmatprep.subr.mxu0 0.0
        %923 = vmatpush2.msra.mxu0 0.0
        %924 = vmatprep.subr.mxu0 0.0
        %925 = vmatpush2.msra.mxu0 0.0
        %926 = vmatprep.subr.mxu0 0.0
        %927 = vmatpush2.msra.mxu0 0.0
        %928 = vmatprep.subr.mxu0 0.0
        %929 = vmatpush2.msra.mxu0 0.0
        %930 = vmatprep.subr.mxu0 0.0
        %931 = vmatpush2.msra.mxu0 0.0
        %932 = vmatprep.mubr.f32.mxu0 0.0
        %933 = vmatmul.mubr.f32.gmra.mxu0 %v866
        %v934 = vpop.f32.mrf.mxu0
        %v935 = vadd.f32 0.0, %v934
        %v936 = vpop.f32.mrf.mxu0
        %937 = vdwg.mxu0
        %v938 = vsel %vm864, %v775, 0
        %940 = vmatprep.subr.mxu0 0.0
        %941 = vmatpush1.msra.mxu0 0.0
        %942 = vmatprep.subr.mxu0 0.0
        %943 = vmatpush1.msra.mxu0 0.0
        %944 = vmatprep.subr.mxu0 0.0
        %945 = vmatpush1.msra.mxu0 0.0
        %946 = vmatprep.subr.mxu0 0.0
        %947 = vmatpush1.msra.mxu0 0.0
        %948 = vmatprep.subr.mxu0 0.0
        %949 = vmatpush1.msra.mxu0 0.0
        %950 = vmatprep.subr.mxu0 0.0
        %951 = vmatpush1.msra.mxu0 0.0
        %952 = vmatprep.subr.mxu0 0.0
        %953 = vmatpush1.msra.mxu0 0.0
        %954 = vmatprep.subr.mxu0 0.0
        %955 = vmatpush1.msra.mxu0 0.0
        %956 = vmatprep.subr.mxu0 0.0
        %957 = vmatpush1.msra.mxu0 0.0
        %958 = vmatprep.subr.mxu0 0.0
        %959 = vmatpush1.msra.mxu0 0.0
        %960 = vmatprep.subr.mxu0 0.0
        %961 = vmatpush1.msra.mxu0 0.0
        %962 = vmatprep.subr.mxu0 0.0
        %963 = vmatpush1.msra.mxu0 0.0
        %964 = vmatprep.subr.mxu0 0.0
        %965 = vmatpush1.msra.mxu0 %v780
        %966 = vmatprep.subr.mxu0 0.0
        %967 = vmatpush1.msra.mxu0 %v779
        %968 = vmatprep.subr.mxu0 0.0
        %969 = vmatpush1.msra.mxu0 %v778
        %970 = vmatprep.subr.mxu0 0.0
        %971 = vmatpush1.msra.mxu0 %v777
        %972 = vmatprep.subr.mxu0 0.0
        %973 = vmatpush2.msra.mxu0 0.0
        %974 = vmatprep.subr.mxu0 0.0
        %975 = vmatpush2.msra.mxu0 0.0
        %976 = vmatprep.subr.mxu0 0.0
        %977 = vmatpush2.msra.mxu0 0.0
        %978 = vmatprep.subr.mxu0 0.0
        %979 = vmatpush2.msra.mxu0 0.0
        %980 = vmatprep.subr.mxu0 0.0
        %981 = vmatpush2.msra.mxu0 0.0
        %982 = vmatprep.subr.mxu0 0.0
        %983 = vmatpush2.msra.mxu0 0.0
        %984 = vmatprep.subr.mxu0 0.0
        %985 = vmatpush2.msra.mxu0 0.0
        %986 = vmatprep.subr.mxu0 0.0
        %987 = vmatpush2.msra.mxu0 0.0
        %988 = vmatprep.subr.mxu0 0.0
        %989 = vmatpush2.msra.mxu0 0.0
        %990 = vmatprep.subr.mxu0 0.0
        %991 = vmatpush2.msra.mxu0 0.0
        %992 = vmatprep.subr.mxu0 0.0
        %993 = vmatpush2.msra.mxu0 0.0
        %994 = vmatprep.subr.mxu0 0.0
        %995 = vmatpush2.msra.mxu0 0.0
        %996 = vmatprep.subr.mxu0 0.0
        %997 = vmatpush2.msra.mxu0 0.0
        %998 = vmatprep.subr.mxu0 0.0
        %999 = vmatpush2.msra.mxu0 0.0
        %1000 = vmatprep.subr.mxu0 0.0
        %1001 = vmatpush2.msra.mxu0 0.0
        %1002 = vmatprep.subr.mxu0 0.0
        %1003 = vmatpush2.msra.mxu0 0.0
        %1004 = vmatprep.mubr.f32.mxu0 0.0
        %1005 = vmatmul.mubr.f32.gmra.mxu0 %v938
        %v1006 = vpop.f32.mrf.mxu0
        %v1007 = vadd.f32 %v935, %v1006
        %v1008 = vpop.f32.mrf.mxu0
        %1009 = vdwg.mxu0
        %s1010 = scalar_lea.vmem [#allocation2], 4
        %v1011 = vld [vmem:[%s1010] sm:$0xf]
        %v1013 = vsel %vm782, %v1011, 0
        %1015 = vmatprep.subr.mxu0 0.0
        %1016 = vmatpush1.msra.mxu0 0.0
        %1017 = vmatprep.subr.mxu0 0.0
        %1018 = vmatpush1.msra.mxu0 0.0
        %1019 = vmatprep.subr.mxu0 0.0
        %1020 = vmatpush1.msra.mxu0 0.0
        %1021 = vmatprep.subr.mxu0 0.0
        %1022 = vmatpush1.msra.mxu0 0.0
        %1023 = vmatprep.subr.mxu0 0.0
        %1024 = vmatpush1.msra.mxu0 0.0
        %1025 = vmatprep.subr.mxu0 0.0
        %1026 = vmatpush1.msra.mxu0 0.0
        %1027 = vmatprep.subr.mxu0 0.0
        %1028 = vmatpush1.msra.mxu0 0.0
        %1029 = vmatprep.subr.mxu0 0.0
        %1030 = vmatpush1.msra.mxu0 0.0
        %1031 = vmatprep.subr.mxu0 0.0
        %1032 = vmatpush1.msra.mxu0 0.0
        %1033 = vmatprep.subr.mxu0 0.0
        %1034 = vmatpush1.msra.mxu0 0.0
        %1035 = vmatprep.subr.mxu0 0.0
        %1036 = vmatpush1.msra.mxu0 0.0
        %1037 = vmatprep.subr.mxu0 0.0
        %1038 = vmatpush1.msra.mxu0 0.0
        %1039 = vmatprep.subr.mxu0 0.0
        %1040 = vmatpush1.msra.mxu0 0.0
        %1041 = vmatprep.subr.mxu0 0.0
        %1042 = vmatpush1.msra.mxu0 0.0
        %1043 = vmatprep.subr.mxu0 0.0
        %1044 = vmatpush1.msra.mxu0 0.0
        %1045 = vmatprep.subr.mxu0 0.0
        %1046 = vmatpush1.msra.mxu0 %v788
        %1047 = vmatprep.subr.mxu0 0.0
        %1048 = vmatpush2.msra.mxu0 0.0
        %1049 = vmatprep.subr.mxu0 0.0
        %1050 = vmatpush2.msra.mxu0 0.0
        %1051 = vmatprep.subr.mxu0 0.0
        %1052 = vmatpush2.msra.mxu0 0.0
        %1053 = vmatprep.subr.mxu0 0.0
        %1054 = vmatpush2.msra.mxu0 0.0
        %1055 = vmatprep.subr.mxu0 0.0
        %1056 = vmatpush2.msra.mxu0 0.0
        %1057 = vmatprep.subr.mxu0 0.0
        %1058 = vmatpush2.msra.mxu0 0.0
        %1059 = vmatprep.subr.mxu0 0.0
        %1060 = vmatpush2.msra.mxu0 0.0
        %1061 = vmatprep.subr.mxu0 0.0
        %1062 = vmatpush2.msra.mxu0 0.0
        %1063 = vmatprep.subr.mxu0 0.0
        %1064 = vmatpush2.msra.mxu0 0.0
        %1065 = vmatprep.subr.mxu0 0.0
        %1066 = vmatpush2.msra.mxu0 0.0
        %1067 = vmatprep.subr.mxu0 0.0
        %1068 = vmatpush2.msra.mxu0 0.0
        %1069 = vmatprep.subr.mxu0 0.0
        %1070 = vmatpush2.msra.mxu0 0.0
        %1071 = vmatprep.subr.mxu0 0.0
        %1072 = vmatpush2.msra.mxu0 0.0
        %1073 = vmatprep.subr.mxu0 0.0
        %1074 = vmatpush2.msra.mxu0 0.0
        %1075 = vmatprep.subr.mxu0 0.0
        %1076 = vmatpush2.msra.mxu0 0.0
        %1077 = vmatprep.subr.mxu0 0.0
        %1078 = vmatpush2.msra.mxu0 0.0
        %1079 = vmatprep.mubr.f32.mxu0 0.0
        %1080 = vmatmul.mubr.f32.gmra.mxu0 %v1013
        %v1081 = vpop.f32.mrf.mxu0
        %v1082 = vadd.f32 0.0, %v1081
        %v1083 = vpop.f32.mrf.mxu0
        %1084 = vdwg.mxu0
        %s1085 = scalar_lea.vmem %s4, 64
        %v1086 = vld [vmem:[%s1085] sm:$0xff]
        %v1087 = vld [vmem:[%s1085 + $0x8] sm:$0xff]
        %v1088 = vld [vmem:[%s1085 + $0x10] sm:$0xff]
        %v1089 = vld [vmem:[%s1085 + $0x18] sm:$0xff]
        %v1091 = vsel %vm864, %v1082, 0
        %1093 = vmatprep.subr.mxu0 0.0
        %1094 = vmatpush1.msra.mxu0 0.0
        %1095 = vmatprep.subr.mxu0 0.0
        %1096 = vmatpush1.msra.mxu0 0.0
        %1097 = vmatprep.subr.mxu0 0.0
        %1098 = vmatpush1.msra.mxu0 0.0
        %1099 = vmatprep.subr.mxu0 0.0
        %1100 = vmatpush1.msra.mxu0 0.0
        %1101 = vmatprep.subr.mxu0 0.0
        %1102 = vmatpush1.msra.mxu0 0.0
        %1103 = vmatprep.subr.mxu0 0.0
        %1104 = vmatpush1.msra.mxu0 0.0
        %1105 = vmatprep.subr.mxu0 0.0
        %1106 = vmatpush1.msra.mxu0 0.0
        %1107 = vmatprep.subr.mxu0 0.0
        %1108 = vmatpush1.msra.mxu0 0.0
        %1109 = vmatprep.subr.mxu0 0.0
        %1110 = vmatpush1.msra.mxu0 0.0
        %1111 = vmatprep.subr.mxu0 0.0
        %1112 = vmatpush1.msra.mxu0 0.0
        %1113 = vmatprep.subr.mxu0 0.0
        %1114 = vmatpush1.msra.mxu0 0.0
        %1115 = vmatprep.subr.mxu0 0.0
        %1116 = vmatpush1.msra.mxu0 0.0
        %1117 = vmatprep.subr.mxu0 0.0
        %1118 = vmatpush1.msra.mxu0 %v1089
        %1119 = vmatprep.subr.mxu0 0.0
        %1120 = vmatpush1.msra.mxu0 %v1088
        %1121 = vmatprep.subr.mxu0 0.0
        %1122 = vmatpush1.msra.mxu0 %v1087
        %1123 = vmatprep.subr.mxu0 0.0
        %1124 = vmatpush1.msra.mxu0 %v1086
        %1125 = vmatprep.subr.mxu0 0.0
        %1126 = vmatpush2.msra.mxu0 0.0
        %1127 = vmatprep.subr.mxu0 0.0
        %1128 = vmatpush2.msra.mxu0 0.0
        %1129 = vmatprep.subr.mxu0 0.0
        %1130 = vmatpush2.msra.mxu0 0.0
        %1131 = vmatprep.subr.mxu0 0.0
        %1132 = vmatpush2.msra.mxu0 0.0
        %1133 = vmatprep.subr.mxu0 0.0
        %1134 = vmatpush2.msra.mxu0 0.0
        %1135 = vmatprep.subr.mxu0 0.0
        %1136 = vmatpush2.msra.mxu0 0.0
        %1137 = vmatprep.subr.mxu0 0.0
        %1138 = vmatpush2.msra.mxu0 0.0
        %1139 = vmatprep.subr.mxu0 0.0
        %1140 = vmatpush2.msra.mxu0 0.0
        %1141 = vmatprep.subr.mxu0 0.0
        %1142 = vmatpush2.msra.mxu0 0.0
        %1143 = vmatprep.subr.mxu0 0.0
        %1144 = vmatpush2.msra.mxu0 0.0
        %1145 = vmatprep.subr.mxu0 0.0
        %1146 = vmatpush2.msra.mxu0 0.0
        %1147 = vmatprep.subr.mxu0 0.0
        %1148 = vmatpush2.msra.mxu0 0.0
        %1149 = vmatprep.subr.mxu0 0.0
        %1150 = vmatpush2.msra.mxu0 0.0
        %1151 = vmatprep.subr.mxu0 0.0
        %1152 = vmatpush2.msra.mxu0 0.0
        %1153 = vmatprep.subr.mxu0 0.0
        %1154 = vmatpush2.msra.mxu0 0.0
        %1155 = vmatprep.subr.mxu0 0.0
        %1156 = vmatpush2.msra.mxu0 0.0
        %1157 = vmatprep.mubr.f32.mxu0 0.0
        %1158 = vmatmul.mubr.f32.gmra.mxu0 %v1091
        %v1159 = vpop.f32.mrf.mxu0
        %v1160 = vadd.f32 0.0, %v1159
        %v1161 = vpop.f32.mrf.mxu0
        %1162 = vdwg.mxu0
        %v1163 = vadd.f32 %v1007, %v1160
        %v1164 = vld [vmem:[%s5] sm:$0x1]
        %v1166 = vlaneseq
        %v1167 = vshrl.u32 %v1166, 7
        %v1168 = vsub.s32 0, %v1167
        %v1169 = vrot.slane %v1164, %v1168
        %v1171 = vadd.f32 %v1163, %v1169
        %v1172 = vmax.f32 %v1171, 0.0
        %v1173 = vld [vmem:[%s6] sm:$0xff]
        %v1175 = vsel %vm782, %v1173, 0
        %v1178 = vsel %vm786, %v1172, 0
        %1180 = vmatprep.subr.mxu0 0.0
        %1181 = vmatpush1.msra.mxu0 0.0
        %1182 = vmatprep.subr.mxu0 0.0
        %1183 = vmatpush1.msra.mxu0 0.0
        %1184 = vmatprep.subr.mxu0 0.0
        %1185 = vmatpush1.msra.mxu0 0.0
        %1186 = vmatprep.subr.mxu0 0.0
        %1187 = vmatpush1.msra.mxu0 0.0
        %1188 = vmatprep.subr.mxu0 0.0
        %1189 = vmatpush1.msra.mxu0 0.0
        %1190 = vmatprep.subr.mxu0 0.0
        %1191 = vmatpush1.msra.mxu0 0.0
        %1192 = vmatprep.subr.mxu0 0.0
        %1193 = vmatpush1.msra.mxu0 0.0
        %1194 = vmatprep.subr.mxu0 0.0
        %1195 = vmatpush1.msra.mxu0 0.0
        %1196 = vmatprep.subr.mxu0 0.0
        %1197 = vmatpush1.msra.mxu0 0.0
        %1198 = vmatprep.subr.mxu0 0.0
        %1199 = vmatpush1.msra.mxu0 0.0
        %1200 = vmatprep.subr.mxu0 0.0
        %1201 = vmatpush1.msra.mxu0 0.0
        %1202 = vmatprep.subr.mxu0 0.0
        %1203 = vmatpush1.msra.mxu0 0.0
        %1204 = vmatprep.subr.mxu0 0.0
        %1205 = vmatpush1.msra.mxu0 0.0
        %1206 = vmatprep.subr.mxu0 0.0
        %1207 = vmatpush1.msra.mxu0 0.0
        %1208 = vmatprep.subr.mxu0 0.0
        %1209 = vmatpush1.msra.mxu0 0.0
        %1210 = vmatprep.subr.mxu0 0.0
        %1211 = vmatpush1.msra.mxu0 %v1178
        %1212 = vmatprep.subr.mxu0 0.0
        %1213 = vmatpush2.msra.mxu0 0.0
        %1214 = vmatprep.subr.mxu0 0.0
        %1215 = vmatpush2.msra.mxu0 0.0
        %1216 = vmatprep.subr.mxu0 0.0
        %1217 = vmatpush2.msra.mxu0 0.0
        %1218 = vmatprep.subr.mxu0 0.0
        %1219 = vmatpush2.msra.mxu0 0.0
        %1220 = vmatprep.subr.mxu0 0.0
        %1221 = vmatpush2.msra.mxu0 0.0
        %1222 = vmatprep.subr.mxu0 0.0
        %1223 = vmatpush2.msra.mxu0 0.0
        %1224 = vmatprep.subr.mxu0 0.0
        %1225 = vmatpush2.msra.mxu0 0.0
        %1226 = vmatprep.subr.mxu0 0.0
        %1227 = vmatpush2.msra.mxu0 0.0
        %1228 = vmatprep.subr.mxu0 0.0
        %1229 = vmatpush2.msra.mxu0 0.0
        %1230 = vmatprep.subr.mxu0 0.0
        %1231 = vmatpush2.msra.mxu0 0.0
        %1232 = vmatprep.subr.mxu0 0.0
        %1233 = vmatpush2.msra.mxu0 0.0
        %1234 = vmatprep.subr.mxu0 0.0
        %1235 = vmatpush2.msra.mxu0 0.0
        %1236 = vmatprep.subr.mxu0 0.0
        %1237 = vmatpush2.msra.mxu0 0.0
        %1238 = vmatprep.subr.mxu0 0.0
        %1239 = vmatpush2.msra.mxu0 0.0
        %1240 = vmatprep.subr.mxu0 0.0
        %1241 = vmatpush2.msra.mxu0 0.0
        %1242 = vmatprep.subr.mxu0 0.0
        %1243 = vmatpush2.msra.mxu0 0.0
        %1244 = vmatprep.mubr.f32.mxu0 0.0
        %1245 = vmatmul.mubr.f32.gmra.mxu0 %v1175
        %v1246 = vpop.f32.mrf.mxu0
        %v1247 = vadd.f32 0.0, %v1246
        %v1248 = vpop.f32.mrf.mxu0
        %1249 = vdwg.mxu0
        %v1250 = vld [vmem:[%s7] sm:$0xff]
        %v1251 = vld [vmem:[%s7 + $0x8] sm:$0xff]
        %v1252 = vld [vmem:[%s7 + $0x10] sm:$0xff]
        %v1253 = vld [vmem:[%s7 + $0x18] sm:$0xff]
        %s1254 = scalar_lea.vmem %s6, 8
        %v1255 = vld [vmem:[%s1254] sm:$0xff]
        %v1257 = vsel %vm782, %v1255, 0
        %1259 = vmatprep.subr.mxu0 0.0
        %1260 = vmatpush1.msra.mxu0 0.0
        %1261 = vmatprep.subr.mxu0 0.0
        %1262 = vmatpush1.msra.mxu0 0.0
        %1263 = vmatprep.subr.mxu0 0.0
        %1264 = vmatpush1.msra.mxu0 0.0
        %1265 = vmatprep.subr.mxu0 0.0
        %1266 = vmatpush1.msra.mxu0 0.0
        %1267 = vmatprep.subr.mxu0 0.0
        %1268 = vmatpush1.msra.mxu0 0.0
        %1269 = vmatprep.subr.mxu0 0.0
        %1270 = vmatpush1.msra.mxu0 0.0
        %1271 = vmatprep.subr.mxu0 0.0
        %1272 = vmatpush1.msra.mxu0 0.0
        %1273 = vmatprep.subr.mxu0 0.0
        %1274 = vmatpush1.msra.mxu0 0.0
        %1275 = vmatprep.subr.mxu0 0.0
        %1276 = vmatpush1.msra.mxu0 0.0
        %1277 = vmatprep.subr.mxu0 0.0
        %1278 = vmatpush1.msra.mxu0 0.0
        %1279 = vmatprep.subr.mxu0 0.0
        %1280 = vmatpush1.msra.mxu0 0.0
        %1281 = vmatprep.subr.mxu0 0.0
        %1282 = vmatpush1.msra.mxu0 0.0
        %1283 = vmatprep.subr.mxu0 0.0
        %1284 = vmatpush1.msra.mxu0 0.0
        %1285 = vmatprep.subr.mxu0 0.0
        %1286 = vmatpush1.msra.mxu0 0.0
        %1287 = vmatprep.subr.mxu0 0.0
        %1288 = vmatpush1.msra.mxu0 0.0
        %1289 = vmatprep.subr.mxu0 0.0
        %1290 = vmatpush1.msra.mxu0 %v1178
        %1291 = vmatprep.subr.mxu0 0.0
        %1292 = vmatpush2.msra.mxu0 0.0
        %1293 = vmatprep.subr.mxu0 0.0
        %1294 = vmatpush2.msra.mxu0 0.0
        %1295 = vmatprep.subr.mxu0 0.0
        %1296 = vmatpush2.msra.mxu0 0.0
        %1297 = vmatprep.subr.mxu0 0.0
        %1298 = vmatpush2.msra.mxu0 0.0
        %1299 = vmatprep.subr.mxu0 0.0
        %1300 = vmatpush2.msra.mxu0 0.0
        %1301 = vmatprep.subr.mxu0 0.0
        %1302 = vmatpush2.msra.mxu0 0.0
        %1303 = vmatprep.subr.mxu0 0.0
        %1304 = vmatpush2.msra.mxu0 0.0
        %1305 = vmatprep.subr.mxu0 0.0
        %1306 = vmatpush2.msra.mxu0 0.0
        %1307 = vmatprep.subr.mxu0 0.0
        %1308 = vmatpush2.msra.mxu0 0.0
        %1309 = vmatprep.subr.mxu0 0.0
        %1310 = vmatpush2.msra.mxu0 0.0
        %1311 = vmatprep.subr.mxu0 0.0
        %1312 = vmatpush2.msra.mxu0 0.0
        %1313 = vmatprep.subr.mxu0 0.0
        %1314 = vmatpush2.msra.mxu0 0.0
        %1315 = vmatprep.subr.mxu0 0.0
        %1316 = vmatpush2.msra.mxu0 0.0
        %1317 = vmatprep.subr.mxu0 0.0
        %1318 = vmatpush2.msra.mxu0 0.0
        %1319 = vmatprep.subr.mxu0 0.0
        %1320 = vmatpush2.msra.mxu0 0.0
        %1321 = vmatprep.subr.mxu0 0.0
        %1322 = vmatpush2.msra.mxu0 0.0
        %1323 = vmatprep.mubr.f32.mxu0 0.0
        %1324 = vmatmul.mubr.f32.gmra.mxu0 %v1257
        %v1325 = vpop.f32.mrf.mxu0
        %v1326 = vadd.f32 0.0, %v1325
        %v1327 = vpop.f32.mrf.mxu0
        %1328 = vdwg.mxu0
        %s1329 = scalar_lea.vmem %s7, 32
        %v1330 = vld [vmem:[%s1329] sm:$0xff]
        %v1331 = vld [vmem:[%s1329 + $0x8] sm:$0xff]
        %v1332 = vld [vmem:[%s1329 + $0x10] sm:$0xff]
        %v1333 = vld [vmem:[%s1329 + $0x18] sm:$0xff]
        %v1335 = vsel %vm864, %v1326, 0
        %1337 = vmatprep.subr.mxu0 0.0
        %1338 = vmatpush1.msra.mxu0 0.0
        %1339 = vmatprep.subr.mxu0 0.0
        %1340 = vmatpush1.msra.mxu0 0.0
        %1341 = vmatprep.subr.mxu0 0.0
        %1342 = vmatpush1.msra.mxu0 0.0
        %1343 = vmatprep.subr.mxu0 0.0
        %1344 = vmatpush1.msra.mxu0 0.0
        %1345 = vmatprep.subr.mxu0 0.0
        %1346 = vmatpush1.msra.mxu0 0.0
        %1347 = vmatprep.subr.mxu0 0.0
        %1348 = vmatpush1.msra.mxu0 0.0
        %1349 = vmatprep.subr.mxu0 0.0
        %1350 = vmatpush1.msra.mxu0 0.0
        %1351 = vmatprep.subr.mxu0 0.0
        %1352 = vmatpush1.msra.mxu0 0.0
        %1353 = vmatprep.subr.mxu0 0.0
        %1354 = vmatpush1.msra.mxu0 0.0
        %1355 = vmatprep.subr.mxu0 0.0
        %1356 = vmatpush1.msra.mxu0 0.0
        %1357 = vmatprep.subr.mxu0 0.0
        %1358 = vmatpush1.msra.mxu0 0.0
        %1359 = vmatprep.subr.mxu0 0.0
        %1360 = vmatpush1.msra.mxu0 0.0
        %1361 = vmatprep.subr.mxu0 0.0
        %1362 = vmatpush1.msra.mxu0 %v1333
        %1363 = vmatprep.subr.mxu0 0.0
        %1364 = vmatpush1.msra.mxu0 %v1332
        %1365 = vmatprep.subr.mxu0 0.0
        %1366 = vmatpush1.msra.mxu0 %v1331
        %1367 = vmatprep.subr.mxu0 0.0
        %1368 = vmatpush1.msra.mxu0 %v1330
        %1369 = vmatprep.subr.mxu0 0.0
        %1370 = vmatpush2.msra.mxu0 0.0
        %1371 = vmatprep.subr.mxu0 0.0
        %1372 = vmatpush2.msra.mxu0 0.0
        %1373 = vmatprep.subr.mxu0 0.0
        %1374 = vmatpush2.msra.mxu0 0.0
        %1375 = vmatprep.subr.mxu0 0.0
        %1376 = vmatpush2.msra.mxu0 0.0
        %1377 = vmatprep.subr.mxu0 0.0
        %1378 = vmatpush2.msra.mxu0 0.0
        %1379 = vmatprep.subr.mxu0 0.0
        %1380 = vmatpush2.msra.mxu0 0.0
        %1381 = vmatprep.subr.mxu0 0.0
        %1382 = vmatpush2.msra.mxu0 0.0
        %1383 = vmatprep.subr.mxu0 0.0
        %1384 = vmatpush2.msra.mxu0 0.0
        %1385 = vmatprep.subr.mxu0 0.0
        %1386 = vmatpush2.msra.mxu0 0.0
        %1387 = vmatprep.subr.mxu0 0.0
        %1388 = vmatpush2.msra.mxu0 0.0
        %1389 = vmatprep.subr.mxu0 0.0
        %1390 = vmatpush2.msra.mxu0 0.0
        %1391 = vmatprep.subr.mxu0 0.0
        %1392 = vmatpush2.msra.mxu0 0.0
        %1393 = vmatprep.subr.mxu0 0.0
        %1394 = vmatpush2.msra.mxu0 0.0
        %1395 = vmatprep.subr.mxu0 0.0
        %1396 = vmatpush2.msra.mxu0 0.0
        %1397 = vmatprep.subr.mxu0 0.0
        %1398 = vmatpush2.msra.mxu0 0.0
        %1399 = vmatprep.subr.mxu0 0.0
        %1400 = vmatpush2.msra.mxu0 0.0
        %1401 = vmatprep.mubr.f32.mxu0 0.0
        %1402 = vmatmul.mubr.f32.gmra.mxu0 %v1335
        %v1403 = vpop.f32.mrf.mxu0
        %v1404 = vadd.f32 0.0, %v1403
        %v1405 = vpop.f32.mrf.mxu0
        %1406 = vdwg.mxu0
        %v1408 = vsel %vm864, %v1247, 0
        %1410 = vmatprep.subr.mxu0 0.0
        %1411 = vmatpush1.msra.mxu0 0.0
        %1412 = vmatprep.subr.mxu0 0.0
        %1413 = vmatpush1.msra.mxu0 0.0
        %1414 = vmatprep.subr.mxu0 0.0
        %1415 = vmatpush1.msra.mxu0 0.0
        %1416 = vmatprep.subr.mxu0 0.0
        %1417 = vmatpush1.msra.mxu0 0.0
        %1418 = vmatprep.subr.mxu0 0.0
        %1419 = vmatpush1.msra.mxu0 0.0
        %1420 = vmatprep.subr.mxu0 0.0
        %1421 = vmatpush1.msra.mxu0 0.0
        %1422 = vmatprep.subr.mxu0 0.0
        %1423 = vmatpush1.msra.mxu0 0.0
        %1424 = vmatprep.subr.mxu0 0.0
        %1425 = vmatpush1.msra.mxu0 0.0
        %1426 = vmatprep.subr.mxu0 0.0
        %1427 = vmatpush1.msra.mxu0 0.0
        %1428 = vmatprep.subr.mxu0 0.0
        %1429 = vmatpush1.msra.mxu0 0.0
        %1430 = vmatprep.subr.mxu0 0.0
        %1431 = vmatpush1.msra.mxu0 0.0
        %1432 = vmatprep.subr.mxu0 0.0
        %1433 = vmatpush1.msra.mxu0 0.0
        %1434 = vmatprep.subr.mxu0 0.0
        %1435 = vmatpush1.msra.mxu0 %v1253
        %1436 = vmatprep.subr.mxu0 0.0
        %1437 = vmatpush1.msra.mxu0 %v1252
        %1438 = vmatprep.subr.mxu0 0.0
        %1439 = vmatpush1.msra.mxu0 %v1251
        %1440 = vmatprep.subr.mxu0 0.0
        %1441 = vmatpush1.msra.mxu0 %v1250
        %1442 = vmatprep.subr.mxu0 0.0
        %1443 = vmatpush2.msra.mxu0 0.0
        %1444 = vmatprep.subr.mxu0 0.0
        %1445 = vmatpush2.msra.mxu0 0.0
        %1446 = vmatprep.subr.mxu0 0.0
        %1447 = vmatpush2.msra.mxu0 0.0
        %1448 = vmatprep.subr.mxu0 0.0
        %1449 = vmatpush2.msra.mxu0 0.0
        %1450 = vmatprep.subr.mxu0 0.0
        %1451 = vmatpush2.msra.mxu0 0.0
        %1452 = vmatprep.subr.mxu0 0.0
        %1453 = vmatpush2.msra.mxu0 0.0
        %1454 = vmatprep.subr.mxu0 0.0
        %1455 = vmatpush2.msra.mxu0 0.0
        %1456 = vmatprep.subr.mxu0 0.0
        %1457 = vmatpush2.msra.mxu0 0.0
        %1458 = vmatprep.subr.mxu0 0.0
        %1459 = vmatpush2.msra.mxu0 0.0
        %1460 = vmatprep.subr.mxu0 0.0
        %1461 = vmatpush2.msra.mxu0 0.0
        %1462 = vmatprep.subr.mxu0 0.0
        %1463 = vmatpush2.msra.mxu0 0.0
        %1464 = vmatprep.subr.mxu0 0.0
        %1465 = vmatpush2.msra.mxu0 0.0
        %1466 = vmatprep.subr.mxu0 0.0
        %1467 = vmatpush2.msra.mxu0 0.0
        %1468 = vmatprep.subr.mxu0 0.0
        %1469 = vmatpush2.msra.mxu0 0.0
        %1470 = vmatprep.subr.mxu0 0.0
        %1471 = vmatpush2.msra.mxu0 0.0
        %1472 = vmatprep.subr.mxu0 0.0
        %1473 = vmatpush2.msra.mxu0 0.0
        %1474 = vmatprep.mubr.f32.mxu0 0.0
        %1475 = vmatmul.mubr.f32.gmra.mxu0 %v1408
        %v1476 = vpop.f32.mrf.mxu0
        %v1477 = vadd.f32 %v1404, %v1476
        %v1478 = vpop.f32.mrf.mxu0
        %1479 = vdwg.mxu0
        %s1480 = scalar_lea.vmem %s6, 16
        %v1481 = vld [vmem:[%s1480] sm:$0xff]
        %v1483 = vsel %vm782, %v1481, 0
        %1485 = vmatprep.subr.mxu0 0.0
        %1486 = vmatpush1.msra.mxu0 0.0
        %1487 = vmatprep.subr.mxu0 0.0
        %1488 = vmatpush1.msra.mxu0 0.0
        %1489 = vmatprep.subr.mxu0 0.0
        %1490 = vmatpush1.msra.mxu0 0.0
        %1491 = vmatprep.subr.mxu0 0.0
        %1492 = vmatpush1.msra.mxu0 0.0
        %1493 = vmatprep.subr.mxu0 0.0
        %1494 = vmatpush1.msra.mxu0 0.0
        %1495 = vmatprep.subr.mxu0 0.0
        %1496 = vmatpush1.msra.mxu0 0.0
        %1497 = vmatprep.subr.mxu0 0.0
        %1498 = vmatpush1.msra.mxu0 0.0
        %1499 = vmatprep.subr.mxu0 0.0
        %1500 = vmatpush1.msra.mxu0 0.0
        %1501 = vmatprep.subr.mxu0 0.0
        %1502 = vmatpush1.msra.mxu0 0.0
        %1503 = vmatprep.subr.mxu0 0.0
        %1504 = vmatpush1.msra.mxu0 0.0
        %1505 = vmatprep.subr.mxu0 0.0
        %1506 = vmatpush1.msra.mxu0 0.0
        %1507 = vmatprep.subr.mxu0 0.0
        %1508 = vmatpush1.msra.mxu0 0.0
        %1509 = vmatprep.subr.mxu0 0.0
        %1510 = vmatpush1.msra.mxu0 0.0
        %1511 = vmatprep.subr.mxu0 0.0
        %1512 = vmatpush1.msra.mxu0 0.0
        %1513 = vmatprep.subr.mxu0 0.0
        %1514 = vmatpush1.msra.mxu0 0.0
        %1515 = vmatprep.subr.mxu0 0.0
        %1516 = vmatpush1.msra.mxu0 %v1178
        %1517 = vmatprep.subr.mxu0 0.0
        %1518 = vmatpush2.msra.mxu0 0.0
        %1519 = vmatprep.subr.mxu0 0.0
        %1520 = vmatpush2.msra.mxu0 0.0
        %1521 = vmatprep.subr.mxu0 0.0
        %1522 = vmatpush2.msra.mxu0 0.0
        %1523 = vmatprep.subr.mxu0 0.0
        %1524 = vmatpush2.msra.mxu0 0.0
        %1525 = vmatprep.subr.mxu0 0.0
        %1526 = vmatpush2.msra.mxu0 0.0
        %1527 = vmatprep.subr.mxu0 0.0
        %1528 = vmatpush2.msra.mxu0 0.0
        %1529 = vmatprep.subr.mxu0 0.0
        %1530 = vmatpush2.msra.mxu0 0.0
        %1531 = vmatprep.subr.mxu0 0.0
        %1532 = vmatpush2.msra.mxu0 0.0
        %1533 = vmatprep.subr.mxu0 0.0
        %1534 = vmatpush2.msra.mxu0 0.0
        %1535 = vmatprep.subr.mxu0 0.0
        %1536 = vmatpush2.msra.mxu0 0.0
        %1537 = vmatprep.subr.mxu0 0.0
        %1538 = vmatpush2.msra.mxu0 0.0
        %1539 = vmatprep.subr.mxu0 0.0
        %1540 = vmatpush2.msra.mxu0 0.0
        %1541 = vmatprep.subr.mxu0 0.0
        %1542 = vmatpush2.msra.mxu0 0.0
        %1543 = vmatprep.subr.mxu0 0.0
        %1544 = vmatpush2.msra.mxu0 0.0
        %1545 = vmatprep.subr.mxu0 0.0
        %1546 = vmatpush2.msra.mxu0 0.0
        %1547 = vmatprep.subr.mxu0 0.0
        %1548 = vmatpush2.msra.mxu0 0.0
        %1549 = vmatprep.mubr.f32.mxu0 0.0
        %1550 = vmatmul.mubr.f32.gmra.mxu0 %v1483
        %v1551 = vpop.f32.mrf.mxu0
        %v1552 = vadd.f32 0.0, %v1551
        %v1553 = vpop.f32.mrf.mxu0
        %1554 = vdwg.mxu0
        %s1555 = scalar_lea.vmem %s7, 64
        %v1556 = vld [vmem:[%s1555] sm:$0xff]
        %v1557 = vld [vmem:[%s1555 + $0x8] sm:$0xff]
        %v1558 = vld [vmem:[%s1555 + $0x10] sm:$0xff]
        %v1559 = vld [vmem:[%s1555 + $0x18] sm:$0xff]
        %v1561 = vsel %vm864, %v1552, 0
        %1563 = vmatprep.subr.mxu0 0.0
        %1564 = vmatpush1.msra.mxu0 0.0
        %1565 = vmatprep.subr.mxu0 0.0
        %1566 = vmatpush1.msra.mxu0 0.0
        %1567 = vmatprep.subr.mxu0 0.0
        %1568 = vmatpush1.msra.mxu0 0.0
        %1569 = vmatprep.subr.mxu0 0.0
        %1570 = vmatpush1.msra.mxu0 0.0
        %1571 = vmatprep.subr.mxu0 0.0
        %1572 = vmatpush1.msra.mxu0 0.0
        %1573 = vmatprep.subr.mxu0 0.0
        %1574 = vmatpush1.msra.mxu0 0.0
        %1575 = vmatprep.subr.mxu0 0.0
        %1576 = vmatpush1.msra.mxu0 0.0
        %1577 = vmatprep.subr.mxu0 0.0
        %1578 = vmatpush1.msra.mxu0 0.0
        %1579 = vmatprep.subr.mxu0 0.0
        %1580 = vmatpush1.msra.mxu0 0.0
        %1581 = vmatprep.subr.mxu0 0.0
        %1582 = vmatpush1.msra.mxu0 0.0
        %1583 = vmatprep.subr.mxu0 0.0
        %1584 = vmatpush1.msra.mxu0 0.0
        %1585 = vmatprep.subr.mxu0 0.0
        %1586 = vmatpush1.msra.mxu0 0.0
        %1587 = vmatprep.subr.mxu0 0.0
        %1588 = vmatpush1.msra.mxu0 %v1559
        %1589 = vmatprep.subr.mxu0 0.0
        %1590 = vmatpush1.msra.mxu0 %v1558
        %1591 = vmatprep.subr.mxu0 0.0
        %1592 = vmatpush1.msra.mxu0 %v1557
        %1593 = vmatprep.subr.mxu0 0.0
        %1594 = vmatpush1.msra.mxu0 %v1556
        %1595 = vmatprep.subr.mxu0 0.0
        %1596 = vmatpush2.msra.mxu0 0.0
        %1597 = vmatprep.subr.mxu0 0.0
        %1598 = vmatpush2.msra.mxu0 0.0
        %1599 = vmatprep.subr.mxu0 0.0
        %1600 = vmatpush2.msra.mxu0 0.0
        %1601 = vmatprep.subr.mxu0 0.0
        %1602 = vmatpush2.msra.mxu0 0.0
        %1603 = vmatprep.subr.mxu0 0.0
        %1604 = vmatpush2.msra.mxu0 0.0
        %1605 = vmatprep.subr.mxu0 0.0
        %1606 = vmatpush2.msra.mxu0 0.0
        %1607 = vmatprep.subr.mxu0 0.0
        %1608 = vmatpush2.msra.mxu0 0.0
        %1609 = vmatprep.subr.mxu0 0.0
        %1610 = vmatpush2.msra.mxu0 0.0
        %1611 = vmatprep.subr.mxu0 0.0
        %1612 = vmatpush2.msra.mxu0 0.0
        %1613 = vmatprep.subr.mxu0 0.0
        %1614 = vmatpush2.msra.mxu0 0.0
        %1615 = vmatprep.subr.mxu0 0.0
        %1616 = vmatpush2.msra.mxu0 0.0
        %1617 = vmatprep.subr.mxu0 0.0
        %1618 = vmatpush2.msra.mxu0 0.0
        %1619 = vmatprep.subr.mxu0 0.0
        %1620 = vmatpush2.msra.mxu0 0.0
        %1621 = vmatprep.subr.mxu0 0.0
        %1622 = vmatpush2.msra.mxu0 0.0
        %1623 = vmatprep.subr.mxu0 0.0
        %1624 = vmatpush2.msra.mxu0 0.0
        %1625 = vmatprep.subr.mxu0 0.0
        %1626 = vmatpush2.msra.mxu0 0.0
        %1627 = vmatprep.mubr.f32.mxu0 0.0
        %1628 = vmatmul.mubr.f32.gmra.mxu0 %v1561
        %v1629 = vpop.f32.mrf.mxu0
        %v1630 = vadd.f32 0.0, %v1629
        %v1631 = vpop.f32.mrf.mxu0
        %1632 = vdwg.mxu0
        %v1633 = vadd.f32 %v1477, %v1630
        %v1634 = vld [vmem:[%s8] sm:$0x1]
        %v1636 = vlaneseq
        %v1637 = vshrl.u32 %v1636, 7
        %v1638 = vsub.s32 0, %v1637
        %v1639 = vrot.slane %v1634, %v1638
        %v1641 = vadd.f32 %v1633, %v1639
        %v1642 = vmax.f32 %v1641, 0.0
        %v1643 = vld [vmem:[%s769] sm:$0xff]
        %s1644 = scalar_lea.vmem %s10, 32
        %v1645 = vld [vmem:[%s1644] sm:$0xff]
        %v1646 = vld [vmem:[%s1644 + $0x8] sm:$0xff]
        %v1647 = vld [vmem:[%s1644 + $0x10] sm:$0xff]
        %v1648 = vld [vmem:[%s1644 + $0x18] sm:$0xff]
        %v1649 = vld [vmem:[#allocation4] sm:$0xff]
        %vm1650 = vcmask 64512
        %v1652 = vsel %vm1650, %v1649, 0
        %1654 = vmatprep.subr.mxu0 0.0
        %1655 = vmatpush1.msra.mxu0 0.0
        %1656 = vmatprep.subr.mxu0 0.0
        %1657 = vmatpush1.msra.mxu0 0.0
        %1658 = vmatprep.subr.mxu0 0.0
        %1659 = vmatpush1.msra.mxu0 0.0
        %1660 = vmatprep.subr.mxu0 0.0
        %1661 = vmatpush1.msra.mxu0 0.0
        %1662 = vmatprep.subr.mxu0 0.0
        %1663 = vmatpush1.msra.mxu0 0.0
        %1664 = vmatprep.subr.mxu0 0.0
        %1665 = vmatpush1.msra.mxu0 0.0
        %1666 = vmatprep.subr.mxu0 0.0
        %1667 = vmatpush1.msra.mxu0 0.0
        %1668 = vmatprep.subr.mxu0 0.0
        %1669 = vmatpush1.msra.mxu0 0.0
        %1670 = vmatprep.subr.mxu0 0.0
        %1671 = vmatpush1.msra.mxu0 0.0
        %1672 = vmatprep.subr.mxu0 0.0
        %1673 = vmatpush1.msra.mxu0 0.0
        %1674 = vmatprep.subr.mxu0 0.0
        %1675 = vmatpush1.msra.mxu0 0.0
        %1676 = vmatprep.subr.mxu0 0.0
        %1677 = vmatpush1.msra.mxu0 0.0
        %1678 = vmatprep.subr.mxu0 0.0
        %1679 = vmatpush1.msra.mxu0 0.0
        %1680 = vmatprep.subr.mxu0 0.0
        %1681 = vmatpush1.msra.mxu0 0.0
        %1682 = vmatprep.subr.mxu0 0.0
        %1683 = vmatpush1.msra.mxu0 0.0
        %1684 = vmatprep.subr.mxu0 0.0
        %1685 = vmatpush1.msra.mxu0 %v1642
        %1686 = vmatprep.subr.mxu0 0.0
        %1687 = vmatpush2.msra.mxu0 0.0
        %1688 = vmatprep.subr.mxu0 0.0
        %1689 = vmatpush2.msra.mxu0 0.0
        %1690 = vmatprep.subr.mxu0 0.0
        %1691 = vmatpush2.msra.mxu0 0.0
        %1692 = vmatprep.subr.mxu0 0.0
        %1693 = vmatpush2.msra.mxu0 0.0
        %1694 = vmatprep.subr.mxu0 0.0
        %1695 = vmatpush2.msra.mxu0 0.0
        %1696 = vmatprep.subr.mxu0 0.0
        %1697 = vmatpush2.msra.mxu0 0.0
        %1698 = vmatprep.subr.mxu0 0.0
        %1699 = vmatpush2.msra.mxu0 0.0
        %1700 = vmatprep.subr.mxu0 0.0
        %1701 = vmatpush2.msra.mxu0 0.0
        %1702 = vmatprep.subr.mxu0 0.0
        %1703 = vmatpush2.msra.mxu0 0.0
        %1704 = vmatprep.subr.mxu0 0.0
        %1705 = vmatpush2.msra.mxu0 0.0
        %1706 = vmatprep.subr.mxu0 0.0
        %1707 = vmatpush2.msra.mxu0 0.0
        %1708 = vmatprep.subr.mxu0 0.0
        %1709 = vmatpush2.msra.mxu0 0.0
        %1710 = vmatprep.subr.mxu0 0.0
        %1711 = vmatpush2.msra.mxu0 0.0
        %1712 = vmatprep.subr.mxu0 0.0
        %1713 = vmatpush2.msra.mxu0 0.0
        %1714 = vmatprep.subr.mxu0 0.0
        %1715 = vmatpush2.msra.mxu0 0.0
        %1716 = vmatprep.subr.mxu0 0.0
        %1717 = vmatpush2.msra.mxu0 0.0
        %1718 = vmatprep.mubr.f32.mxu0 0.0
        %1719 = vmatmul.mubr.f32.gmra.mxu0 %v1652
        %v1720 = vpop.f32.mrf.mxu0
        %v1721 = vadd.f32 0.0, %v1720
        %v1722 = vpop.f32.mrf.mxu0
        %1723 = vdwg.mxu0
        %v1724 = vld [vmem:[%s10] sm:$0xff]
        %v1725 = vld [vmem:[%s10 + $0x8] sm:$0xff]
        %v1726 = vld [vmem:[%s10 + $0x10] sm:$0xff]
        %v1727 = vld [vmem:[%s10 + $0x18] sm:$0xff]
        %v1729 = vsel %vm864, %v1721, 0
        %1731 = vmatprep.subr.mxu0 0.0
        %1732 = vmatpush1.msra.mxu0 0.0
        %1733 = vmatprep.subr.mxu0 0.0
        %1734 = vmatpush1.msra.mxu0 0.0
        %1735 = vmatprep.subr.mxu0 0.0
        %1736 = vmatpush1.msra.mxu0 0.0
        %1737 = vmatprep.subr.mxu0 0.0
        %1738 = vmatpush1.msra.mxu0 0.0
        %1739 = vmatprep.subr.mxu0 0.0
        %1740 = vmatpush1.msra.mxu0 0.0
        %1741 = vmatprep.subr.mxu0 0.0
        %1742 = vmatpush1.msra.mxu0 0.0
        %1743 = vmatprep.subr.mxu0 0.0
        %1744 = vmatpush1.msra.mxu0 0.0
        %1745 = vmatprep.subr.mxu0 0.0
        %1746 = vmatpush1.msra.mxu0 0.0
        %1747 = vmatprep.subr.mxu0 0.0
        %1748 = vmatpush1.msra.mxu0 0.0
        %1749 = vmatprep.subr.mxu0 0.0
        %1750 = vmatpush1.msra.mxu0 0.0
        %1751 = vmatprep.subr.mxu0 0.0
        %1752 = vmatpush1.msra.mxu0 0.0
        %1753 = vmatprep.subr.mxu0 0.0
        %1754 = vmatpush1.msra.mxu0 0.0
        %1755 = vmatprep.subr.mxu0 0.0
        %1756 = vmatpush1.msra.mxu0 %v1727
        %1757 = vmatprep.subr.mxu0 0.0
        %1758 = vmatpush1.msra.mxu0 %v1726
        %1759 = vmatprep.subr.mxu0 0.0
        %1760 = vmatpush1.msra.mxu0 %v1725
        %1761 = vmatprep.subr.mxu0 0.0
        %1762 = vmatpush1.msra.mxu0 %v1724
        %1763 = vmatprep.subr.mxu0 0.0
        %1764 = vmatpush2.msra.mxu0 0.0
        %1765 = vmatprep.subr.mxu0 0.0
        %1766 = vmatpush2.msra.mxu0 0.0
        %1767 = vmatprep.subr.mxu0 0.0
        %1768 = vmatpush2.msra.mxu0 0.0
        %1769 = vmatprep.subr.mxu0 0.0
        %1770 = vmatpush2.msra.mxu0 0.0
        %1771 = vmatprep.subr.mxu0 0.0
        %1772 = vmatpush2.msra.mxu0 0.0
        %1773 = vmatprep.subr.mxu0 0.0
        %1774 = vmatpush2.msra.mxu0 0.0
        %1775 = vmatprep.subr.mxu0 0.0
        %1776 = vmatpush2.msra.mxu0 0.0
        %1777 = vmatprep.subr.mxu0 0.0
        %1778 = vmatpush2.msra.mxu0 0.0
        %1779 = vmatprep.subr.mxu0 0.0
        %1780 = vmatpush2.msra.mxu0 0.0
        %1781 = vmatprep.subr.mxu0 0.0
        %1782 = vmatpush2.msra.mxu0 0.0
        %1783 = vmatprep.subr.mxu0 0.0
        %1784 = vmatpush2.msra.mxu0 0.0
        %1785 = vmatprep.subr.mxu0 0.0
        %1786 = vmatpush2.msra.mxu0 0.0
        %1787 = vmatprep.subr.mxu0 0.0
        %1788 = vmatpush2.msra.mxu0 0.0
        %1789 = vmatprep.subr.mxu0 0.0
        %1790 = vmatpush2.msra.mxu0 0.0
        %1791 = vmatprep.subr.mxu0 0.0
        %1792 = vmatpush2.msra.mxu0 0.0
        %1793 = vmatprep.subr.mxu0 0.0
        %1794 = vmatpush2.msra.mxu0 0.0
        %1795 = vmatprep.mubr.f32.mxu0 0.0
        %1796 = vmatmul.mubr.f32.gmra.mxu0 %v1729
        %v1797 = vpop.f32.mrf.mxu0
        %v1798 = vadd.f32 0.0, %v1797
        %v1799 = vpop.f32.mrf.mxu0
        %1800 = vdwg.mxu0
        %v1802 = vsel %vm864, %v1642, 0
        %1804 = vmatprep.subr.mxu0 0.0
        %1805 = vmatpush1.msra.mxu0 0.0
        %1806 = vmatprep.subr.mxu0 0.0
        %1807 = vmatpush1.msra.mxu0 0.0
        %1808 = vmatprep.subr.mxu0 0.0
        %1809 = vmatpush1.msra.mxu0 0.0
        %1810 = vmatprep.subr.mxu0 0.0
        %1811 = vmatpush1.msra.mxu0 0.0
        %1812 = vmatprep.subr.mxu0 0.0
        %1813 = vmatpush1.msra.mxu0 0.0
        %1814 = vmatprep.subr.mxu0 0.0
        %1815 = vmatpush1.msra.mxu0 0.0
        %1816 = vmatprep.subr.mxu0 0.0
        %1817 = vmatpush1.msra.mxu0 0.0
        %1818 = vmatprep.subr.mxu0 0.0
        %1819 = vmatpush1.msra.mxu0 0.0
        %1820 = vmatprep.subr.mxu0 0.0
        %1821 = vmatpush1.msra.mxu0 0.0
        %1822 = vmatprep.subr.mxu0 0.0
        %1823 = vmatpush1.msra.mxu0 0.0
        %1824 = vmatprep.subr.mxu0 0.0
        %1825 = vmatpush1.msra.mxu0 0.0
        %1826 = vmatprep.subr.mxu0 0.0
        %1827 = vmatpush1.msra.mxu0 0.0
        %1828 = vmatprep.subr.mxu0 0.0
        %1829 = vmatpush1.msra.mxu0 %v1648
        %1830 = vmatprep.subr.mxu0 0.0
        %1831 = vmatpush1.msra.mxu0 %v1647
        %1832 = vmatprep.subr.mxu0 0.0
        %1833 = vmatpush1.msra.mxu0 %v1646
        %1834 = vmatprep.subr.mxu0 0.0
        %1835 = vmatpush1.msra.mxu0 %v1645
        %1836 = vmatprep.subr.mxu0 0.0
        %1837 = vmatpush2.msra.mxu0 0.0
        %1838 = vmatprep.subr.mxu0 0.0
        %1839 = vmatpush2.msra.mxu0 0.0
        %1840 = vmatprep.subr.mxu0 0.0
        %1841 = vmatpush2.msra.mxu0 0.0
        %1842 = vmatprep.subr.mxu0 0.0
        %1843 = vmatpush2.msra.mxu0 0.0
        %1844 = vmatprep.subr.mxu0 0.0
        %1845 = vmatpush2.msra.mxu0 0.0
        %1846 = vmatprep.subr.mxu0 0.0
        %1847 = vmatpush2.msra.mxu0 0.0
        %1848 = vmatprep.subr.mxu0 0.0
        %1849 = vmatpush2.msra.mxu0 0.0
        %1850 = vmatprep.subr.mxu0 0.0
        %1851 = vmatpush2.msra.mxu0 0.0
        %1852 = vmatprep.subr.mxu0 0.0
        %1853 = vmatpush2.msra.mxu0 0.0
        %1854 = vmatprep.subr.mxu0 0.0
        %1855 = vmatpush2.msra.mxu0 0.0
        %1856 = vmatprep.subr.mxu0 0.0
        %1857 = vmatpush2.msra.mxu0 0.0
        %1858 = vmatprep.subr.mxu0 0.0
        %1859 = vmatpush2.msra.mxu0 0.0
        %1860 = vmatprep.subr.mxu0 0.0
        %1861 = vmatpush2.msra.mxu0 0.0
        %1862 = vmatprep.subr.mxu0 0.0
        %1863 = vmatpush2.msra.mxu0 0.0
        %1864 = vmatprep.subr.mxu0 0.0
        %1865 = vmatpush2.msra.mxu0 0.0
        %1866 = vmatprep.subr.mxu0 0.0
        %1867 = vmatpush2.msra.mxu0 0.0
        %1868 = vmatprep.mubr.f32.mxu0 0.0
        %1869 = vmatmul.mubr.f32.gmra.mxu0 %v1802
        %v1870 = vpop.f32.mrf.mxu0
        %v1871 = vadd.f32 %v1798, %v1870
        %v1872 = vpop.f32.mrf.mxu0
        %1873 = vdwg.mxu0
        %s1874 = scalar_lea.vmem [#allocation4], 8
        %v1875 = vld [vmem:[%s1874] sm:$0xff]
        %v1877 = vsel %vm1650, %v1875, 0
        %1879 = vmatprep.subr.mxu0 0.0
        %1880 = vmatpush1.msra.mxu0 0.0
        %1881 = vmatprep.subr.mxu0 0.0
        %1882 = vmatpush1.msra.mxu0 0.0
        %1883 = vmatprep.subr.mxu0 0.0
        %1884 = vmatpush1.msra.mxu0 0.0
        %1885 = vmatprep.subr.mxu0 0.0
        %1886 = vmatpush1.msra.mxu0 0.0
        %1887 = vmatprep.subr.mxu0 0.0
        %1888 = vmatpush1.msra.mxu0 0.0
        %1889 = vmatprep.subr.mxu0 0.0
        %1890 = vmatpush1.msra.mxu0 0.0
        %1891 = vmatprep.subr.mxu0 0.0
        %1892 = vmatpush1.msra.mxu0 0.0
        %1893 = vmatprep.subr.mxu0 0.0
        %1894 = vmatpush1.msra.mxu0 0.0
        %1895 = vmatprep.subr.mxu0 0.0
        %1896 = vmatpush1.msra.mxu0 0.0
        %1897 = vmatprep.subr.mxu0 0.0
        %1898 = vmatpush1.msra.mxu0 0.0
        %1899 = vmatprep.subr.mxu0 0.0
        %1900 = vmatpush1.msra.mxu0 0.0
        %1901 = vmatprep.subr.mxu0 0.0
        %1902 = vmatpush1.msra.mxu0 0.0
        %1903 = vmatprep.subr.mxu0 0.0
        %1904 = vmatpush1.msra.mxu0 0.0
        %1905 = vmatprep.subr.mxu0 0.0
        %1906 = vmatpush1.msra.mxu0 0.0
        %1907 = vmatprep.subr.mxu0 0.0
        %1908 = vmatpush1.msra.mxu0 0.0
        %1909 = vmatprep.subr.mxu0 0.0
        %1910 = vmatpush1.msra.mxu0 %v1642
        %1911 = vmatprep.subr.mxu0 0.0
        %1912 = vmatpush2.msra.mxu0 0.0
        %1913 = vmatprep.subr.mxu0 0.0
        %1914 = vmatpush2.msra.mxu0 0.0
        %1915 = vmatprep.subr.mxu0 0.0
        %1916 = vmatpush2.msra.mxu0 0.0
        %1917 = vmatprep.subr.mxu0 0.0
        %1918 = vmatpush2.msra.mxu0 0.0
        %1919 = vmatprep.subr.mxu0 0.0
        %1920 = vmatpush2.msra.mxu0 0.0
        %1921 = vmatprep.subr.mxu0 0.0
        %1922 = vmatpush2.msra.mxu0 0.0
        %1923 = vmatprep.subr.mxu0 0.0
        %1924 = vmatpush2.msra.mxu0 0.0
        %1925 = vmatprep.subr.mxu0 0.0
        %1926 = vmatpush2.msra.mxu0 0.0
        %1927 = vmatprep.subr.mxu0 0.0
        %1928 = vmatpush2.msra.mxu0 0.0
        %1929 = vmatprep.subr.mxu0 0.0
        %1930 = vmatpush2.msra.mxu0 0.0
        %1931 = vmatprep.subr.mxu0 0.0
        %1932 = vmatpush2.msra.mxu0 0.0
        %1933 = vmatprep.subr.mxu0 0.0
        %1934 = vmatpush2.msra.mxu0 0.0
        %1935 = vmatprep.subr.mxu0 0.0
        %1936 = vmatpush2.msra.mxu0 0.0
        %1937 = vmatprep.subr.mxu0 0.0
        %1938 = vmatpush2.msra.mxu0 0.0
        %1939 = vmatprep.subr.mxu0 0.0
        %1940 = vmatpush2.msra.mxu0 0.0
        %1941 = vmatprep.subr.mxu0 0.0
        %1942 = vmatpush2.msra.mxu0 0.0
        %1943 = vmatprep.mubr.f32.mxu0 0.0
        %1944 = vmatmul.mubr.f32.gmra.mxu0 %v1877
        %v1945 = vpop.f32.mrf.mxu0
        %v1946 = vadd.f32 0.0, %v1945
        %v1947 = vpop.f32.mrf.mxu0
        %1948 = vdwg.mxu0
        %s1949 = scalar_lea.vmem %s10, 64
        %v1950 = vld [vmem:[%s1949] sm:$0xff]
        %v1951 = vld [vmem:[%s1949 + $0x8] sm:$0xff]
        %v1952 = vld [vmem:[%s1949 + $0x10] sm:$0xff]
        %v1953 = vld [vmem:[%s1949 + $0x18] sm:$0xff]
        %v1955 = vsel %vm864, %v1946, 0
        %1957 = vmatprep.subr.mxu0 0.0
        %1958 = vmatpush1.msra.mxu0 0.0
        %1959 = vmatprep.subr.mxu0 0.0
        %1960 = vmatpush1.msra.mxu0 0.0
        %1961 = vmatprep.subr.mxu0 0.0
        %1962 = vmatpush1.msra.mxu0 0.0
        %1963 = vmatprep.subr.mxu0 0.0
        %1964 = vmatpush1.msra.mxu0 0.0
        %1965 = vmatprep.subr.mxu0 0.0
        %1966 = vmatpush1.msra.mxu0 0.0
        %1967 = vmatprep.subr.mxu0 0.0
        %1968 = vmatpush1.msra.mxu0 0.0
        %1969 = vmatprep.subr.mxu0 0.0
        %1970 = vmatpush1.msra.mxu0 0.0
        %1971 = vmatprep.subr.mxu0 0.0
        %1972 = vmatpush1.msra.mxu0 0.0
        %1973 = vmatprep.subr.mxu0 0.0
        %1974 = vmatpush1.msra.mxu0 0.0
        %1975 = vmatprep.subr.mxu0 0.0
        %1976 = vmatpush1.msra.mxu0 0.0
        %1977 = vmatprep.subr.mxu0 0.0
        %1978 = vmatpush1.msra.mxu0 0.0
        %1979 = vmatprep.subr.mxu0 0.0
        %1980 = vmatpush1.msra.mxu0 0.0
        %1981 = vmatprep.subr.mxu0 0.0
        %1982 = vmatpush1.msra.mxu0 %v1953
        %1983 = vmatprep.subr.mxu0 0.0
        %1984 = vmatpush1.msra.mxu0 %v1952
        %1985 = vmatprep.subr.mxu0 0.0
        %1986 = vmatpush1.msra.mxu0 %v1951
        %1987 = vmatprep.subr.mxu0 0.0
        %1988 = vmatpush1.msra.mxu0 %v1950
        %1989 = vmatprep.subr.mxu0 0.0
        %1990 = vmatpush2.msra.mxu0 0.0
        %1991 = vmatprep.subr.mxu0 0.0
        %1992 = vmatpush2.msra.mxu0 0.0
        %1993 = vmatprep.subr.mxu0 0.0
        %1994 = vmatpush2.msra.mxu0 0.0
        %1995 = vmatprep.subr.mxu0 0.0
        %1996 = vmatpush2.msra.mxu0 0.0
        %1997 = vmatprep.subr.mxu0 0.0
        %1998 = vmatpush2.msra.mxu0 0.0
        %1999 = vmatprep.subr.mxu0 0.0
        %2000 = vmatpush2.msra.mxu0 0.0
        %2001 = vmatprep.subr.mxu0 0.0
        %2002 = vmatpush2.msra.mxu0 0.0
        %2003 = vmatprep.subr.mxu0 0.0
        %2004 = vmatpush2.msra.mxu0 0.0
        %2005 = vmatprep.subr.mxu0 0.0
        %2006 = vmatpush2.msra.mxu0 0.0
        %2007 = vmatprep.subr.mxu0 0.0
        %2008 = vmatpush2.msra.mxu0 0.0
        %2009 = vmatprep.subr.mxu0 0.0
        %2010 = vmatpush2.msra.mxu0 0.0
        %2011 = vmatprep.subr.mxu0 0.0
        %2012 = vmatpush2.msra.mxu0 0.0
        %2013 = vmatprep.subr.mxu0 0.0
        %2014 = vmatpush2.msra.mxu0 0.0
        %2015 = vmatprep.subr.mxu0 0.0
        %2016 = vmatpush2.msra.mxu0 0.0
        %2017 = vmatprep.subr.mxu0 0.0
        %2018 = vmatpush2.msra.mxu0 0.0
        %2019 = vmatprep.subr.mxu0 0.0
        %2020 = vmatpush2.msra.mxu0 0.0
        %2021 = vmatprep.mubr.f32.mxu0 0.0
        %2022 = vmatmul.mubr.f32.gmra.mxu0 %v1955
        %v2023 = vpop.f32.mrf.mxu0
        %v2024 = vadd.f32 0.0, %v2023
        %v2025 = vpop.f32.mrf.mxu0
        %2026 = vdwg.mxu0
        %v2027 = vadd.f32 %v1871, %v2024
        %s2028 = scalar_lea.vmem %s10, 128
        %v2029 = vld [vmem:[%s2028] sm:$0xff]
        %v2030 = vld [vmem:[%s2028 + $0x8] sm:$0xff]
        %v2031 = vld [vmem:[%s2028 + $0x10] sm:$0xff]
        %v2032 = vld [vmem:[%s2028 + $0x18] sm:$0xff]
        %2033 = vmatprep.subr.mxu0 0.0
        %2034 = vmatpush1.msra.mxu0 0.0
        %2035 = vmatprep.subr.mxu0 0.0
        %2036 = vmatpush1.msra.mxu0 0.0
        %2037 = vmatprep.subr.mxu0 0.0
        %2038 = vmatpush1.msra.mxu0 0.0
        %2039 = vmatprep.subr.mxu0 0.0
        %2040 = vmatpush1.msra.mxu0 0.0
        %2041 = vmatprep.subr.mxu0 0.0
        %2042 = vmatpush1.msra.mxu0 0.0
        %2043 = vmatprep.subr.mxu0 0.0
        %2044 = vmatpush1.msra.mxu0 0.0
        %2045 = vmatprep.subr.mxu0 0.0
        %2046 = vmatpush1.msra.mxu0 0.0
        %2047 = vmatprep.subr.mxu0 0.0
        %2048 = vmatpush1.msra.mxu0 0.0
        %2049 = vmatprep.subr.mxu0 0.0
        %2050 = vmatpush1.msra.mxu0 0.0
        %2051 = vmatprep.subr.mxu0 0.0
        %2052 = vmatpush1.msra.mxu0 0.0
        %2053 = vmatprep.subr.mxu0 0.0
        %2054 = vmatpush1.msra.mxu0 0.0
        %2055 = vmatprep.subr.mxu0 0.0
        %2056 = vmatpush1.msra.mxu0 0.0
        %2057 = vmatprep.subr.mxu0 0.0
        %2058 = vmatpush1.msra.mxu0 0.0
        %2059 = vmatprep.subr.mxu0 0.0
        %2060 = vmatpush1.msra.mxu0 0.0
        %2061 = vmatprep.subr.mxu0 0.0
        %2062 = vmatpush1.msra.mxu0 0.0
        %2063 = vmatprep.subr.mxu0 0.0
        %2064 = vmatpush1.msra.mxu0 %v1643
        %2065 = vmatprep.subr.mxu0 0.0
        %2066 = vmatpush2.msra.mxu0 0.0
        %2067 = vmatprep.subr.mxu0 0.0
        %2068 = vmatpush2.msra.mxu0 0.0
        %2069 = vmatprep.subr.mxu0 0.0
        %2070 = vmatpush2.msra.mxu0 0.0
        %2071 = vmatprep.subr.mxu0 0.0
        %2072 = vmatpush2.msra.mxu0 0.0
        %2073 = vmatprep.subr.mxu0 0.0
        %2074 = vmatpush2.msra.mxu0 0.0
        %2075 = vmatprep.subr.mxu0 0.0
        %2076 = vmatpush2.msra.mxu0 0.0
        %2077 = vmatprep.subr.mxu0 0.0
        %2078 = vmatpush2.msra.mxu0 0.0
        %2079 = vmatprep.subr.mxu0 0.0
        %2080 = vmatpush2.msra.mxu0 0.0
        %2081 = vmatprep.subr.mxu0 0.0
        %2082 = vmatpush2.msra.mxu0 0.0
        %2083 = vmatprep.subr.mxu0 0.0
        %2084 = vmatpush2.msra.mxu0 0.0
        %2085 = vmatprep.subr.mxu0 0.0
        %2086 = vmatpush2.msra.mxu0 0.0
        %2087 = vmatprep.subr.mxu0 0.0
        %2088 = vmatpush2.msra.mxu0 0.0
        %2089 = vmatprep.subr.mxu0 0.0
        %2090 = vmatpush2.msra.mxu0 0.0
        %2091 = vmatprep.subr.mxu0 0.0
        %2092 = vmatpush2.msra.mxu0 0.0
        %2093 = vmatprep.subr.mxu0 0.0
        %2094 = vmatpush2.msra.mxu0 0.0
        %2095 = vmatprep.subr.mxu0 0.0
        %2096 = vmatpush2.msra.mxu0 0.0
        %2097 = vmatprep.mubr.f32.mxu0 0.0
        %2098 = vmatmul.mubr.f32.gmra.mxu0 %v1652
        %v2099 = vpop.f32.mrf.mxu0
        %v2100 = vadd.f32 0.0, %v2099
        %v2101 = vpop.f32.mrf.mxu0
        %2102 = vdwg.mxu0
        %s2103 = scalar_lea.vmem %s10, 96
        %v2104 = vld [vmem:[%s2103] sm:$0xff]
        %v2105 = vld [vmem:[%s2103 + $0x8] sm:$0xff]
        %v2106 = vld [vmem:[%s2103 + $0x10] sm:$0xff]
        %v2107 = vld [vmem:[%s2103 + $0x18] sm:$0xff]
        %v2109 = vsel %vm864, %v2100, 0
        %2111 = vmatprep.subr.mxu0 0.0
        %2112 = vmatpush1.msra.mxu0 0.0
        %2113 = vmatprep.subr.mxu0 0.0
        %2114 = vmatpush1.msra.mxu0 0.0
        %2115 = vmatprep.subr.mxu0 0.0
        %2116 = vmatpush1.msra.mxu0 0.0
        %2117 = vmatprep.subr.mxu0 0.0
        %2118 = vmatpush1.msra.mxu0 0.0
        %2119 = vmatprep.subr.mxu0 0.0
        %2120 = vmatpush1.msra.mxu0 0.0
        %2121 = vmatprep.subr.mxu0 0.0
        %2122 = vmatpush1.msra.mxu0 0.0
        %2123 = vmatprep.subr.mxu0 0.0
        %2124 = vmatpush1.msra.mxu0 0.0
        %2125 = vmatprep.subr.mxu0 0.0
        %2126 = vmatpush1.msra.mxu0 0.0
        %2127 = vmatprep.subr.mxu0 0.0
        %2128 = vmatpush1.msra.mxu0 0.0
        %2129 = vmatprep.subr.mxu0 0.0
        %2130 = vmatpush1.msra.mxu0 0.0
        %2131 = vmatprep.subr.mxu0 0.0
        %2132 = vmatpush1.msra.mxu0 0.0
        %2133 = vmatprep.subr.mxu0 0.0
        %2134 = vmatpush1.msra.mxu0 0.0
        %2135 = vmatprep.subr.mxu0 0.0
        %2136 = vmatpush1.msra.mxu0 %v2107
        %2137 = vmatprep.subr.mxu0 0.0
        %2138 = vmatpush1.msra.mxu0 %v2106
        %2139 = vmatprep.subr.mxu0 0.0
        %2140 = vmatpush1.msra.mxu0 %v2105
        %2141 = vmatprep.subr.mxu0 0.0
        %2142 = vmatpush1.msra.mxu0 %v2104
        %2143 = vmatprep.subr.mxu0 0.0
        %2144 = vmatpush2.msra.mxu0 0.0
        %2145 = vmatprep.subr.mxu0 0.0
        %2146 = vmatpush2.msra.mxu0 0.0
        %2147 = vmatprep.subr.mxu0 0.0
        %2148 = vmatpush2.msra.mxu0 0.0
        %2149 = vmatprep.subr.mxu0 0.0
        %2150 = vmatpush2.msra.mxu0 0.0
        %2151 = vmatprep.subr.mxu0 0.0
        %2152 = vmatpush2.msra.mxu0 0.0
        %2153 = vmatprep.subr.mxu0 0.0
        %2154 = vmatpush2.msra.mxu0 0.0
        %2155 = vmatprep.subr.mxu0 0.0
        %2156 = vmatpush2.msra.mxu0 0.0
        %2157 = vmatprep.subr.mxu0 0.0
        %2158 = vmatpush2.msra.mxu0 0.0
        %2159 = vmatprep.subr.mxu0 0.0
        %2160 = vmatpush2.msra.mxu0 0.0
        %2161 = vmatprep.subr.mxu0 0.0
        %2162 = vmatpush2.msra.mxu0 0.0
        %2163 = vmatprep.subr.mxu0 0.0
        %2164 = vmatpush2.msra.mxu0 0.0
        %2165 = vmatprep.subr.mxu0 0.0
        %2166 = vmatpush2.msra.mxu0 0.0
        %2167 = vmatprep.subr.mxu0 0.0
        %2168 = vmatpush2.msra.mxu0 0.0
        %2169 = vmatprep.subr.mxu0 0.0
        %2170 = vmatpush2.msra.mxu0 0.0
        %2171 = vmatprep.subr.mxu0 0.0
        %2172 = vmatpush2.msra.mxu0 0.0
        %2173 = vmatprep.subr.mxu0 0.0
        %2174 = vmatpush2.msra.mxu0 0.0
        %2175 = vmatprep.mubr.f32.mxu0 0.0
        %2176 = vmatmul.mubr.f32.gmra.mxu0 %v2109
        %v2177 = vpop.f32.mrf.mxu0
        %v2178 = vadd.f32 0.0, %v2177
        %v2179 = vpop.f32.mrf.mxu0
        %2180 = vdwg.mxu0
        %v2182 = vsel %vm864, %v1643, 0
        %2184 = vmatprep.subr.mxu0 0.0
        %2185 = vmatpush1.msra.mxu0 0.0
        %2186 = vmatprep.subr.mxu0 0.0
        %2187 = vmatpush1.msra.mxu0 0.0
        %2188 = vmatprep.subr.mxu0 0.0
        %2189 = vmatpush1.msra.mxu0 0.0
        %2190 = vmatprep.subr.mxu0 0.0
        %2191 = vmatpush1.msra.mxu0 0.0
        %2192 = vmatprep.subr.mxu0 0.0
        %2193 = vmatpush1.msra.mxu0 0.0
        %2194 = vmatprep.subr.mxu0 0.0
        %2195 = vmatpush1.msra.mxu0 0.0
        %2196 = vmatprep.subr.mxu0 0.0
        %2197 = vmatpush1.msra.mxu0 0.0
        %2198 = vmatprep.subr.mxu0 0.0
        %2199 = vmatpush1.msra.mxu0 0.0
        %2200 = vmatprep.subr.mxu0 0.0
        %2201 = vmatpush1.msra.mxu0 0.0
        %2202 = vmatprep.subr.mxu0 0.0
        %2203 = vmatpush1.msra.mxu0 0.0
        %2204 = vmatprep.subr.mxu0 0.0
        %2205 = vmatpush1.msra.mxu0 0.0
        %2206 = vmatprep.subr.mxu0 0.0
        %2207 = vmatpush1.msra.mxu0 0.0
        %2208 = vmatprep.subr.mxu0 0.0
        %2209 = vmatpush1.msra.mxu0 %v2032
        %2210 = vmatprep.subr.mxu0 0.0
        %2211 = vmatpush1.msra.mxu0 %v2031
        %2212 = vmatprep.subr.mxu0 0.0
        %2213 = vmatpush1.msra.mxu0 %v2030
        %2214 = vmatprep.subr.mxu0 0.0
        %2215 = vmatpush1.msra.mxu0 %v2029
        %2216 = vmatprep.subr.mxu0 0.0
        %2217 = vmatpush2.msra.mxu0 0.0
        %2218 = vmatprep.subr.mxu0 0.0
        %2219 = vmatpush2.msra.mxu0 0.0
        %2220 = vmatprep.subr.mxu0 0.0
        %2221 = vmatpush2.msra.mxu0 0.0
        %2222 = vmatprep.subr.mxu0 0.0
        %2223 = vmatpush2.msra.mxu0 0.0
        %2224 = vmatprep.subr.mxu0 0.0
        %2225 = vmatpush2.msra.mxu0 0.0
        %2226 = vmatprep.subr.mxu0 0.0
        %2227 = vmatpush2.msra.mxu0 0.0
        %2228 = vmatprep.subr.mxu0 0.0
        %2229 = vmatpush2.msra.mxu0 0.0
        %2230 = vmatprep.subr.mxu0 0.0
        %2231 = vmatpush2.msra.mxu0 0.0
        %2232 = vmatprep.subr.mxu0 0.0
        %2233 = vmatpush2.msra.mxu0 0.0
        %2234 = vmatprep.subr.mxu0 0.0
        %2235 = vmatpush2.msra.mxu0 0.0
        %2236 = vmatprep.subr.mxu0 0.0
        %2237 = vmatpush2.msra.mxu0 0.0
        %2238 = vmatprep.subr.mxu0 0.0
        %2239 = vmatpush2.msra.mxu0 0.0
        %2240 = vmatprep.subr.mxu0 0.0
        %2241 = vmatpush2.msra.mxu0 0.0
        %2242 = vmatprep.subr.mxu0 0.0
        %2243 = vmatpush2.msra.mxu0 0.0
        %2244 = vmatprep.subr.mxu0 0.0
        %2245 = vmatpush2.msra.mxu0 0.0
        %2246 = vmatprep.subr.mxu0 0.0
        %2247 = vmatpush2.msra.mxu0 0.0
        %2248 = vmatprep.mubr.f32.mxu0 0.0
        %2249 = vmatmul.mubr.f32.gmra.mxu0 %v2182
        %v2250 = vpop.f32.mrf.mxu0
        %v2251 = vadd.f32 %v2178, %v2250
        %v2252 = vpop.f32.mrf.mxu0
        %2253 = vdwg.mxu0
        %2254 = vmatprep.subr.mxu0 0.0
        %2255 = vmatpush1.msra.mxu0 0.0
        %2256 = vmatprep.subr.mxu0 0.0
        %2257 = vmatpush1.msra.mxu0 0.0
        %2258 = vmatprep.subr.mxu0 0.0
        %2259 = vmatpush1.msra.mxu0 0.0
        %2260 = vmatprep.subr.mxu0 0.0
        %2261 = vmatpush1.msra.mxu0 0.0
        %2262 = vmatprep.subr.mxu0 0.0
        %2263 = vmatpush1.msra.mxu0 0.0
        %2264 = vmatprep.subr.mxu0 0.0
        %2265 = vmatpush1.msra.mxu0 0.0
        %2266 = vmatprep.subr.mxu0 0.0
        %2267 = vmatpush1.msra.mxu0 0.0
        %2268 = vmatprep.subr.mxu0 0.0
        %2269 = vmatpush1.msra.mxu0 0.0
        %2270 = vmatprep.subr.mxu0 0.0
        %2271 = vmatpush1.msra.mxu0 0.0
        %2272 = vmatprep.subr.mxu0 0.0
        %2273 = vmatpush1.msra.mxu0 0.0
        %2274 = vmatprep.subr.mxu0 0.0
        %2275 = vmatpush1.msra.mxu0 0.0
        %2276 = vmatprep.subr.mxu0 0.0
        %2277 = vmatpush1.msra.mxu0 0.0
        %2278 = vmatprep.subr.mxu0 0.0
        %2279 = vmatpush1.msra.mxu0 0.0
        %2280 = vmatprep.subr.mxu0 0.0
        %2281 = vmatpush1.msra.mxu0 0.0
        %2282 = vmatprep.subr.mxu0 0.0
        %2283 = vmatpush1.msra.mxu0 0.0
        %2284 = vmatprep.subr.mxu0 0.0
        %2285 = vmatpush1.msra.mxu0 %v1643
        %2286 = vmatprep.subr.mxu0 0.0
        %2287 = vmatpush2.msra.mxu0 0.0
        %2288 = vmatprep.subr.mxu0 0.0
        %2289 = vmatpush2.msra.mxu0 0.0
        %2290 = vmatprep.subr.mxu0 0.0
        %2291 = vmatpush2.msra.mxu0 0.0
        %2292 = vmatprep.subr.mxu0 0.0
        %2293 = vmatpush2.msra.mxu0 0.0
        %2294 = vmatprep.subr.mxu0 0.0
        %2295 = vmatpush2.msra.mxu0 0.0
        %2296 = vmatprep.subr.mxu0 0.0
        %2297 = vmatpush2.msra.mxu0 0.0
        %2298 = vmatprep.subr.mxu0 0.0
        %2299 = vmatpush2.msra.mxu0 0.0
        %2300 = vmatprep.subr.mxu0 0.0
        %2301 = vmatpush2.msra.mxu0 0.0
        %2302 = vmatprep.subr.mxu0 0.0
        %2303 = vmatpush2.msra.mxu0 0.0
        %2304 = vmatprep.subr.mxu0 0.0
        %2305 = vmatpush2.msra.mxu0 0.0
        %2306 = vmatprep.subr.mxu0 0.0
        %2307 = vmatpush2.msra.mxu0 0.0
        %2308 = vmatprep.subr.mxu0 0.0
        %2309 = vmatpush2.msra.mxu0 0.0
        %2310 = vmatprep.subr.mxu0 0.0
        %2311 = vmatpush2.msra.mxu0 0.0
        %2312 = vmatprep.subr.mxu0 0.0
        %2313 = vmatpush2.msra.mxu0 0.0
        %2314 = vmatprep.subr.mxu0 0.0
        %2315 = vmatpush2.msra.mxu0 0.0
        %2316 = vmatprep.subr.mxu0 0.0
        %2317 = vmatpush2.msra.mxu0 0.0
        %2318 = vmatprep.mubr.f32.mxu0 0.0
        %2319 = vmatmul.mubr.f32.gmra.mxu0 %v1877
        %v2320 = vpop.f32.mrf.mxu0
        %v2321 = vadd.f32 0.0, %v2320
        %v2322 = vpop.f32.mrf.mxu0
        %2323 = vdwg.mxu0
        %s2324 = scalar_lea.vmem %s10, 160
        %v2325 = vld [vmem:[%s2324] sm:$0xff]
        %v2326 = vld [vmem:[%s2324 + $0x8] sm:$0xff]
        %v2327 = vld [vmem:[%s2324 + $0x10] sm:$0xff]
        %v2328 = vld [vmem:[%s2324 + $0x18] sm:$0xff]
        %v2330 = vsel %vm864, %v2321, 0
        %2332 = vmatprep.subr.mxu0 0.0
        %2333 = vmatpush1.msra.mxu0 0.0
        %2334 = vmatprep.subr.mxu0 0.0
        %2335 = vmatpush1.msra.mxu0 0.0
        %2336 = vmatprep.subr.mxu0 0.0
        %2337 = vmatpush1.msra.mxu0 0.0
        %2338 = vmatprep.subr.mxu0 0.0
        %2339 = vmatpush1.msra.mxu0 0.0
        %2340 = vmatprep.subr.mxu0 0.0
        %2341 = vmatpush1.msra.mxu0 0.0
        %2342 = vmatprep.subr.mxu0 0.0
        %2343 = vmatpush1.msra.mxu0 0.0
        %2344 = vmatprep.subr.mxu0 0.0
        %2345 = vmatpush1.msra.mxu0 0.0
        %2346 = vmatprep.subr.mxu0 0.0
        %2347 = vmatpush1.msra.mxu0 0.0
        %2348 = vmatprep.subr.mxu0 0.0
        %2349 = vmatpush1.msra.mxu0 0.0
        %2350 = vmatprep.subr.mxu0 0.0
        %2351 = vmatpush1.msra.mxu0 0.0
        %2352 = vmatprep.subr.mxu0 0.0
        %2353 = vmatpush1.msra.mxu0 0.0
        %2354 = vmatprep.subr.mxu0 0.0
        %2355 = vmatpush1.msra.mxu0 0.0
        %2356 = vmatprep.subr.mxu0 0.0
        %2357 = vmatpush1.msra.mxu0 %v2328
        %2358 = vmatprep.subr.mxu0 0.0
        %2359 = vmatpush1.msra.mxu0 %v2327
        %2360 = vmatprep.subr.mxu0 0.0
        %2361 = vmatpush1.msra.mxu0 %v2326
        %2362 = vmatprep.subr.mxu0 0.0
        %2363 = vmatpush1.msra.mxu0 %v2325
        %2364 = vmatprep.subr.mxu0 0.0
        %2365 = vmatpush2.msra.mxu0 0.0
        %2366 = vmatprep.subr.mxu0 0.0
        %2367 = vmatpush2.msra.mxu0 0.0
        %2368 = vmatprep.subr.mxu0 0.0
        %2369 = vmatpush2.msra.mxu0 0.0
        %2370 = vmatprep.subr.mxu0 0.0
        %2371 = vmatpush2.msra.mxu0 0.0
        %2372 = vmatprep.subr.mxu0 0.0
        %2373 = vmatpush2.msra.mxu0 0.0
        %2374 = vmatprep.subr.mxu0 0.0
        %2375 = vmatpush2.msra.mxu0 0.0
        %2376 = vmatprep.subr.mxu0 0.0
        %2377 = vmatpush2.msra.mxu0 0.0
        %2378 = vmatprep.subr.mxu0 0.0
        %2379 = vmatpush2.msra.mxu0 0.0
        %2380 = vmatprep.subr.mxu0 0.0
        %2381 = vmatpush2.msra.mxu0 0.0
        %2382 = vmatprep.subr.mxu0 0.0
        %2383 = vmatpush2.msra.mxu0 0.0
        %2384 = vmatprep.subr.mxu0 0.0
        %2385 = vmatpush2.msra.mxu0 0.0
        %2386 = vmatprep.subr.mxu0 0.0
        %2387 = vmatpush2.msra.mxu0 0.0
        %2388 = vmatprep.subr.mxu0 0.0
        %2389 = vmatpush2.msra.mxu0 0.0
        %2390 = vmatprep.subr.mxu0 0.0
        %2391 = vmatpush2.msra.mxu0 0.0
        %2392 = vmatprep.subr.mxu0 0.0
        %2393 = vmatpush2.msra.mxu0 0.0
        %2394 = vmatprep.subr.mxu0 0.0
        %2395 = vmatpush2.msra.mxu0 0.0
        %2396 = vmatprep.mubr.f32.mxu0 0.0
        %2397 = vmatmul.mubr.f32.gmra.mxu0 %v2330
        %v2398 = vpop.f32.mrf.mxu0
        %v2399 = vadd.f32 0.0, %v2398
        %v2400 = vpop.f32.mrf.mxu0
        %2401 = vdwg.mxu0
        %v2402 = vadd.f32 %v2251, %v2399
        %v2403 = vadd.f32 %v2027, %v2402
        %v2404 = vld [vmem:[%s11] sm:$0x1]
        %v2406 = vlaneseq
        %v2407 = vshrl.u32 %v2406, 7
        %v2408 = vsub.s32 0, %v2407
        %v2409 = vrot.slane %v2404, %v2408
        %v2411 = vadd.f32 %v2403, %v2409
        %v2412 = vmax.f32 %v2411, 0.0
        %v2413 = vld [vmem:[%s12] sm:$0xff]
        %v2414 = vld [vmem:[%s12 + $0x8] sm:$0xff]
        %v2416 = vsel %vm1650, %v2413, 0
        %v2419 = vsel %vm1650, %v2414, 0
        %2421 = vmatprep.subr.mxu0 0.0
        %2422 = vmatpush1.msra.mxu0 0.0
        %2423 = vmatprep.subr.mxu0 0.0
        %2424 = vmatpush1.msra.mxu0 0.0
        %2425 = vmatprep.subr.mxu0 0.0
        %2426 = vmatpush1.msra.mxu0 0.0
        %2427 = vmatprep.subr.mxu0 0.0
        %2428 = vmatpush1.msra.mxu0 0.0
        %2429 = vmatprep.subr.mxu0 0.0
        %2430 = vmatpush1.msra.mxu0 0.0
        %2431 = vmatprep.subr.mxu0 0.0
        %2432 = vmatpush1.msra.mxu0 0.0
        %2433 = vmatprep.subr.mxu0 0.0
        %2434 = vmatpush1.msra.mxu0 0.0
        %2435 = vmatprep.subr.mxu0 0.0
        %2436 = vmatpush1.msra.mxu0 0.0
        %2437 = vmatprep.subr.mxu0 0.0
        %2438 = vmatpush1.msra.mxu0 0.0
        %2439 = vmatprep.subr.mxu0 0.0
        %2440 = vmatpush1.msra.mxu0 0.0
        %2441 = vmatprep.subr.mxu0 0.0
        %2442 = vmatpush1.msra.mxu0 0.0
        %2443 = vmatprep.subr.mxu0 0.0
        %2444 = vmatpush1.msra.mxu0 0.0
        %2445 = vmatprep.subr.mxu0 0.0
        %2446 = vmatpush1.msra.mxu0 0.0
        %2447 = vmatprep.subr.mxu0 0.0
        %2448 = vmatpush1.msra.mxu0 0.0
        %2449 = vmatprep.subr.mxu0 0.0
        %2450 = vmatpush1.msra.mxu0 0.0
        %2451 = vmatprep.subr.mxu0 0.0
        %2452 = vmatpush1.msra.mxu0 %v2412
        %2453 = vmatprep.subr.mxu0 0.0
        %2454 = vmatpush2.msra.mxu0 0.0
        %2455 = vmatprep.subr.mxu0 0.0
        %2456 = vmatpush2.msra.mxu0 0.0
        %2457 = vmatprep.subr.mxu0 0.0
        %2458 = vmatpush2.msra.mxu0 0.0
        %2459 = vmatprep.subr.mxu0 0.0
        %2460 = vmatpush2.msra.mxu0 0.0
        %2461 = vmatprep.subr.mxu0 0.0
        %2462 = vmatpush2.msra.mxu0 0.0
        %2463 = vmatprep.subr.mxu0 0.0
        %2464 = vmatpush2.msra.mxu0 0.0
        %2465 = vmatprep.subr.mxu0 0.0
        %2466 = vmatpush2.msra.mxu0 0.0
        %2467 = vmatprep.subr.mxu0 0.0
        %2468 = vmatpush2.msra.mxu0 0.0
        %2469 = vmatprep.subr.mxu0 0.0
        %2470 = vmatpush2.msra.mxu0 0.0
        %2471 = vmatprep.subr.mxu0 0.0
        %2472 = vmatpush2.msra.mxu0 0.0
        %2473 = vmatprep.subr.mxu0 0.0
        %2474 = vmatpush2.msra.mxu0 0.0
        %2475 = vmatprep.subr.mxu0 0.0
        %2476 = vmatpush2.msra.mxu0 0.0
        %2477 = vmatprep.subr.mxu0 0.0
        %2478 = vmatpush2.msra.mxu0 0.0
        %2479 = vmatprep.subr.mxu0 0.0
        %2480 = vmatpush2.msra.mxu0 0.0
        %2481 = vmatprep.subr.mxu0 0.0
        %2482 = vmatpush2.msra.mxu0 0.0
        %2483 = vmatprep.subr.mxu0 0.0
        %2484 = vmatpush2.msra.mxu0 0.0
        %2485 = vmatprep.mubr.f32.mxu0 0.0
        %2486 = vmatmul.mubr.f32.gmra.mxu0 %v2416
        %v2487 = vpop.f32.mrf.mxu0
        %v2488 = vadd.f32 0.0, %v2487
        %v2489 = vpop.f32.mrf.mxu0
        %2490 = vmatprep.mubr.f32.mxu0 0.0
        %2491 = vmatmul.mubr.f32.gmra.mxu0 %v2419
        %v2492 = vpop.f32.mrf.mxu0
        %v2493 = vadd.f32 0.0, %v2492
        %v2494 = vpop.f32.mrf.mxu0
        %2495 = vdwg.mxu0
        %v2496 = vld [vmem:[%s13] sm:$0xff]
        %v2497 = vld [vmem:[%s13 + $0x8] sm:$0xff]
        %v2498 = vld [vmem:[%s13 + $0x10] sm:$0xff]
        %v2499 = vld [vmem:[%s13 + $0x18] sm:$0xff]
        %s2500 = scalar_lea.vmem %s12, 16
        %v2501 = vld [vmem:[%s2500] sm:$0xff]
        %v2502 = vld [vmem:[%s2500 + $0x8] sm:$0xff]
        %v2504 = vsel %vm1650, %v2501, 0
        %v2507 = vsel %vm1650, %v2502, 0
        %2509 = vmatprep.subr.mxu0 0.0
        %2510 = vmatpush1.msra.mxu0 0.0
        %2511 = vmatprep.subr.mxu0 0.0
        %2512 = vmatpush1.msra.mxu0 0.0
        %2513 = vmatprep.subr.mxu0 0.0
        %2514 = vmatpush1.msra.mxu0 0.0
        %2515 = vmatprep.subr.mxu0 0.0
        %2516 = vmatpush1.msra.mxu0 0.0
        %2517 = vmatprep.subr.mxu0 0.0
        %2518 = vmatpush1.msra.mxu0 0.0
        %2519 = vmatprep.subr.mxu0 0.0
        %2520 = vmatpush1.msra.mxu0 0.0
        %2521 = vmatprep.subr.mxu0 0.0
        %2522 = vmatpush1.msra.mxu0 0.0
        %2523 = vmatprep.subr.mxu0 0.0
        %2524 = vmatpush1.msra.mxu0 0.0
        %2525 = vmatprep.subr.mxu0 0.0
        %2526 = vmatpush1.msra.mxu0 0.0
        %2527 = vmatprep.subr.mxu0 0.0
        %2528 = vmatpush1.msra.mxu0 0.0
        %2529 = vmatprep.subr.mxu0 0.0
        %2530 = vmatpush1.msra.mxu0 0.0
        %2531 = vmatprep.subr.mxu0 0.0
        %2532 = vmatpush1.msra.mxu0 0.0
        %2533 = vmatprep.subr.mxu0 0.0
        %2534 = vmatpush1.msra.mxu0 0.0
        %2535 = vmatprep.subr.mxu0 0.0
        %2536 = vmatpush1.msra.mxu0 0.0
        %2537 = vmatprep.subr.mxu0 0.0
        %2538 = vmatpush1.msra.mxu0 0.0
        %2539 = vmatprep.subr.mxu0 0.0
        %2540 = vmatpush1.msra.mxu0 %v2412
        %2541 = vmatprep.subr.mxu0 0.0
        %2542 = vmatpush2.msra.mxu0 0.0
        %2543 = vmatprep.subr.mxu0 0.0
        %2544 = vmatpush2.msra.mxu0 0.0
        %2545 = vmatprep.subr.mxu0 0.0
        %2546 = vmatpush2.msra.mxu0 0.0
        %2547 = vmatprep.subr.mxu0 0.0
        %2548 = vmatpush2.msra.mxu0 0.0
        %2549 = vmatprep.subr.mxu0 0.0
        %2550 = vmatpush2.msra.mxu0 0.0
        %2551 = vmatprep.subr.mxu0 0.0
        %2552 = vmatpush2.msra.mxu0 0.0
        %2553 = vmatprep.subr.mxu0 0.0
        %2554 = vmatpush2.msra.mxu0 0.0
        %2555 = vmatprep.subr.mxu0 0.0
        %2556 = vmatpush2.msra.mxu0 0.0
        %2557 = vmatprep.subr.mxu0 0.0
        %2558 = vmatpush2.msra.mxu0 0.0
        %2559 = vmatprep.subr.mxu0 0.0
        %2560 = vmatpush2.msra.mxu0 0.0
        %2561 = vmatprep.subr.mxu0 0.0
        %2562 = vmatpush2.msra.mxu0 0.0
        %2563 = vmatprep.subr.mxu0 0.0
        %2564 = vmatpush2.msra.mxu0 0.0
        %2565 = vmatprep.subr.mxu0 0.0
        %2566 = vmatpush2.msra.mxu0 0.0
        %2567 = vmatprep.subr.mxu0 0.0
        %2568 = vmatpush2.msra.mxu0 0.0
        %2569 = vmatprep.subr.mxu0 0.0
        %2570 = vmatpush2.msra.mxu0 0.0
        %2571 = vmatprep.subr.mxu0 0.0
        %2572 = vmatpush2.msra.mxu0 0.0
        %2573 = vmatprep.mubr.f32.mxu0 0.0
        %2574 = vmatmul.mubr.f32.gmra.mxu0 %v2504
        %v2575 = vpop.f32.mrf.mxu0
        %v2576 = vadd.f32 0.0, %v2575
        %v2577 = vpop.f32.mrf.mxu0
        %2578 = vmatprep.mubr.f32.mxu0 0.0
        %2579 = vmatmul.mubr.f32.gmra.mxu0 %v2507
        %v2580 = vpop.f32.mrf.mxu0
        %v2581 = vadd.f32 0.0, %v2580
        %v2582 = vpop.f32.mrf.mxu0
        %2583 = vdwg.mxu0
        %s2584 = scalar_lea.vmem %s13, 32
        %v2585 = vld [vmem:[%s2584] sm:$0xff]
        %v2586 = vld [vmem:[%s2584 + $0x8] sm:$0xff]
        %v2587 = vld [vmem:[%s2584 + $0x10] sm:$0xff]
        %v2588 = vld [vmem:[%s2584 + $0x18] sm:$0xff]
        %v2590 = vsel %vm864, %v2576, 0
        %v2593 = vsel %vm864, %v2581, 0
        %2595 = vmatprep.subr.mxu0 0.0
        %2596 = vmatpush1.msra.mxu0 0.0
        %2597 = vmatprep.subr.mxu0 0.0
        %2598 = vmatpush1.msra.mxu0 0.0
        %2599 = vmatprep.subr.mxu0 0.0
        %2600 = vmatpush1.msra.mxu0 0.0
        %2601 = vmatprep.subr.mxu0 0.0
        %2602 = vmatpush1.msra.mxu0 0.0
        %2603 = vmatprep.subr.mxu0 0.0
        %2604 = vmatpush1.msra.mxu0 0.0
        %2605 = vmatprep.subr.mxu0 0.0
        %2606 = vmatpush1.msra.mxu0 0.0
        %2607 = vmatprep.subr.mxu0 0.0
        %2608 = vmatpush1.msra.mxu0 0.0
        %2609 = vmatprep.subr.mxu0 0.0
        %2610 = vmatpush1.msra.mxu0 0.0
        %2611 = vmatprep.subr.mxu0 0.0
        %2612 = vmatpush1.msra.mxu0 0.0
        %2613 = vmatprep.subr.mxu0 0.0
        %2614 = vmatpush1.msra.mxu0 0.0
        %2615 = vmatprep.subr.mxu0 0.0
        %2616 = vmatpush1.msra.mxu0 0.0
        %2617 = vmatprep.subr.mxu0 0.0
        %2618 = vmatpush1.msra.mxu0 0.0
        %2619 = vmatprep.subr.mxu0 0.0
        %2620 = vmatpush1.msra.mxu0 %v2588
        %2621 = vmatprep.subr.mxu0 0.0
        %2622 = vmatpush1.msra.mxu0 %v2587
        %2623 = vmatprep.subr.mxu0 0.0
        %2624 = vmatpush1.msra.mxu0 %v2586
        %2625 = vmatprep.subr.mxu0 0.0
        %2626 = vmatpush1.msra.mxu0 %v2585
        %2627 = vmatprep.subr.mxu0 0.0
        %2628 = vmatpush2.msra.mxu0 0.0
        %2629 = vmatprep.subr.mxu0 0.0
        %2630 = vmatpush2.msra.mxu0 0.0
        %2631 = vmatprep.subr.mxu0 0.0
        %2632 = vmatpush2.msra.mxu0 0.0
        %2633 = vmatprep.subr.mxu0 0.0
        %2634 = vmatpush2.msra.mxu0 0.0
        %2635 = vmatprep.subr.mxu0 0.0
        %2636 = vmatpush2.msra.mxu0 0.0
        %2637 = vmatprep.subr.mxu0 0.0
        %2638 = vmatpush2.msra.mxu0 0.0
        %2639 = vmatprep.subr.mxu0 0.0
        %2640 = vmatpush2.msra.mxu0 0.0
        %2641 = vmatprep.subr.mxu0 0.0
        %2642 = vmatpush2.msra.mxu0 0.0
        %2643 = vmatprep.subr.mxu0 0.0
        %2644 = vmatpush2.msra.mxu0 0.0
        %2645 = vmatprep.subr.mxu0 0.0
        %2646 = vmatpush2.msra.mxu0 0.0
        %2647 = vmatprep.subr.mxu0 0.0
        %2648 = vmatpush2.msra.mxu0 0.0
        %2649 = vmatprep.subr.mxu0 0.0
        %2650 = vmatpush2.msra.mxu0 0.0
        %2651 = vmatprep.subr.mxu0 0.0
        %2652 = vmatpush2.msra.mxu0 0.0
        %2653 = vmatprep.subr.mxu0 0.0
        %2654 = vmatpush2.msra.mxu0 0.0
        %2655 = vmatprep.subr.mxu0 0.0
        %2656 = vmatpush2.msra.mxu0 0.0
        %2657 = vmatprep.subr.mxu0 0.0
        %2658 = vmatpush2.msra.mxu0 0.0
        %2659 = vmatprep.mubr.f32.mxu0 0.0
        %2660 = vmatmul.mubr.f32.gmra.mxu0 %v2590
        %v2661 = vpop.f32.mrf.mxu0
        %v2662 = vadd.f32 0.0, %v2661
        %v2663 = vpop.f32.mrf.mxu0
        %2664 = vmatprep.mubr.f32.mxu0 0.0
        %2665 = vmatmul.mubr.f32.gmra.mxu0 %v2593
        %v2666 = vpop.f32.mrf.mxu0
        %v2667 = vadd.f32 0.0, %v2666
        %v2668 = vpop.f32.mrf.mxu0
        %2669 = vdwg.mxu0
        %v2671 = vsel %vm864, %v2488, 0
        %v2674 = vsel %vm864, %v2493, 0
        %2676 = vmatprep.subr.mxu0 0.0
        %2677 = vmatpush1.msra.mxu0 0.0
        %2678 = vmatprep.subr.mxu0 0.0
        %2679 = vmatpush1.msra.mxu0 0.0
        %2680 = vmatprep.subr.mxu0 0.0
        %2681 = vmatpush1.msra.mxu0 0.0
        %2682 = vmatprep.subr.mxu0 0.0
        %2683 = vmatpush1.msra.mxu0 0.0
        %2684 = vmatprep.subr.mxu0 0.0
        %2685 = vmatpush1.msra.mxu0 0.0
        %2686 = vmatprep.subr.mxu0 0.0
        %2687 = vmatpush1.msra.mxu0 0.0
        %2688 = vmatprep.subr.mxu0 0.0
        %2689 = vmatpush1.msra.mxu0 0.0
        %2690 = vmatprep.subr.mxu0 0.0
        %2691 = vmatpush1.msra.mxu0 0.0
        %2692 = vmatprep.subr.mxu0 0.0
        %2693 = vmatpush1.msra.mxu0 0.0
        %2694 = vmatprep.subr.mxu0 0.0
        %2695 = vmatpush1.msra.mxu0 0.0
        %2696 = vmatprep.subr.mxu0 0.0
        %2697 = vmatpush1.msra.mxu0 0.0
        %2698 = vmatprep.subr.mxu0 0.0
        %2699 = vmatpush1.msra.mxu0 0.0
        %2700 = vmatprep.subr.mxu0 0.0
        %2701 = vmatpush1.msra.mxu0 %v2499
        %2702 = vmatprep.subr.mxu0 0.0
        %2703 = vmatpush1.msra.mxu0 %v2498
        %2704 = vmatprep.subr.mxu0 0.0
        %2705 = vmatpush1.msra.mxu0 %v2497
        %2706 = vmatprep.subr.mxu0 0.0
        %2707 = vmatpush1.msra.mxu0 %v2496
        %2708 = vmatprep.subr.mxu0 0.0
        %2709 = vmatpush2.msra.mxu0 0.0
        %2710 = vmatprep.subr.mxu0 0.0
        %2711 = vmatpush2.msra.mxu0 0.0
        %2712 = vmatprep.subr.mxu0 0.0
        %2713 = vmatpush2.msra.mxu0 0.0
        %2714 = vmatprep.subr.mxu0 0.0
        %2715 = vmatpush2.msra.mxu0 0.0
        %2716 = vmatprep.subr.mxu0 0.0
        %2717 = vmatpush2.msra.mxu0 0.0
        %2718 = vmatprep.subr.mxu0 0.0
        %2719 = vmatpush2.msra.mxu0 0.0
        %2720 = vmatprep.subr.mxu0 0.0
        %2721 = vmatpush2.msra.mxu0 0.0
        %2722 = vmatprep.subr.mxu0 0.0
        %2723 = vmatpush2.msra.mxu0 0.0
        %2724 = vmatprep.subr.mxu0 0.0
        %2725 = vmatpush2.msra.mxu0 0.0
        %2726 = vmatprep.subr.mxu0 0.0
        %2727 = vmatpush2.msra.mxu0 0.0
        %2728 = vmatprep.subr.mxu0 0.0
        %2729 = vmatpush2.msra.mxu0 0.0
        %2730 = vmatprep.subr.mxu0 0.0
        %2731 = vmatpush2.msra.mxu0 0.0
        %2732 = vmatprep.subr.mxu0 0.0
        %2733 = vmatpush2.msra.mxu0 0.0
        %2734 = vmatprep.subr.mxu0 0.0
        %2735 = vmatpush2.msra.mxu0 0.0
        %2736 = vmatprep.subr.mxu0 0.0
        %2737 = vmatpush2.msra.mxu0 0.0
        %2738 = vmatprep.subr.mxu0 0.0
        %2739 = vmatpush2.msra.mxu0 0.0
        %2740 = vmatprep.mubr.f32.mxu0 0.0
        %2741 = vmatmul.mubr.f32.gmra.mxu0 %v2671
        %v2742 = vpop.f32.mrf.mxu0
        %v2743 = vadd.f32 %v2662, %v2742
        %v2744 = vpop.f32.mrf.mxu0
        %2745 = vmatprep.mubr.f32.mxu0 0.0
        %2746 = vmatmul.mubr.f32.gmra.mxu0 %v2674
        %v2747 = vpop.f32.mrf.mxu0
        %v2748 = vadd.f32 %v2667, %v2747
        %v2749 = vpop.f32.mrf.mxu0
        %2750 = vdwg.mxu0
        %s2751 = scalar_lea.vmem %s12, 32
        %v2752 = vld [vmem:[%s2751] sm:$0xff]
        %v2753 = vld [vmem:[%s2751 + $0x8] sm:$0xff]
        %v2755 = vsel %vm1650, %v2752, 0
        %v2758 = vsel %vm1650, %v2753, 0
        %2760 = vmatprep.subr.mxu0 0.0
        %2761 = vmatpush1.msra.mxu0 0.0
        %2762 = vmatprep.subr.mxu0 0.0
        %2763 = vmatpush1.msra.mxu0 0.0
        %2764 = vmatprep.subr.mxu0 0.0
        %2765 = vmatpush1.msra.mxu0 0.0
        %2766 = vmatprep.subr.mxu0 0.0
        %2767 = vmatpush1.msra.mxu0 0.0
        %2768 = vmatprep.subr.mxu0 0.0
        %2769 = vmatpush1.msra.mxu0 0.0
        %2770 = vmatprep.subr.mxu0 0.0
        %2771 = vmatpush1.msra.mxu0 0.0
        %2772 = vmatprep.subr.mxu0 0.0
        %2773 = vmatpush1.msra.mxu0 0.0
        %2774 = vmatprep.subr.mxu0 0.0
        %2775 = vmatpush1.msra.mxu0 0.0
        %2776 = vmatprep.subr.mxu0 0.0
        %2777 = vmatpush1.msra.mxu0 0.0
        %2778 = vmatprep.subr.mxu0 0.0
        %2779 = vmatpush1.msra.mxu0 0.0
        %2780 = vmatprep.subr.mxu0 0.0
        %2781 = vmatpush1.msra.mxu0 0.0
        %2782 = vmatprep.subr.mxu0 0.0
        %2783 = vmatpush1.msra.mxu0 0.0
        %2784 = vmatprep.subr.mxu0 0.0
        %2785 = vmatpush1.msra.mxu0 0.0
        %2786 = vmatprep.subr.mxu0 0.0
        %2787 = vmatpush1.msra.mxu0 0.0
        %2788 = vmatprep.subr.mxu0 0.0
        %2789 = vmatpush1.msra.mxu0 0.0
        %2790 = vmatprep.subr.mxu0 0.0
        %2791 = vmatpush1.msra.mxu0 %v2412
        %2792 = vmatprep.subr.mxu0 0.0
        %2793 = vmatpush2.msra.mxu0 0.0
        %2794 = vmatprep.subr.mxu0 0.0
        %2795 = vmatpush2.msra.mxu0 0.0
        %2796 = vmatprep.subr.mxu0 0.0
        %2797 = vmatpush2.msra.mxu0 0.0
        %2798 = vmatprep.subr.mxu0 0.0
        %2799 = vmatpush2.msra.mxu0 0.0
        %2800 = vmatprep.subr.mxu0 0.0
        %2801 = vmatpush2.msra.mxu0 0.0
        %2802 = vmatprep.subr.mxu0 0.0
        %2803 = vmatpush2.msra.mxu0 0.0
        %2804 = vmatprep.subr.mxu0 0.0
        %2805 = vmatpush2.msra.mxu0 0.0
        %2806 = vmatprep.subr.mxu0 0.0
        %2807 = vmatpush2.msra.mxu0 0.0
        %2808 = vmatprep.subr.mxu0 0.0
        %2809 = vmatpush2.msra.mxu0 0.0
        %2810 = vmatprep.subr.mxu0 0.0
        %2811 = vmatpush2.msra.mxu0 0.0
        %2812 = vmatprep.subr.mxu0 0.0
        %2813 = vmatpush2.msra.mxu0 0.0
        %2814 = vmatprep.subr.mxu0 0.0
        %2815 = vmatpush2.msra.mxu0 0.0
        %2816 = vmatprep.subr.mxu0 0.0
        %2817 = vmatpush2.msra.mxu0 0.0
        %2818 = vmatprep.subr.mxu0 0.0
        %2819 = vmatpush2.msra.mxu0 0.0
        %2820 = vmatprep.subr.mxu0 0.0
        %2821 = vmatpush2.msra.mxu0 0.0
        %2822 = vmatprep.subr.mxu0 0.0
        %2823 = vmatpush2.msra.mxu0 0.0
        %2824 = vmatprep.mubr.f32.mxu0 0.0
        %2825 = vmatmul.mubr.f32.gmra.mxu0 %v2755
        %v2826 = vpop.f32.mrf.mxu0
        %v2827 = vadd.f32 0.0, %v2826
        %v2828 = vpop.f32.mrf.mxu0
        %2829 = vmatprep.mubr.f32.mxu0 0.0
        %2830 = vmatmul.mubr.f32.gmra.mxu0 %v2758
        %v2831 = vpop.f32.mrf.mxu0
        %v2832 = vadd.f32 0.0, %v2831
        %v2833 = vpop.f32.mrf.mxu0
        %2834 = vdwg.mxu0
        %s2835 = scalar_lea.vmem %s13, 64
        %v2836 = vld [vmem:[%s2835] sm:$0xff]
        %v2837 = vld [vmem:[%s2835 + $0x8] sm:$0xff]
        %v2838 = vld [vmem:[%s2835 + $0x10] sm:$0xff]
        %v2839 = vld [vmem:[%s2835 + $0x18] sm:$0xff]
        %v2841 = vsel %vm864, %v2827, 0
        %v2844 = vsel %vm864, %v2832, 0
        %2846 = vmatprep.subr.mxu0 0.0
        %2847 = vmatpush1.msra.mxu0 0.0
        %2848 = vmatprep.subr.mxu0 0.0
        %2849 = vmatpush1.msra.mxu0 0.0
        %2850 = vmatprep.subr.mxu0 0.0
        %2851 = vmatpush1.msra.mxu0 0.0
        %2852 = vmatprep.subr.mxu0 0.0
        %2853 = vmatpush1.msra.mxu0 0.0
        %2854 = vmatprep.subr.mxu0 0.0
        %2855 = vmatpush1.msra.mxu0 0.0
        %2856 = vmatprep.subr.mxu0 0.0
        %2857 = vmatpush1.msra.mxu0 0.0
        %2858 = vmatprep.subr.mxu0 0.0
        %2859 = vmatpush1.msra.mxu0 0.0
        %2860 = vmatprep.subr.mxu0 0.0
        %2861 = vmatpush1.msra.mxu0 0.0
        %2862 = vmatprep.subr.mxu0 0.0
        %2863 = vmatpush1.msra.mxu0 0.0
        %2864 = vmatprep.subr.mxu0 0.0
        %2865 = vmatpush1.msra.mxu0 0.0
        %2866 = vmatprep.subr.mxu0 0.0
        %2867 = vmatpush1.msra.mxu0 0.0
        %2868 = vmatprep.subr.mxu0 0.0
        %2869 = vmatpush1.msra.mxu0 0.0
        %2870 = vmatprep.subr.mxu0 0.0
        %2871 = vmatpush1.msra.mxu0 %v2839
        %2872 = vmatprep.subr.mxu0 0.0
        %2873 = vmatpush1.msra.mxu0 %v2838
        %2874 = vmatprep.subr.mxu0 0.0
        %2875 = vmatpush1.msra.mxu0 %v2837
        %2876 = vmatprep.subr.mxu0 0.0
        %2877 = vmatpush1.msra.mxu0 %v2836
        %2878 = vmatprep.subr.mxu0 0.0
        %2879 = vmatpush2.msra.mxu0 0.0
        %2880 = vmatprep.subr.mxu0 0.0
        %2881 = vmatpush2.msra.mxu0 0.0
        %2882 = vmatprep.subr.mxu0 0.0
        %2883 = vmatpush2.msra.mxu0 0.0
        %2884 = vmatprep.subr.mxu0 0.0
        %2885 = vmatpush2.msra.mxu0 0.0
        %2886 = vmatprep.subr.mxu0 0.0
        %2887 = vmatpush2.msra.mxu0 0.0
        %2888 = vmatprep.subr.mxu0 0.0
        %2889 = vmatpush2.msra.mxu0 0.0
        %2890 = vmatprep.subr.mxu0 0.0
        %2891 = vmatpush2.msra.mxu0 0.0
        %2892 = vmatprep.subr.mxu0 0.0
        %2893 = vmatpush2.msra.mxu0 0.0
        %2894 = vmatprep.subr.mxu0 0.0
        %2895 = vmatpush2.msra.mxu0 0.0
        %2896 = vmatprep.subr.mxu0 0.0
        %2897 = vmatpush2.msra.mxu0 0.0
        %2898 = vmatprep.subr.mxu0 0.0
        %2899 = vmatpush2.msra.mxu0 0.0
        %2900 = vmatprep.subr.mxu0 0.0
        %2901 = vmatpush2.msra.mxu0 0.0
        %2902 = vmatprep.subr.mxu0 0.0
        %2903 = vmatpush2.msra.mxu0 0.0
        %2904 = vmatprep.subr.mxu0 0.0
        %2905 = vmatpush2.msra.mxu0 0.0
        %2906 = vmatprep.subr.mxu0 0.0
        %2907 = vmatpush2.msra.mxu0 0.0
        %2908 = vmatprep.subr.mxu0 0.0
        %2909 = vmatpush2.msra.mxu0 0.0
        %2910 = vmatprep.mubr.f32.mxu0 0.0
        %2911 = vmatmul.mubr.f32.gmra.mxu0 %v2841
        %v2912 = vpop.f32.mrf.mxu0
        %v2913 = vadd.f32 0.0, %v2912
        %v2914 = vpop.f32.mrf.mxu0
        %2915 = vmatprep.mubr.f32.mxu0 0.0
        %2916 = vmatmul.mubr.f32.gmra.mxu0 %v2844
        %v2917 = vpop.f32.mrf.mxu0
        %v2918 = vadd.f32 0.0, %v2917
        %v2919 = vpop.f32.mrf.mxu0
        %2920 = vdwg.mxu0
        %v2921 = vadd.f32 %v2743, %v2913
        %v2922 = vadd.f32 %v2748, %v2918
        %v2923 = vld [vmem:[%s14] sm:$0x1]
        %v2925 = vlaneseq
        %v2926 = vshrl.u32 %v2925, 7
        %v2927 = vsub.s32 0, %v2926
        %v2928 = vrot.slane %v2923, %v2927
        %v2930 = vadd.f32 %v2921, %v2928
        %v2931 = vadd.f32 %v2922, %v2928
        %v2932 = vmax.f32 %v2930, 0.0
        %v2933 = vmax.f32 %v2931, 0.0
        %v2934 = vld [vmem:[%s761] sm:$0xff]
        %v2935 = vld [vmem:[%s761 + $0x8] sm:$0xff]
        %s2936 = scalar_lea.vmem %s16, 48
        %v2937 = vld [vmem:[%s2936] sm:$0xff]
        %v2938 = vld [vmem:[%s2936 + $0x8] sm:$0xff]
        %v2939 = vld [vmem:[%s2936 + $0x10] sm:$0xff]
        %v2940 = vld [vmem:[%s2936 + $0x18] sm:$0xff]
        %v2941 = vld [vmem:[%s2936 + $0x20] sm:$0xff]
        %v2942 = vld [vmem:[%s2936 + $0x28] sm:$0xff]
        %v2943 = vld [vmem:[%s15] sm:$0xff]
        %v2944 = vld [vmem:[%s15 + $0x8] sm:$0xff]
        %vm2945 = vcmask 130048
        %v2947 = vsel %vm2945, %v2943, 0
        %v2950 = vsel %vm2945, %v2944, 0
        %2952 = vmatprep.subr.mxu0 0.0
        %2953 = vmatpush1.msra.mxu0 0.0
        %2954 = vmatprep.subr.mxu0 0.0
        %2955 = vmatpush1.msra.mxu0 0.0
        %2956 = vmatprep.subr.mxu0 0.0
        %2957 = vmatpush1.msra.mxu0 0.0
        %2958 = vmatprep.subr.mxu0 0.0
        %2959 = vmatpush1.msra.mxu0 0.0
        %2960 = vmatprep.subr.mxu0 0.0
        %2961 = vmatpush1.msra.mxu0 0.0
        %2962 = vmatprep.subr.mxu0 0.0
        %2963 = vmatpush1.msra.mxu0 0.0
        %2964 = vmatprep.subr.mxu0 0.0
        %2965 = vmatpush1.msra.mxu0 0.0
        %2966 = vmatprep.subr.mxu0 0.0
        %2967 = vmatpush1.msra.mxu0 0.0
        %2968 = vmatprep.subr.mxu0 0.0
        %2969 = vmatpush1.msra.mxu0 0.0
        %2970 = vmatprep.subr.mxu0 0.0
        %2971 = vmatpush1.msra.mxu0 0.0
        %2972 = vmatprep.subr.mxu0 0.0
        %2973 = vmatpush1.msra.mxu0 0.0
        %2974 = vmatprep.subr.mxu0 0.0
        %2975 = vmatpush1.msra.mxu0 0.0
        %2976 = vmatprep.subr.mxu0 0.0
        %2977 = vmatpush1.msra.mxu0 0.0
        %2978 = vmatprep.subr.mxu0 0.0
        %2979 = vmatpush1.msra.mxu0 0.0
        %2980 = vmatprep.subr.mxu0 0.0
        %2981 = vmatpush1.msra.mxu0 %v2935
        %2982 = vmatprep.subr.mxu0 0.0
        %2983 = vmatpush1.msra.mxu0 %v2934
        %2984 = vmatprep.subr.mxu0 0.0
        %2985 = vmatpush2.msra.mxu0 0.0
        %2986 = vmatprep.subr.mxu0 0.0
        %2987 = vmatpush2.msra.mxu0 0.0
        %2988 = vmatprep.subr.mxu0 0.0
        %2989 = vmatpush2.msra.mxu0 0.0
        %2990 = vmatprep.subr.mxu0 0.0
        %2991 = vmatpush2.msra.mxu0 0.0
        %2992 = vmatprep.subr.mxu0 0.0
        %2993 = vmatpush2.msra.mxu0 0.0
        %2994 = vmatprep.subr.mxu0 0.0
        %2995 = vmatpush2.msra.mxu0 0.0
        %2996 = vmatprep.subr.mxu0 0.0
        %2997 = vmatpush2.msra.mxu0 0.0
        %2998 = vmatprep.subr.mxu0 0.0
        %2999 = vmatpush2.msra.mxu0 0.0
        %3000 = vmatprep.subr.mxu0 0.0
        %3001 = vmatpush2.msra.mxu0 0.0
        %3002 = vmatprep.subr.mxu0 0.0
        %3003 = vmatpush2.msra.mxu0 0.0
        %3004 = vmatprep.subr.mxu0 0.0
        %3005 = vmatpush2.msra.mxu0 0.0
        %3006 = vmatprep.subr.mxu0 0.0
        %3007 = vmatpush2.msra.mxu0 0.0
        %3008 = vmatprep.subr.mxu0 0.0
        %3009 = vmatpush2.msra.mxu0 0.0
        %3010 = vmatprep.subr.mxu0 0.0
        %3011 = vmatpush2.msra.mxu0 0.0
        %3012 = vmatprep.subr.mxu0 0.0
        %3013 = vmatpush2.msra.mxu0 0.0
        %3014 = vmatprep.subr.mxu0 0.0
        %3015 = vmatpush2.msra.mxu0 0.0
        %3016 = vmatprep.mubr.f32.mxu0 0.0
        %3017 = vmatmul.mubr.f32.gmra.mxu0 %v2947
        %v3018 = vpop.f32.mrf.mxu0
        %v3019 = vadd.f32 0.0, %v3018
        %v3020 = vpop.f32.mrf.mxu0
        %3021 = vmatprep.mubr.f32.mxu0 0.0
        %3022 = vmatmul.mubr.f32.gmra.mxu0 %v2950
        %v3023 = vpop.f32.mrf.mxu0
        %v3024 = vadd.f32 0.0, %v3023
        %v3025 = vpop.f32.mrf.mxu0
        %3026 = vdwg.mxu0
        %v3027 = vld [vmem:[%s16] sm:$0xff]
        %v3028 = vld [vmem:[%s16 + $0x8] sm:$0xff]
        %v3029 = vld [vmem:[%s16 + $0x10] sm:$0xff]
        %v3030 = vld [vmem:[%s16 + $0x18] sm:$0xff]
        %v3031 = vld [vmem:[%s16 + $0x20] sm:$0xff]
        %v3032 = vld [vmem:[%s16 + $0x28] sm:$0xff]
        %vm3033 = vcmask 392192
        %v3035 = vsel %vm3033, %v3019, 0
        %v3038 = vsel %vm3033, %v3024, 0
        %3040 = vmatprep.subr.mxu0 0.0
        %3041 = vmatpush1.msra.mxu0 0.0
        %3042 = vmatprep.subr.mxu0 0.0
        %3043 = vmatpush1.msra.mxu0 0.0
        %3044 = vmatprep.subr.mxu0 0.0
        %3045 = vmatpush1.msra.mxu0 0.0
        %3046 = vmatprep.subr.mxu0 0.0
        %3047 = vmatpush1.msra.mxu0 0.0
        %3048 = vmatprep.subr.mxu0 0.0
        %3049 = vmatpush1.msra.mxu0 0.0
        %3050 = vmatprep.subr.mxu0 0.0
        %3051 = vmatpush1.msra.mxu0 0.0
        %3052 = vmatprep.subr.mxu0 0.0
        %3053 = vmatpush1.msra.mxu0 0.0
        %3054 = vmatprep.subr.mxu0 0.0
        %3055 = vmatpush1.msra.mxu0 0.0
        %3056 = vmatprep.subr.mxu0 0.0
        %3057 = vmatpush1.msra.mxu0 0.0
        %3058 = vmatprep.subr.mxu0 0.0
        %3059 = vmatpush1.msra.mxu0 0.0
        %3060 = vmatprep.subr.mxu0 0.0
        %3061 = vmatpush1.msra.mxu0 %v3032
        %3062 = vmatprep.subr.mxu0 0.0
        %3063 = vmatpush1.msra.mxu0 %v3031
        %3064 = vmatprep.subr.mxu0 0.0
        %3065 = vmatpush1.msra.mxu0 %v3030
        %3066 = vmatprep.subr.mxu0 0.0
        %3067 = vmatpush1.msra.mxu0 %v3029
        %3068 = vmatprep.subr.mxu0 0.0
        %3069 = vmatpush1.msra.mxu0 %v3028
        %3070 = vmatprep.subr.mxu0 0.0
        %3071 = vmatpush1.msra.mxu0 %v3027
        %3072 = vmatprep.subr.mxu0 0.0
        %3073 = vmatpush2.msra.mxu0 0.0
        %3074 = vmatprep.subr.mxu0 0.0
        %3075 = vmatpush2.msra.mxu0 0.0
        %3076 = vmatprep.subr.mxu0 0.0
        %3077 = vmatpush2.msra.mxu0 0.0
        %3078 = vmatprep.subr.mxu0 0.0
        %3079 = vmatpush2.msra.mxu0 0.0
        %3080 = vmatprep.subr.mxu0 0.0
        %3081 = vmatpush2.msra.mxu0 0.0
        %3082 = vmatprep.subr.mxu0 0.0
        %3083 = vmatpush2.msra.mxu0 0.0
        %3084 = vmatprep.subr.mxu0 0.0
        %3085 = vmatpush2.msra.mxu0 0.0
        %3086 = vmatprep.subr.mxu0 0.0
        %3087 = vmatpush2.msra.mxu0 0.0
        %3088 = vmatprep.subr.mxu0 0.0
        %3089 = vmatpush2.msra.mxu0 0.0
        %3090 = vmatprep.subr.mxu0 0.0
        %3091 = vmatpush2.msra.mxu0 0.0
        %3092 = vmatprep.subr.mxu0 0.0
        %3093 = vmatpush2.msra.mxu0 0.0
        %3094 = vmatprep.subr.mxu0 0.0
        %3095 = vmatpush2.msra.mxu0 0.0
        %3096 = vmatprep.subr.mxu0 0.0
        %3097 = vmatpush2.msra.mxu0 0.0
        %3098 = vmatprep.subr.mxu0 0.0
        %3099 = vmatpush2.msra.mxu0 0.0
        %3100 = vmatprep.subr.mxu0 0.0
        %3101 = vmatpush2.msra.mxu0 0.0
        %3102 = vmatprep.subr.mxu0 0.0
        %3103 = vmatpush2.msra.mxu0 0.0
        %3104 = vmatprep.mubr.f32.mxu0 0.0
        %3105 = vmatmul.mubr.f32.gmra.mxu0 %v3035
        %v3106 = vpop.f32.mrf.mxu0
        %v3107 = vadd.f32 0.0, %v3106
        %v3108 = vpop.f32.mrf.mxu0
        %3109 = vmatprep.mubr.f32.mxu0 0.0
        %3110 = vmatmul.mubr.f32.gmra.mxu0 %v3038
        %v3111 = vpop.f32.mrf.mxu0
        %v3112 = vadd.f32 0.0, %v3111
        %v3113 = vpop.f32.mrf.mxu0
        %3114 = vdwg.mxu0
        %v3116 = vsel %vm3033, %v2934, 0
        %v3119 = vsel %vm3033, %v2935, 0
        %3121 = vmatprep.subr.mxu0 0.0
        %3122 = vmatpush1.msra.mxu0 0.0
        %3123 = vmatprep.subr.mxu0 0.0
        %3124 = vmatpush1.msra.mxu0 0.0
        %3125 = vmatprep.subr.mxu0 0.0
        %3126 = vmatpush1.msra.mxu0 0.0
        %3127 = vmatprep.subr.mxu0 0.0
        %3128 = vmatpush1.msra.mxu0 0.0
        %3129 = vmatprep.subr.mxu0 0.0
        %3130 = vmatpush1.msra.mxu0 0.0
        %3131 = vmatprep.subr.mxu0 0.0
        %3132 = vmatpush1.msra.mxu0 0.0
        %3133 = vmatprep.subr.mxu0 0.0
        %3134 = vmatpush1.msra.mxu0 0.0
        %3135 = vmatprep.subr.mxu0 0.0
        %3136 = vmatpush1.msra.mxu0 0.0
        %3137 = vmatprep.subr.mxu0 0.0
        %3138 = vmatpush1.msra.mxu0 0.0
        %3139 = vmatprep.subr.mxu0 0.0
        %3140 = vmatpush1.msra.mxu0 0.0
        %3141 = vmatprep.subr.mxu0 0.0
        %3142 = vmatpush1.msra.mxu0 %v2942
        %3143 = vmatprep.subr.mxu0 0.0
        %3144 = vmatpush1.msra.mxu0 %v2941
        %3145 = vmatprep.subr.mxu0 0.0
        %3146 = vmatpush1.msra.mxu0 %v2940
        %3147 = vmatprep.subr.mxu0 0.0
        %3148 = vmatpush1.msra.mxu0 %v2939
        %3149 = vmatprep.subr.mxu0 0.0
        %3150 = vmatpush1.msra.mxu0 %v2938
        %3151 = vmatprep.subr.mxu0 0.0
        %3152 = vmatpush1.msra.mxu0 %v2937
        %3153 = vmatprep.subr.mxu0 0.0
        %3154 = vmatpush2.msra.mxu0 0.0
        %3155 = vmatprep.subr.mxu0 0.0
        %3156 = vmatpush2.msra.mxu0 0.0
        %3157 = vmatprep.subr.mxu0 0.0
        %3158 = vmatpush2.msra.mxu0 0.0
        %3159 = vmatprep.subr.mxu0 0.0
        %3160 = vmatpush2.msra.mxu0 0.0
        %3161 = vmatprep.subr.mxu0 0.0
        %3162 = vmatpush2.msra.mxu0 0.0
        %3163 = vmatprep.subr.mxu0 0.0
        %3164 = vmatpush2.msra.mxu0 0.0
        %3165 = vmatprep.subr.mxu0 0.0
        %3166 = vmatpush2.msra.mxu0 0.0
        %3167 = vmatprep.subr.mxu0 0.0
        %3168 = vmatpush2.msra.mxu0 0.0
        %3169 = vmatprep.subr.mxu0 0.0
        %3170 = vmatpush2.msra.mxu0 0.0
        %3171 = vmatprep.subr.mxu0 0.0
        %3172 = vmatpush2.msra.mxu0 0.0
        %3173 = vmatprep.subr.mxu0 0.0
        %3174 = vmatpush2.msra.mxu0 0.0
        %3175 = vmatprep.subr.mxu0 0.0
        %3176 = vmatpush2.msra.mxu0 0.0
        %3177 = vmatprep.subr.mxu0 0.0
        %3178 = vmatpush2.msra.mxu0 0.0
        %3179 = vmatprep.subr.mxu0 0.0
        %3180 = vmatpush2.msra.mxu0 0.0
        %3181 = vmatprep.subr.mxu0 0.0
        %3182 = vmatpush2.msra.mxu0 0.0
        %3183 = vmatprep.subr.mxu0 0.0
        %3184 = vmatpush2.msra.mxu0 0.0
        %3185 = vmatprep.mubr.f32.mxu0 0.0
        %3186 = vmatmul.mubr.f32.gmra.mxu0 %v3116
        %v3187 = vpop.f32.mrf.mxu0
        %v3188 = vadd.f32 %v3107, %v3187
        %v3189 = vpop.f32.mrf.mxu0
        %3190 = vmatprep.mubr.f32.mxu0 0.0
        %3191 = vmatmul.mubr.f32.gmra.mxu0 %v3119
        %v3192 = vpop.f32.mrf.mxu0
        %v3193 = vadd.f32 %v3112, %v3192
        %v3194 = vpop.f32.mrf.mxu0
        %3195 = vdwg.mxu0
        %s3196 = scalar_lea.vmem %s15, 16
        %v3197 = vld [vmem:[%s3196] sm:$0xff]
        %v3198 = vld [vmem:[%s3196 + $0x8] sm:$0xff]
        %v3200 = vsel %vm2945, %v3197, 0
        %v3203 = vsel %vm2945, %v3198, 0
        %3205 = vmatprep.subr.mxu0 0.0
        %3206 = vmatpush1.msra.mxu0 0.0
        %3207 = vmatprep.subr.mxu0 0.0
        %3208 = vmatpush1.msra.mxu0 0.0
        %3209 = vmatprep.subr.mxu0 0.0
        %3210 = vmatpush1.msra.mxu0 0.0
        %3211 = vmatprep.subr.mxu0 0.0
        %3212 = vmatpush1.msra.mxu0 0.0
        %3213 = vmatprep.subr.mxu0 0.0
        %3214 = vmatpush1.msra.mxu0 0.0
        %3215 = vmatprep.subr.mxu0 0.0
        %3216 = vmatpush1.msra.mxu0 0.0
        %3217 = vmatprep.subr.mxu0 0.0
        %3218 = vmatpush1.msra.mxu0 0.0
        %3219 = vmatprep.subr.mxu0 0.0
        %3220 = vmatpush1.msra.mxu0 0.0
        %3221 = vmatprep.subr.mxu0 0.0
        %3222 = vmatpush1.msra.mxu0 0.0
        %3223 = vmatprep.subr.mxu0 0.0
        %3224 = vmatpush1.msra.mxu0 0.0
        %3225 = vmatprep.subr.mxu0 0.0
        %3226 = vmatpush1.msra.mxu0 0.0
        %3227 = vmatprep.subr.mxu0 0.0
        %3228 = vmatpush1.msra.mxu0 0.0
        %3229 = vmatprep.subr.mxu0 0.0
        %3230 = vmatpush1.msra.mxu0 0.0
        %3231 = vmatprep.subr.mxu0 0.0
        %3232 = vmatpush1.msra.mxu0 0.0
        %3233 = vmatprep.subr.mxu0 0.0
        %3234 = vmatpush1.msra.mxu0 %v2935
        %3235 = vmatprep.subr.mxu0 0.0
        %3236 = vmatpush1.msra.mxu0 %v2934
        %3237 = vmatprep.subr.mxu0 0.0
        %3238 = vmatpush2.msra.mxu0 0.0
        %3239 = vmatprep.subr.mxu0 0.0
        %3240 = vmatpush2.msra.mxu0 0.0
        %3241 = vmatprep.subr.mxu0 0.0
        %3242 = vmatpush2.msra.mxu0 0.0
        %3243 = vmatprep.subr.mxu0 0.0
        %3244 = vmatpush2.msra.mxu0 0.0
        %3245 = vmatprep.subr.mxu0 0.0
        %3246 = vmatpush2.msra.mxu0 0.0
        %3247 = vmatprep.subr.mxu0 0.0
        %3248 = vmatpush2.msra.mxu0 0.0
        %3249 = vmatprep.subr.mxu0 0.0
        %3250 = vmatpush2.msra.mxu0 0.0
        %3251 = vmatprep.subr.mxu0 0.0
        %3252 = vmatpush2.msra.mxu0 0.0
        %3253 = vmatprep.subr.mxu0 0.0
        %3254 = vmatpush2.msra.mxu0 0.0
        %3255 = vmatprep.subr.mxu0 0.0
        %3256 = vmatpush2.msra.mxu0 0.0
        %3257 = vmatprep.subr.mxu0 0.0
        %3258 = vmatpush2.msra.mxu0 0.0
        %3259 = vmatprep.subr.mxu0 0.0
        %3260 = vmatpush2.msra.mxu0 0.0
        %3261 = vmatprep.subr.mxu0 0.0
        %3262 = vmatpush2.msra.mxu0 0.0
        %3263 = vmatprep.subr.mxu0 0.0
        %3264 = vmatpush2.msra.mxu0 0.0
        %3265 = vmatprep.subr.mxu0 0.0
        %3266 = vmatpush2.msra.mxu0 0.0
        %3267 = vmatprep.subr.mxu0 0.0
        %3268 = vmatpush2.msra.mxu0 0.0
        %3269 = vmatprep.mubr.f32.mxu0 0.0
        %3270 = vmatmul.mubr.f32.gmra.mxu0 %v3200
        %v3271 = vpop.f32.mrf.mxu0
        %v3272 = vadd.f32 0.0, %v3271
        %v3273 = vpop.f32.mrf.mxu0
        %3274 = vmatprep.mubr.f32.mxu0 0.0
        %3275 = vmatmul.mubr.f32.gmra.mxu0 %v3203
        %v3276 = vpop.f32.mrf.mxu0
        %v3277 = vadd.f32 0.0, %v3276
        %v3278 = vpop.f32.mrf.mxu0
        %3279 = vdwg.mxu0
        %s3280 = scalar_lea.vmem %s16, 96
        %v3281 = vld [vmem:[%s3280] sm:$0xff]
        %v3282 = vld [vmem:[%s3280 + $0x8] sm:$0xff]
        %v3283 = vld [vmem:[%s3280 + $0x10] sm:$0xff]
        %v3284 = vld [vmem:[%s3280 + $0x18] sm:$0xff]
        %v3285 = vld [vmem:[%s3280 + $0x20] sm:$0xff]
        %v3286 = vld [vmem:[%s3280 + $0x28] sm:$0xff]
        %v3288 = vsel %vm3033, %v3272, 0
        %v3291 = vsel %vm3033, %v3277, 0
        %3293 = vmatprep.subr.mxu0 0.0
        %3294 = vmatpush1.msra.mxu0 0.0
        %3295 = vmatprep.subr.mxu0 0.0
        %3296 = vmatpush1.msra.mxu0 0.0
        %3297 = vmatprep.subr.mxu0 0.0
        %3298 = vmatpush1.msra.mxu0 0.0
        %3299 = vmatprep.subr.mxu0 0.0
        %3300 = vmatpush1.msra.mxu0 0.0
        %3301 = vmatprep.subr.mxu0 0.0
        %3302 = vmatpush1.msra.mxu0 0.0
        %3303 = vmatprep.subr.mxu0 0.0
        %3304 = vmatpush1.msra.mxu0 0.0
        %3305 = vmatprep.subr.mxu0 0.0
        %3306 = vmatpush1.msra.mxu0 0.0
        %3307 = vmatprep.subr.mxu0 0.0
        %3308 = vmatpush1.msra.mxu0 0.0
        %3309 = vmatprep.subr.mxu0 0.0
        %3310 = vmatpush1.msra.mxu0 0.0
        %3311 = vmatprep.subr.mxu0 0.0
        %3312 = vmatpush1.msra.mxu0 0.0
        %3313 = vmatprep.subr.mxu0 0.0
        %3314 = vmatpush1.msra.mxu0 %v3286
        %3315 = vmatprep.subr.mxu0 0.0
        %3316 = vmatpush1.msra.mxu0 %v3285
        %3317 = vmatprep.subr.mxu0 0.0
        %3318 = vmatpush1.msra.mxu0 %v3284
        %3319 = vmatprep.subr.mxu0 0.0
        %3320 = vmatpush1.msra.mxu0 %v3283
        %3321 = vmatprep.subr.mxu0 0.0
        %3322 = vmatpush1.msra.mxu0 %v3282
        %3323 = vmatprep.subr.mxu0 0.0
        %3324 = vmatpush1.msra.mxu0 %v3281
        %3325 = vmatprep.subr.mxu0 0.0
        %3326 = vmatpush2.msra.mxu0 0.0
        %3327 = vmatprep.subr.mxu0 0.0
        %3328 = vmatpush2.msra.mxu0 0.0
        %3329 = vmatprep.subr.mxu0 0.0
        %3330 = vmatpush2.msra.mxu0 0.0
        %3331 = vmatprep.subr.mxu0 0.0
        %3332 = vmatpush2.msra.mxu0 0.0
        %3333 = vmatprep.subr.mxu0 0.0
        %3334 = vmatpush2.msra.mxu0 0.0
        %3335 = vmatprep.subr.mxu0 0.0
        %3336 = vmatpush2.msra.mxu0 0.0
        %3337 = vmatprep.subr.mxu0 0.0
        %3338 = vmatpush2.msra.mxu0 0.0
        %3339 = vmatprep.subr.mxu0 0.0
        %3340 = vmatpush2.msra.mxu0 0.0
        %3341 = vmatprep.subr.mxu0 0.0
        %3342 = vmatpush2.msra.mxu0 0.0
        %3343 = vmatprep.subr.mxu0 0.0
        %3344 = vmatpush2.msra.mxu0 0.0
        %3345 = vmatprep.subr.mxu0 0.0
        %3346 = vmatpush2.msra.mxu0 0.0
        %3347 = vmatprep.subr.mxu0 0.0
        %3348 = vmatpush2.msra.mxu0 0.0
        %3349 = vmatprep.subr.mxu0 0.0
        %3350 = vmatpush2.msra.mxu0 0.0
        %3351 = vmatprep.subr.mxu0 0.0
        %3352 = vmatpush2.msra.mxu0 0.0
        %3353 = vmatprep.subr.mxu0 0.0
        %3354 = vmatpush2.msra.mxu0 0.0
        %3355 = vmatprep.subr.mxu0 0.0
        %3356 = vmatpush2.msra.mxu0 0.0
        %3357 = vmatprep.mubr.f32.mxu0 0.0
        %3358 = vmatmul.mubr.f32.gmra.mxu0 %v3288
        %v3359 = vpop.f32.mrf.mxu0
        %v3360 = vadd.f32 0.0, %v3359
        %v3361 = vpop.f32.mrf.mxu0
        %3362 = vmatprep.mubr.f32.mxu0 0.0
        %3363 = vmatmul.mubr.f32.gmra.mxu0 %v3291
        %v3364 = vpop.f32.mrf.mxu0
        %v3365 = vadd.f32 0.0, %v3364
        %v3366 = vpop.f32.mrf.mxu0
        %3367 = vdwg.mxu0
        %v3368 = vadd.f32 %v3188, %v3360
        %v3369 = vadd.f32 %v3193, %v3365
        %s3370 = scalar_lea.vmem %s17, 128
        %v3371 = vld [vmem:[%s3370] sm:$0xff]
        %v3372 = vld [vmem:[%s3370 + $0x8] sm:$0xff]
        %v3373 = vld [vmem:[%s3370 + $0x10] sm:$0xff]
        %v3374 = vld [vmem:[%s3370 + $0x18] sm:$0xff]
        %v3375 = vld [vmem:[%s3370 + $0x20] sm:$0xff]
        %v3376 = vld [vmem:[%s3370 + $0x28] sm:$0xff]
        %v3377 = vld [vmem:[%s3370 + $0x30] sm:$0xff]
        %v3378 = vld [vmem:[%s3370 + $0x38] sm:$0xff]
        %v3379 = vld [vmem:[%s3370 + $0x40] sm:$0xff]
        %v3380 = vld [vmem:[%s3370 + $0x48] sm:$0xff]
        %v3381 = vld [vmem:[%s3370 + $0x50] sm:$0xff]
        %v3382 = vld [vmem:[%s3370 + $0x58] sm:$0xff]
        %v3383 = vld [vmem:[%s3370 + $0x60] sm:$0xff]
        %v3384 = vld [vmem:[%s3370 + $0x68] sm:$0xff]
        %v3385 = vld [vmem:[%s3370 + $0x70] sm:$0xff]
        %v3386 = vld [vmem:[%s3370 + $0x78] sm:$0xff]
        %3387 = vmatprep.subr.mxu0 0.0
        %3388 = vmatpush1.msra.mxu0 0.0
        %3389 = vmatprep.subr.mxu0 0.0
        %3390 = vmatpush1.msra.mxu0 0.0
        %3391 = vmatprep.subr.mxu0 0.0
        %3392 = vmatpush1.msra.mxu0 0.0
        %3393 = vmatprep.subr.mxu0 0.0
        %3394 = vmatpush1.msra.mxu0 0.0
        %3395 = vmatprep.subr.mxu0 0.0
        %3396 = vmatpush1.msra.mxu0 0.0
        %3397 = vmatprep.subr.mxu0 0.0
        %3398 = vmatpush1.msra.mxu0 0.0
        %3399 = vmatprep.subr.mxu0 0.0
        %3400 = vmatpush1.msra.mxu0 0.0
        %3401 = vmatprep.subr.mxu0 0.0
        %3402 = vmatpush1.msra.mxu0 0.0
        %3403 = vmatprep.subr.mxu0 0.0
        %3404 = vmatpush1.msra.mxu0 0.0
        %3405 = vmatprep.subr.mxu0 0.0
        %3406 = vmatpush1.msra.mxu0 0.0
        %3407 = vmatprep.subr.mxu0 0.0
        %3408 = vmatpush1.msra.mxu0 0.0
        %3409 = vmatprep.subr.mxu0 0.0
        %3410 = vmatpush1.msra.mxu0 0.0
        %3411 = vmatprep.subr.mxu0 0.0
        %3412 = vmatpush1.msra.mxu0 0.0
        %3413 = vmatprep.subr.mxu0 0.0
        %3414 = vmatpush1.msra.mxu0 0.0
        %3415 = vmatprep.subr.mxu0 0.0
        %3416 = vmatpush1.msra.mxu0 %v2933
        %3417 = vmatprep.subr.mxu0 0.0
        %3418 = vmatpush1.msra.mxu0 %v2932
        %3419 = vmatprep.subr.mxu0 0.0
        %3420 = vmatpush2.msra.mxu0 0.0
        %3421 = vmatprep.subr.mxu0 0.0
        %3422 = vmatpush2.msra.mxu0 0.0
        %3423 = vmatprep.subr.mxu0 0.0
        %3424 = vmatpush2.msra.mxu0 0.0
        %3425 = vmatprep.subr.mxu0 0.0
        %3426 = vmatpush2.msra.mxu0 0.0
        %3427 = vmatprep.subr.mxu0 0.0
        %3428 = vmatpush2.msra.mxu0 0.0
        %3429 = vmatprep.subr.mxu0 0.0
        %3430 = vmatpush2.msra.mxu0 0.0
        %3431 = vmatprep.subr.mxu0 0.0
        %3432 = vmatpush2.msra.mxu0 0.0
        %3433 = vmatprep.subr.mxu0 0.0
        %3434 = vmatpush2.msra.mxu0 0.0
        %3435 = vmatprep.subr.mxu0 0.0
        %3436 = vmatpush2.msra.mxu0 0.0
        %3437 = vmatprep.subr.mxu0 0.0
        %3438 = vmatpush2.msra.mxu0 0.0
        %3439 = vmatprep.subr.mxu0 0.0
        %3440 = vmatpush2.msra.mxu0 0.0
        %3441 = vmatprep.subr.mxu0 0.0
        %3442 = vmatpush2.msra.mxu0 0.0
        %3443 = vmatprep.subr.mxu0 0.0
        %3444 = vmatpush2.msra.mxu0 0.0
        %3445 = vmatprep.subr.mxu0 0.0
        %3446 = vmatpush2.msra.mxu0 0.0
        %3447 = vmatprep.subr.mxu0 0.0
        %3448 = vmatpush2.msra.mxu0 0.0
        %3449 = vmatprep.subr.mxu0 0.0
        %3450 = vmatpush2.msra.mxu0 0.0
        %3451 = vmatprep.mubr.f32.mxu0 0.0
        %3452 = vmatmul.mubr.f32.gmra.mxu0 %v2947
        %v3453 = vpop.f32.mrf.mxu0
        %v3454 = vadd.f32 0.0, %v3453
        %v3455 = vpop.f32.mrf.mxu0
        %3456 = vmatprep.mubr.f32.mxu0 0.0
        %3457 = vmatmul.mubr.f32.gmra.mxu0 %v2950
        %v3458 = vpop.f32.mrf.mxu0
        %v3459 = vadd.f32 0.0, %v3458
        %v3460 = vpop.f32.mrf.mxu0
        %3461 = vdwg.mxu0
        %v3462 = vld [vmem:[%s17] sm:$0xff]
        %v3463 = vld [vmem:[%s17 + $0x8] sm:$0xff]
        %v3464 = vld [vmem:[%s17 + $0x10] sm:$0xff]
        %v3465 = vld [vmem:[%s17 + $0x18] sm:$0xff]
        %v3466 = vld [vmem:[%s17 + $0x20] sm:$0xff]
        %v3467 = vld [vmem:[%s17 + $0x28] sm:$0xff]
        %v3468 = vld [vmem:[%s17 + $0x30] sm:$0xff]
        %v3469 = vld [vmem:[%s17 + $0x38] sm:$0xff]
        %v3470 = vld [vmem:[%s17 + $0x40] sm:$0xff]
        %v3471 = vld [vmem:[%s17 + $0x48] sm:$0xff]
        %v3472 = vld [vmem:[%s17 + $0x50] sm:$0xff]
        %v3473 = vld [vmem:[%s17 + $0x58] sm:$0xff]
        %v3474 = vld [vmem:[%s17 + $0x60] sm:$0xff]
        %v3475 = vld [vmem:[%s17 + $0x68] sm:$0xff]
        %v3476 = vld [vmem:[%s17 + $0x70] sm:$0xff]
        %v3477 = vld [vmem:[%s17 + $0x78] sm:$0xff]
        %3478 = vmatprep.subr.mxu0 0.0
        %3479 = vmatpush1.msra.mxu0 %v3477
        %3480 = vmatprep.subr.mxu0 0.0
        %3481 = vmatpush1.msra.mxu0 %v3476
        %3482 = vmatprep.subr.mxu0 0.0
        %3483 = vmatpush1.msra.mxu0 %v3475
        %3484 = vmatprep.subr.mxu0 0.0
        %3485 = vmatpush1.msra.mxu0 %v3474
        %3486 = vmatprep.subr.mxu0 0.0
        %3487 = vmatpush1.msra.mxu0 %v3473
        %3488 = vmatprep.subr.mxu0 0.0
        %3489 = vmatpush1.msra.mxu0 %v3472
        %3490 = vmatprep.subr.mxu0 0.0
        %3491 = vmatpush1.msra.mxu0 %v3471
        %3492 = vmatprep.subr.mxu0 0.0
        %3493 = vmatpush1.msra.mxu0 %v3470
        %3494 = vmatprep.subr.mxu0 0.0
        %3495 = vmatpush1.msra.mxu0 %v3469
        %3496 = vmatprep.subr.mxu0 0.0
        %3497 = vmatpush1.msra.mxu0 %v3468
        %3498 = vmatprep.subr.mxu0 0.0
        %3499 = vmatpush1.msra.mxu0 %v3467
        %3500 = vmatprep.subr.mxu0 0.0
        %3501 = vmatpush1.msra.mxu0 %v3466
        %3502 = vmatprep.subr.mxu0 0.0
        %3503 = vmatpush1.msra.mxu0 %v3465
        %3504 = vmatprep.subr.mxu0 0.0
        %3505 = vmatpush1.msra.mxu0 %v3464
        %3506 = vmatprep.subr.mxu0 0.0
        %3507 = vmatpush1.msra.mxu0 %v3463
        %3508 = vmatprep.subr.mxu0 0.0
        %3509 = vmatpush1.msra.mxu0 %v3462
        %3510 = vmatprep.subr.mxu0 0.0
        %3511 = vmatpush2.msra.mxu0 0.0
        %3512 = vmatprep.subr.mxu0 0.0
        %3513 = vmatpush2.msra.mxu0 0.0
        %3514 = vmatprep.subr.mxu0 0.0
        %3515 = vmatpush2.msra.mxu0 0.0
        %3516 = vmatprep.subr.mxu0 0.0
        %3517 = vmatpush2.msra.mxu0 0.0
        %3518 = vmatprep.subr.mxu0 0.0
        %3519 = vmatpush2.msra.mxu0 0.0
        %3520 = vmatprep.subr.mxu0 0.0
        %3521 = vmatpush2.msra.mxu0 0.0
        %3522 = vmatprep.subr.mxu0 0.0
        %3523 = vmatpush2.msra.mxu0 0.0
        %3524 = vmatprep.subr.mxu0 0.0
        %3525 = vmatpush2.msra.mxu0 0.0
        %3526 = vmatprep.subr.mxu0 0.0
        %3527 = vmatpush2.msra.mxu0 0.0
        %3528 = vmatprep.subr.mxu0 0.0
        %3529 = vmatpush2.msra.mxu0 0.0
        %3530 = vmatprep.subr.mxu0 0.0
        %3531 = vmatpush2.msra.mxu0 0.0
        %3532 = vmatprep.subr.mxu0 0.0
        %3533 = vmatpush2.msra.mxu0 0.0
        %3534 = vmatprep.subr.mxu0 0.0
        %3535 = vmatpush2.msra.mxu0 0.0
        %3536 = vmatprep.subr.mxu0 0.0
        %3537 = vmatpush2.msra.mxu0 0.0
        %3538 = vmatprep.subr.mxu0 0.0
        %3539 = vmatpush2.msra.mxu0 0.0
        %3540 = vmatprep.subr.mxu0 0.0
        %3541 = vmatpush2.msra.mxu0 0.0
        %3542 = vmatprep.mubr.f32.mxu0 0.0
        %3543 = vmatmul.mubr.f32.gmra.mxu0 %v3454
        %v3544 = vpop.f32.mrf.mxu0
        %v3545 = vadd.f32 0.0, %v3544
        %v3546 = vpop.f32.mrf.mxu0
        %3547 = vmatprep.mubr.f32.mxu0 0.0
        %3548 = vmatmul.mubr.f32.gmra.mxu0 %v3459
        %v3549 = vpop.f32.mrf.mxu0
        %v3550 = vadd.f32 0.0, %v3549
        %v3551 = vpop.f32.mrf.mxu0
        %3552 = vdwg.mxu0
        %3553 = vmatprep.subr.mxu0 0.0
        %3554 = vmatpush1.msra.mxu0 %v3386
        %3555 = vmatprep.subr.mxu0 0.0
        %3556 = vmatpush1.msra.mxu0 %v3385
        %3557 = vmatprep.subr.mxu0 0.0
        %3558 = vmatpush1.msra.mxu0 %v3384
        %3559 = vmatprep.subr.mxu0 0.0
        %3560 = vmatpush1.msra.mxu0 %v3383
        %3561 = vmatprep.subr.mxu0 0.0
        %3562 = vmatpush1.msra.mxu0 %v3382
        %3563 = vmatprep.subr.mxu0 0.0
        %3564 = vmatpush1.msra.mxu0 %v3381
        %3565 = vmatprep.subr.mxu0 0.0
        %3566 = vmatpush1.msra.mxu0 %v3380
        %3567 = vmatprep.subr.mxu0 0.0
        %3568 = vmatpush1.msra.mxu0 %v3379
        %3569 = vmatprep.subr.mxu0 0.0
        %3570 = vmatpush1.msra.mxu0 %v3378
        %3571 = vmatprep.subr.mxu0 0.0
        %3572 = vmatpush1.msra.mxu0 %v3377
        %3573 = vmatprep.subr.mxu0 0.0
        %3574 = vmatpush1.msra.mxu0 %v3376
        %3575 = vmatprep.subr.mxu0 0.0
        %3576 = vmatpush1.msra.mxu0 %v3375
        %3577 = vmatprep.subr.mxu0 0.0
        %3578 = vmatpush1.msra.mxu0 %v3374
        %3579 = vmatprep.subr.mxu0 0.0
        %3580 = vmatpush1.msra.mxu0 %v3373
        %3581 = vmatprep.subr.mxu0 0.0
        %3582 = vmatpush1.msra.mxu0 %v3372
        %3583 = vmatprep.subr.mxu0 0.0
        %3584 = vmatpush1.msra.mxu0 %v3371
        %3585 = vmatprep.subr.mxu0 0.0
        %3586 = vmatpush2.msra.mxu0 0.0
        %3587 = vmatprep.subr.mxu0 0.0
        %3588 = vmatpush2.msra.mxu0 0.0
        %3589 = vmatprep.subr.mxu0 0.0
        %3590 = vmatpush2.msra.mxu0 0.0
        %3591 = vmatprep.subr.mxu0 0.0
        %3592 = vmatpush2.msra.mxu0 0.0
        %3593 = vmatprep.subr.mxu0 0.0
        %3594 = vmatpush2.msra.mxu0 0.0
        %3595 = vmatprep.subr.mxu0 0.0
        %3596 = vmatpush2.msra.mxu0 0.0
        %3597 = vmatprep.subr.mxu0 0.0
        %3598 = vmatpush2.msra.mxu0 0.0
        %3599 = vmatprep.subr.mxu0 0.0
        %3600 = vmatpush2.msra.mxu0 0.0
        %3601 = vmatprep.subr.mxu0 0.0
        %3602 = vmatpush2.msra.mxu0 0.0
        %3603 = vmatprep.subr.mxu0 0.0
        %3604 = vmatpush2.msra.mxu0 0.0
        %3605 = vmatprep.subr.mxu0 0.0
        %3606 = vmatpush2.msra.mxu0 0.0
        %3607 = vmatprep.subr.mxu0 0.0
        %3608 = vmatpush2.msra.mxu0 0.0
        %3609 = vmatprep.subr.mxu0 0.0
        %3610 = vmatpush2.msra.mxu0 0.0
        %3611 = vmatprep.subr.mxu0 0.0
        %3612 = vmatpush2.msra.mxu0 0.0
        %3613 = vmatprep.subr.mxu0 0.0
        %3614 = vmatpush2.msra.mxu0 0.0
        %3615 = vmatprep.subr.mxu0 0.0
        %3616 = vmatpush2.msra.mxu0 0.0
        %3617 = vmatprep.mubr.f32.mxu0 0.0
        %3618 = vmatmul.mubr.f32.gmra.mxu0 %v2932
        %v3619 = vpop.f32.mrf.mxu0
        %v3620 = vadd.f32 %v3545, %v3619
        %v3621 = vpop.f32.mrf.mxu0
        %3622 = vmatprep.mubr.f32.mxu0 0.0
        %3623 = vmatmul.mubr.f32.gmra.mxu0 %v2933
        %v3624 = vpop.f32.mrf.mxu0
        %v3625 = vadd.f32 %v3550, %v3624
        %v3626 = vpop.f32.mrf.mxu0
        %3627 = vdwg.mxu0
        %3628 = vmatprep.subr.mxu0 0.0
        %3629 = vmatpush1.msra.mxu0 0.0
        %3630 = vmatprep.subr.mxu0 0.0
        %3631 = vmatpush1.msra.mxu0 0.0
        %3632 = vmatprep.subr.mxu0 0.0
        %3633 = vmatpush1.msra.mxu0 0.0
        %3634 = vmatprep.subr.mxu0 0.0
        %3635 = vmatpush1.msra.mxu0 0.0
        %3636 = vmatprep.subr.mxu0 0.0
        %3637 = vmatpush1.msra.mxu0 0.0
        %3638 = vmatprep.subr.mxu0 0.0
        %3639 = vmatpush1.msra.mxu0 0.0
        %3640 = vmatprep.subr.mxu0 0.0
        %3641 = vmatpush1.msra.mxu0 0.0
        %3642 = vmatprep.subr.mxu0 0.0
        %3643 = vmatpush1.msra.mxu0 0.0
        %3644 = vmatprep.subr.mxu0 0.0
        %3645 = vmatpush1.msra.mxu0 0.0
        %3646 = vmatprep.subr.mxu0 0.0
        %3647 = vmatpush1.msra.mxu0 0.0
        %3648 = vmatprep.subr.mxu0 0.0
        %3649 = vmatpush1.msra.mxu0 0.0
        %3650 = vmatprep.subr.mxu0 0.0
        %3651 = vmatpush1.msra.mxu0 0.0
        %3652 = vmatprep.subr.mxu0 0.0
        %3653 = vmatpush1.msra.mxu0 0.0
        %3654 = vmatprep.subr.mxu0 0.0
        %3655 = vmatpush1.msra.mxu0 0.0
        %3656 = vmatprep.subr.mxu0 0.0
        %3657 = vmatpush1.msra.mxu0 %v2933
        %3658 = vmatprep.subr.mxu0 0.0
        %3659 = vmatpush1.msra.mxu0 %v2932
        %3660 = vmatprep.subr.mxu0 0.0
        %3661 = vmatpush2.msra.mxu0 0.0
        %3662 = vmatprep.subr.mxu0 0.0
        %3663 = vmatpush2.msra.mxu0 0.0
        %3664 = vmatprep.subr.mxu0 0.0
        %3665 = vmatpush2.msra.mxu0 0.0
        %3666 = vmatprep.subr.mxu0 0.0
        %3667 = vmatpush2.msra.mxu0 0.0
        %3668 = vmatprep.subr.mxu0 0.0
        %3669 = vmatpush2.msra.mxu0 0.0
        %3670 = vmatprep.subr.mxu0 0.0
        %3671 = vmatpush2.msra.mxu0 0.0
        %3672 = vmatprep.subr.mxu0 0.0
        %3673 = vmatpush2.msra.mxu0 0.0
        %3674 = vmatprep.subr.mxu0 0.0
        %3675 = vmatpush2.msra.mxu0 0.0
        %3676 = vmatprep.subr.mxu0 0.0
        %3677 = vmatpush2.msra.mxu0 0.0
        %3678 = vmatprep.subr.mxu0 0.0
        %3679 = vmatpush2.msra.mxu0 0.0
        %3680 = vmatprep.subr.mxu0 0.0
        %3681 = vmatpush2.msra.mxu0 0.0
        %3682 = vmatprep.subr.mxu0 0.0
        %3683 = vmatpush2.msra.mxu0 0.0
        %3684 = vmatprep.subr.mxu0 0.0
        %3685 = vmatpush2.msra.mxu0 0.0
        %3686 = vmatprep.subr.mxu0 0.0
        %3687 = vmatpush2.msra.mxu0 0.0
        %3688 = vmatprep.subr.mxu0 0.0
        %3689 = vmatpush2.msra.mxu0 0.0
        %3690 = vmatprep.subr.mxu0 0.0
        %3691 = vmatpush2.msra.mxu0 0.0
        %3692 = vmatprep.mubr.f32.mxu0 0.0
        %3693 = vmatmul.mubr.f32.gmra.mxu0 %v3200
        %v3694 = vpop.f32.mrf.mxu0
        %v3695 = vadd.f32 0.0, %v3694
        %v3696 = vpop.f32.mrf.mxu0
        %3697 = vmatprep.mubr.f32.mxu0 0.0
        %3698 = vmatmul.mubr.f32.gmra.mxu0 %v3203
        %v3699 = vpop.f32.mrf.mxu0
        %v3700 = vadd.f32 0.0, %v3699
        %v3701 = vpop.f32.mrf.mxu0
        %3702 = vdwg.mxu0
        %s3703 = scalar_lea.vmem %s17, 256
        %v3704 = vld [vmem:[%s3703] sm:$0xff]
        %v3705 = vld [vmem:[%s3703 + $0x8] sm:$0xff]
        %v3706 = vld [vmem:[%s3703 + $0x10] sm:$0xff]
        %v3707 = vld [vmem:[%s3703 + $0x18] sm:$0xff]
        %v3708 = vld [vmem:[%s3703 + $0x20] sm:$0xff]
        %v3709 = vld [vmem:[%s3703 + $0x28] sm:$0xff]
        %v3710 = vld [vmem:[%s3703 + $0x30] sm:$0xff]
        %v3711 = vld [vmem:[%s3703 + $0x38] sm:$0xff]
        %v3712 = vld [vmem:[%s3703 + $0x40] sm:$0xff]
        %v3713 = vld [vmem:[%s3703 + $0x48] sm:$0xff]
        %v3714 = vld [vmem:[%s3703 + $0x50] sm:$0xff]
        %v3715 = vld [vmem:[%s3703 + $0x58] sm:$0xff]
        %v3716 = vld [vmem:[%s3703 + $0x60] sm:$0xff]
        %v3717 = vld [vmem:[%s3703 + $0x68] sm:$0xff]
        %v3718 = vld [vmem:[%s3703 + $0x70] sm:$0xff]
        %v3719 = vld [vmem:[%s3703 + $0x78] sm:$0xff]
        %3720 = vmatprep.subr.mxu0 0.0
        %3721 = vmatpush1.msra.mxu0 %v3719
        %3722 = vmatprep.subr.mxu0 0.0
        %3723 = vmatpush1.msra.mxu0 %v3718
        %3724 = vmatprep.subr.mxu0 0.0
        %3725 = vmatpush1.msra.mxu0 %v3717
        %3726 = vmatprep.subr.mxu0 0.0
        %3727 = vmatpush1.msra.mxu0 %v3716
        %3728 = vmatprep.subr.mxu0 0.0
        %3729 = vmatpush1.msra.mxu0 %v3715
        %3730 = vmatprep.subr.mxu0 0.0
        %3731 = vmatpush1.msra.mxu0 %v3714
        %3732 = vmatprep.subr.mxu0 0.0
        %3733 = vmatpush1.msra.mxu0 %v3713
        %3734 = vmatprep.subr.mxu0 0.0
        %3735 = vmatpush1.msra.mxu0 %v3712
        %3736 = vmatprep.subr.mxu0 0.0
        %3737 = vmatpush1.msra.mxu0 %v3711
        %3738 = vmatprep.subr.mxu0 0.0
        %3739 = vmatpush1.msra.mxu0 %v3710
        %3740 = vmatprep.subr.mxu0 0.0
        %3741 = vmatpush1.msra.mxu0 %v3709
        %3742 = vmatprep.subr.mxu0 0.0
        %3743 = vmatpush1.msra.mxu0 %v3708
        %3744 = vmatprep.subr.mxu0 0.0
        %3745 = vmatpush1.msra.mxu0 %v3707
        %3746 = vmatprep.subr.mxu0 0.0
        %3747 = vmatpush1.msra.mxu0 %v3706
        %3748 = vmatprep.subr.mxu0 0.0
        %3749 = vmatpush1.msra.mxu0 %v3705
        %3750 = vmatprep.subr.mxu0 0.0
        %3751 = vmatpush1.msra.mxu0 %v3704
        %3752 = vmatprep.subr.mxu0 0.0
        %3753 = vmatpush2.msra.mxu0 0.0
        %3754 = vmatprep.subr.mxu0 0.0
        %3755 = vmatpush2.msra.mxu0 0.0
        %3756 = vmatprep.subr.mxu0 0.0
        %3757 = vmatpush2.msra.mxu0 0.0
        %3758 = vmatprep.subr.mxu0 0.0
        %3759 = vmatpush2.msra.mxu0 0.0
        %3760 = vmatprep.subr.mxu0 0.0
        %3761 = vmatpush2.msra.mxu0 0.0
        %3762 = vmatprep.subr.mxu0 0.0
        %3763 = vmatpush2.msra.mxu0 0.0
        %3764 = vmatprep.subr.mxu0 0.0
        %3765 = vmatpush2.msra.mxu0 0.0
        %3766 = vmatprep.subr.mxu0 0.0
        %3767 = vmatpush2.msra.mxu0 0.0
        %3768 = vmatprep.subr.mxu0 0.0
        %3769 = vmatpush2.msra.mxu0 0.0
        %3770 = vmatprep.subr.mxu0 0.0
        %3771 = vmatpush2.msra.mxu0 0.0
        %3772 = vmatprep.subr.mxu0 0.0
        %3773 = vmatpush2.msra.mxu0 0.0
        %3774 = vmatprep.subr.mxu0 0.0
        %3775 = vmatpush2.msra.mxu0 0.0
        %3776 = vmatprep.subr.mxu0 0.0
        %3777 = vmatpush2.msra.mxu0 0.0
        %3778 = vmatprep.subr.mxu0 0.0
        %3779 = vmatpush2.msra.mxu0 0.0
        %3780 = vmatprep.subr.mxu0 0.0
        %3781 = vmatpush2.msra.mxu0 0.0
        %3782 = vmatprep.subr.mxu0 0.0
        %3783 = vmatpush2.msra.mxu0 0.0
        %3784 = vmatprep.mubr.f32.mxu0 0.0
        %3785 = vmatmul.mubr.f32.gmra.mxu0 %v3695
        %v3786 = vpop.f32.mrf.mxu0
        %v3787 = vadd.f32 0.0, %v3786
        %v3788 = vpop.f32.mrf.mxu0
        %3789 = vmatprep.mubr.f32.mxu0 0.0
        %3790 = vmatmul.mubr.f32.gmra.mxu0 %v3700
        %v3791 = vpop.f32.mrf.mxu0
        %v3792 = vadd.f32 0.0, %v3791
        %v3793 = vpop.f32.mrf.mxu0
        %3794 = vdwg.mxu0
        %v3795 = vadd.f32 %v3620, %v3787
        %v3796 = vadd.f32 %v3625, %v3792
        %v3797 = vadd.f32 %v3368, %v3795
        %v3798 = vadd.f32 %v3369, %v3796
        %v3799 = vld [vmem:[%s18] sm:$0x1]
        %v3801 = vlaneseq
        %v3802 = vshrl.u32 %v3801, 7
        %v3803 = vsub.s32 0, %v3802
        %v3804 = vrot.slane %v3799, %v3803
        %v3806 = vadd.f32 %v3797, %v3804
        %v3807 = vadd.f32 %v3798, %v3804
        %v3808 = vmax.f32 %v3806, 0.0
        %v3809 = vmax.f32 %v3807, 0.0
        %s3810 = scalar_lea.vmem %s19, 128
        %v3811 = vld [vmem:[%s3810] sm:$0xff]
        %v3812 = vld [vmem:[%s3810 + $0x8] sm:$0xff]
        %v3813 = vld [vmem:[%s3810 + $0x10] sm:$0xff]
        %v3814 = vld [vmem:[%s3810 + $0x18] sm:$0xff]
        %v3815 = vld [vmem:[%s3810 + $0x20] sm:$0xff]
        %v3816 = vld [vmem:[%s3810 + $0x28] sm:$0xff]
        %v3817 = vld [vmem:[%s3810 + $0x30] sm:$0xff]
        %v3818 = vld [vmem:[%s3810 + $0x38] sm:$0xff]
        %v3819 = vld [vmem:[%s3810 + $0x40] sm:$0xff]
        %v3820 = vld [vmem:[%s3810 + $0x48] sm:$0xff]
        %v3821 = vld [vmem:[%s3810 + $0x50] sm:$0xff]
        %v3822 = vld [vmem:[%s3810 + $0x58] sm:$0xff]
        %v3823 = vld [vmem:[%s3810 + $0x60] sm:$0xff]
        %v3824 = vld [vmem:[%s3810 + $0x68] sm:$0xff]
        %v3825 = vld [vmem:[%s3810 + $0x70] sm:$0xff]
        %v3826 = vld [vmem:[%s3810 + $0x78] sm:$0xff]
        %3827 = vmatprep.subr.mxu0 0.0
        %3828 = vmatpush1.msra.mxu0 0.0
        %3829 = vmatprep.subr.mxu0 0.0
        %3830 = vmatpush1.msra.mxu0 0.0
        %3831 = vmatprep.subr.mxu0 0.0
        %3832 = vmatpush1.msra.mxu0 0.0
        %3833 = vmatprep.subr.mxu0 0.0
        %3834 = vmatpush1.msra.mxu0 0.0
        %3835 = vmatprep.subr.mxu0 0.0
        %3836 = vmatpush1.msra.mxu0 0.0
        %3837 = vmatprep.subr.mxu0 0.0
        %3838 = vmatpush1.msra.mxu0 0.0
        %3839 = vmatprep.subr.mxu0 0.0
        %3840 = vmatpush1.msra.mxu0 0.0
        %3841 = vmatprep.subr.mxu0 0.0
        %3842 = vmatpush1.msra.mxu0 0.0
        %3843 = vmatprep.subr.mxu0 0.0
        %3844 = vmatpush1.msra.mxu0 0.0
        %3845 = vmatprep.subr.mxu0 0.0
        %3846 = vmatpush1.msra.mxu0 0.0
        %3847 = vmatprep.subr.mxu0 0.0
        %3848 = vmatpush1.msra.mxu0 0.0
        %3849 = vmatprep.subr.mxu0 0.0
        %3850 = vmatpush1.msra.mxu0 0.0
        %3851 = vmatprep.subr.mxu0 0.0
        %3852 = vmatpush1.msra.mxu0 0.0
        %3853 = vmatprep.subr.mxu0 0.0
        %3854 = vmatpush1.msra.mxu0 0.0
        %3855 = vmatprep.subr.mxu0 0.0
        %3856 = vmatpush1.msra.mxu0 %v3809
        %3857 = vmatprep.subr.mxu0 0.0
        %3858 = vmatpush1.msra.mxu0 %v3808
        %3859 = vmatprep.subr.mxu0 0.0
        %3860 = vmatpush2.msra.mxu0 0.0
        %3861 = vmatprep.subr.mxu0 0.0
        %3862 = vmatpush2.msra.mxu0 0.0
        %3863 = vmatprep.subr.mxu0 0.0
        %3864 = vmatpush2.msra.mxu0 0.0
        %3865 = vmatprep.subr.mxu0 0.0
        %3866 = vmatpush2.msra.mxu0 0.0
        %3867 = vmatprep.subr.mxu0 0.0
        %3868 = vmatpush2.msra.mxu0 0.0
        %3869 = vmatprep.subr.mxu0 0.0
        %3870 = vmatpush2.msra.mxu0 0.0
        %3871 = vmatprep.subr.mxu0 0.0
        %3872 = vmatpush2.msra.mxu0 0.0
        %3873 = vmatprep.subr.mxu0 0.0
        %3874 = vmatpush2.msra.mxu0 0.0
        %3875 = vmatprep.subr.mxu0 0.0
        %3876 = vmatpush2.msra.mxu0 0.0
        %3877 = vmatprep.subr.mxu0 0.0
        %3878 = vmatpush2.msra.mxu0 0.0
        %3879 = vmatprep.subr.mxu0 0.0
        %3880 = vmatpush2.msra.mxu0 0.0
        %3881 = vmatprep.subr.mxu0 0.0
        %3882 = vmatpush2.msra.mxu0 0.0
        %3883 = vmatprep.subr.mxu0 0.0
        %3884 = vmatpush2.msra.mxu0 0.0
        %3885 = vmatprep.subr.mxu0 0.0
        %3886 = vmatpush2.msra.mxu0 0.0
        %3887 = vmatprep.subr.mxu0 0.0
        %3888 = vmatpush2.msra.mxu0 0.0
        %3889 = vmatprep.subr.mxu0 0.0
        %3890 = vmatpush2.msra.mxu0 0.0
        %3891 = vmatprep.mubr.f32.mxu0 0.0
        %3892 = vmatmul.mubr.f32.gmra.mxu0 %v2947
        %v3893 = vpop.f32.mrf.mxu0
        %v3894 = vadd.f32 0.0, %v3893
        %v3895 = vpop.f32.mrf.mxu0
        %3896 = vmatprep.mubr.f32.mxu0 0.0
        %3897 = vmatmul.mubr.f32.gmra.mxu0 %v2950
        %v3898 = vpop.f32.mrf.mxu0
        %v3899 = vadd.f32 0.0, %v3898
        %v3900 = vpop.f32.mrf.mxu0
        %3901 = vdwg.mxu0
        %v3902 = vld [vmem:[%s19] sm:$0xff]
        %v3903 = vld [vmem:[%s19 + $0x8] sm:$0xff]
        %v3904 = vld [vmem:[%s19 + $0x10] sm:$0xff]
        %v3905 = vld [vmem:[%s19 + $0x18] sm:$0xff]
        %v3906 = vld [vmem:[%s19 + $0x20] sm:$0xff]
        %v3907 = vld [vmem:[%s19 + $0x28] sm:$0xff]
        %v3908 = vld [vmem:[%s19 + $0x30] sm:$0xff]
        %v3909 = vld [vmem:[%s19 + $0x38] sm:$0xff]
        %v3910 = vld [vmem:[%s19 + $0x40] sm:$0xff]
        %v3911 = vld [vmem:[%s19 + $0x48] sm:$0xff]
        %v3912 = vld [vmem:[%s19 + $0x50] sm:$0xff]
        %v3913 = vld [vmem:[%s19 + $0x58] sm:$0xff]
        %v3914 = vld [vmem:[%s19 + $0x60] sm:$0xff]
        %v3915 = vld [vmem:[%s19 + $0x68] sm:$0xff]
        %v3916 = vld [vmem:[%s19 + $0x70] sm:$0xff]
        %v3917 = vld [vmem:[%s19 + $0x78] sm:$0xff]
        %3918 = vmatprep.subr.mxu0 0.0
        %3919 = vmatpush1.msra.mxu0 %v3917
        %3920 = vmatprep.subr.mxu0 0.0
        %3921 = vmatpush1.msra.mxu0 %v3916
        %3922 = vmatprep.subr.mxu0 0.0
        %3923 = vmatpush1.msra.mxu0 %v3915
        %3924 = vmatprep.subr.mxu0 0.0
        %3925 = vmatpush1.msra.mxu0 %v3914
        %3926 = vmatprep.subr.mxu0 0.0
        %3927 = vmatpush1.msra.mxu0 %v3913
        %3928 = vmatprep.subr.mxu0 0.0
        %3929 = vmatpush1.msra.mxu0 %v3912
        %3930 = vmatprep.subr.mxu0 0.0
        %3931 = vmatpush1.msra.mxu0 %v3911
        %3932 = vmatprep.subr.mxu0 0.0
        %3933 = vmatpush1.msra.mxu0 %v3910
        %3934 = vmatprep.subr.mxu0 0.0
        %3935 = vmatpush1.msra.mxu0 %v3909
        %3936 = vmatprep.subr.mxu0 0.0
        %3937 = vmatpush1.msra.mxu0 %v3908
        %3938 = vmatprep.subr.mxu0 0.0
        %3939 = vmatpush1.msra.mxu0 %v3907
        %3940 = vmatprep.subr.mxu0 0.0
        %3941 = vmatpush1.msra.mxu0 %v3906
        %3942 = vmatprep.subr.mxu0 0.0
        %3943 = vmatpush1.msra.mxu0 %v3905
        %3944 = vmatprep.subr.mxu0 0.0
        %3945 = vmatpush1.msra.mxu0 %v3904
        %3946 = vmatprep.subr.mxu0 0.0
        %3947 = vmatpush1.msra.mxu0 %v3903
        %3948 = vmatprep.subr.mxu0 0.0
        %3949 = vmatpush1.msra.mxu0 %v3902
        %3950 = vmatprep.subr.mxu0 0.0
        %3951 = vmatpush2.msra.mxu0 0.0
        %3952 = vmatprep.subr.mxu0 0.0
        %3953 = vmatpush2.msra.mxu0 0.0
        %3954 = vmatprep.subr.mxu0 0.0
        %3955 = vmatpush2.msra.mxu0 0.0
        %3956 = vmatprep.subr.mxu0 0.0
        %3957 = vmatpush2.msra.mxu0 0.0
        %3958 = vmatprep.subr.mxu0 0.0
        %3959 = vmatpush2.msra.mxu0 0.0
        %3960 = vmatprep.subr.mxu0 0.0
        %3961 = vmatpush2.msra.mxu0 0.0
        %3962 = vmatprep.subr.mxu0 0.0
        %3963 = vmatpush2.msra.mxu0 0.0
        %3964 = vmatprep.subr.mxu0 0.0
        %3965 = vmatpush2.msra.mxu0 0.0
        %3966 = vmatprep.subr.mxu0 0.0
        %3967 = vmatpush2.msra.mxu0 0.0
        %3968 = vmatprep.subr.mxu0 0.0
        %3969 = vmatpush2.msra.mxu0 0.0
        %3970 = vmatprep.subr.mxu0 0.0
        %3971 = vmatpush2.msra.mxu0 0.0
        %3972 = vmatprep.subr.mxu0 0.0
        %3973 = vmatpush2.msra.mxu0 0.0
        %3974 = vmatprep.subr.mxu0 0.0
        %3975 = vmatpush2.msra.mxu0 0.0
        %3976 = vmatprep.subr.mxu0 0.0
        %3977 = vmatpush2.msra.mxu0 0.0
        %3978 = vmatprep.subr.mxu0 0.0
        %3979 = vmatpush2.msra.mxu0 0.0
        %3980 = vmatprep.subr.mxu0 0.0
        %3981 = vmatpush2.msra.mxu0 0.0
        %3982 = vmatprep.mubr.f32.mxu0 0.0
        %3983 = vmatmul.mubr.f32.gmra.mxu0 %v3894
        %v3984 = vpop.f32.mrf.mxu0
        %v3985 = vadd.f32 0.0, %v3984
        %v3986 = vpop.f32.mrf.mxu0
        %3987 = vmatprep.mubr.f32.mxu0 0.0
        %3988 = vmatmul.mubr.f32.gmra.mxu0 %v3899
        %v3989 = vpop.f32.mrf.mxu0
        %v3990 = vadd.f32 0.0, %v3989
        %v3991 = vpop.f32.mrf.mxu0
        %3992 = vdwg.mxu0
        %3993 = vmatprep.subr.mxu0 0.0
        %3994 = vmatpush1.msra.mxu0 %v3826
        %3995 = vmatprep.subr.mxu0 0.0
        %3996 = vmatpush1.msra.mxu0 %v3825
        %3997 = vmatprep.subr.mxu0 0.0
        %3998 = vmatpush1.msra.mxu0 %v3824
        %3999 = vmatprep.subr.mxu0 0.0
        %4000 = vmatpush1.msra.mxu0 %v3823
        %4001 = vmatprep.subr.mxu0 0.0
        %4002 = vmatpush1.msra.mxu0 %v3822
        %4003 = vmatprep.subr.mxu0 0.0
        %4004 = vmatpush1.msra.mxu0 %v3821
        %4005 = vmatprep.subr.mxu0 0.0
        %4006 = vmatpush1.msra.mxu0 %v3820
        %4007 = vmatprep.subr.mxu0 0.0
        %4008 = vmatpush1.msra.mxu0 %v3819
        %4009 = vmatprep.subr.mxu0 0.0
        %4010 = vmatpush1.msra.mxu0 %v3818
        %4011 = vmatprep.subr.mxu0 0.0
        %4012 = vmatpush1.msra.mxu0 %v3817
        %4013 = vmatprep.subr.mxu0 0.0
        %4014 = vmatpush1.msra.mxu0 %v3816
        %4015 = vmatprep.subr.mxu0 0.0
        %4016 = vmatpush1.msra.mxu0 %v3815
        %4017 = vmatprep.subr.mxu0 0.0
        %4018 = vmatpush1.msra.mxu0 %v3814
        %4019 = vmatprep.subr.mxu0 0.0
        %4020 = vmatpush1.msra.mxu0 %v3813
        %4021 = vmatprep.subr.mxu0 0.0
        %4022 = vmatpush1.msra.mxu0 %v3812
        %4023 = vmatprep.subr.mxu0 0.0
        %4024 = vmatpush1.msra.mxu0 %v3811
        %4025 = vmatprep.subr.mxu0 0.0
        %4026 = vmatpush2.msra.mxu0 0.0
        %4027 = vmatprep.subr.mxu0 0.0
        %4028 = vmatpush2.msra.mxu0 0.0
        %4029 = vmatprep.subr.mxu0 0.0
        %4030 = vmatpush2.msra.mxu0 0.0
        %4031 = vmatprep.subr.mxu0 0.0
        %4032 = vmatpush2.msra.mxu0 0.0
        %4033 = vmatprep.subr.mxu0 0.0
        %4034 = vmatpush2.msra.mxu0 0.0
        %4035 = vmatprep.subr.mxu0 0.0
        %4036 = vmatpush2.msra.mxu0 0.0
        %4037 = vmatprep.subr.mxu0 0.0
        %4038 = vmatpush2.msra.mxu0 0.0
        %4039 = vmatprep.subr.mxu0 0.0
        %4040 = vmatpush2.msra.mxu0 0.0
        %4041 = vmatprep.subr.mxu0 0.0
        %4042 = vmatpush2.msra.mxu0 0.0
        %4043 = vmatprep.subr.mxu0 0.0
        %4044 = vmatpush2.msra.mxu0 0.0
        %4045 = vmatprep.subr.mxu0 0.0
        %4046 = vmatpush2.msra.mxu0 0.0
        %4047 = vmatprep.subr.mxu0 0.0
        %4048 = vmatpush2.msra.mxu0 0.0
        %4049 = vmatprep.subr.mxu0 0.0
        %4050 = vmatpush2.msra.mxu0 0.0
        %4051 = vmatprep.subr.mxu0 0.0
        %4052 = vmatpush2.msra.mxu0 0.0
        %4053 = vmatprep.subr.mxu0 0.0
        %4054 = vmatpush2.msra.mxu0 0.0
        %4055 = vmatprep.subr.mxu0 0.0
        %4056 = vmatpush2.msra.mxu0 0.0
        %4057 = vmatprep.mubr.f32.mxu0 0.0
        %4058 = vmatmul.mubr.f32.gmra.mxu0 %v3808
        %v4059 = vpop.f32.mrf.mxu0
        %v4060 = vadd.f32 %v3985, %v4059
        %v4061 = vpop.f32.mrf.mxu0
        %4062 = vmatprep.mubr.f32.mxu0 0.0
        %4063 = vmatmul.mubr.f32.gmra.mxu0 %v3809
        %v4064 = vpop.f32.mrf.mxu0
        %v4065 = vadd.f32 %v3990, %v4064
        %v4066 = vpop.f32.mrf.mxu0
        %4067 = vdwg.mxu0
        %4068 = vmatprep.subr.mxu0 0.0
        %4069 = vmatpush1.msra.mxu0 0.0
        %4070 = vmatprep.subr.mxu0 0.0
        %4071 = vmatpush1.msra.mxu0 0.0
        %4072 = vmatprep.subr.mxu0 0.0
        %4073 = vmatpush1.msra.mxu0 0.0
        %4074 = vmatprep.subr.mxu0 0.0
        %4075 = vmatpush1.msra.mxu0 0.0
        %4076 = vmatprep.subr.mxu0 0.0
        %4077 = vmatpush1.msra.mxu0 0.0
        %4078 = vmatprep.subr.mxu0 0.0
        %4079 = vmatpush1.msra.mxu0 0.0
        %4080 = vmatprep.subr.mxu0 0.0
        %4081 = vmatpush1.msra.mxu0 0.0
        %4082 = vmatprep.subr.mxu0 0.0
        %4083 = vmatpush1.msra.mxu0 0.0
        %4084 = vmatprep.subr.mxu0 0.0
        %4085 = vmatpush1.msra.mxu0 0.0
        %4086 = vmatprep.subr.mxu0 0.0
        %4087 = vmatpush1.msra.mxu0 0.0
        %4088 = vmatprep.subr.mxu0 0.0
        %4089 = vmatpush1.msra.mxu0 0.0
        %4090 = vmatprep.subr.mxu0 0.0
        %4091 = vmatpush1.msra.mxu0 0.0
        %4092 = vmatprep.subr.mxu0 0.0
        %4093 = vmatpush1.msra.mxu0 0.0
        %4094 = vmatprep.subr.mxu0 0.0
        %4095 = vmatpush1.msra.mxu0 0.0
        %4096 = vmatprep.subr.mxu0 0.0
        %4097 = vmatpush1.msra.mxu0 %v3809
        %4098 = vmatprep.subr.mxu0 0.0
        %4099 = vmatpush1.msra.mxu0 %v3808
        %4100 = vmatprep.subr.mxu0 0.0
        %4101 = vmatpush2.msra.mxu0 0.0
        %4102 = vmatprep.subr.mxu0 0.0
        %4103 = vmatpush2.msra.mxu0 0.0
        %4104 = vmatprep.subr.mxu0 0.0
        %4105 = vmatpush2.msra.mxu0 0.0
        %4106 = vmatprep.subr.mxu0 0.0
        %4107 = vmatpush2.msra.mxu0 0.0
        %4108 = vmatprep.subr.mxu0 0.0
        %4109 = vmatpush2.msra.mxu0 0.0
        %4110 = vmatprep.subr.mxu0 0.0
        %4111 = vmatpush2.msra.mxu0 0.0
        %4112 = vmatprep.subr.mxu0 0.0
        %4113 = vmatpush2.msra.mxu0 0.0
        %4114 = vmatprep.subr.mxu0 0.0
        %4115 = vmatpush2.msra.mxu0 0.0
        %4116 = vmatprep.subr.mxu0 0.0
        %4117 = vmatpush2.msra.mxu0 0.0
        %4118 = vmatprep.subr.mxu0 0.0
        %4119 = vmatpush2.msra.mxu0 0.0
        %4120 = vmatprep.subr.mxu0 0.0
        %4121 = vmatpush2.msra.mxu0 0.0
        %4122 = vmatprep.subr.mxu0 0.0
        %4123 = vmatpush2.msra.mxu0 0.0
        %4124 = vmatprep.subr.mxu0 0.0
        %4125 = vmatpush2.msra.mxu0 0.0
        %4126 = vmatprep.subr.mxu0 0.0
        %4127 = vmatpush2.msra.mxu0 0.0
        %4128 = vmatprep.subr.mxu0 0.0
        %4129 = vmatpush2.msra.mxu0 0.0
        %4130 = vmatprep.subr.mxu0 0.0
        %4131 = vmatpush2.msra.mxu0 0.0
        %4132 = vmatprep.mubr.f32.mxu0 0.0
        %4133 = vmatmul.mubr.f32.gmra.mxu0 %v3200
        %v4134 = vpop.f32.mrf.mxu0
        %v4135 = vadd.f32 0.0, %v4134
        %v4136 = vpop.f32.mrf.mxu0
        %4137 = vmatprep.mubr.f32.mxu0 0.0
        %4138 = vmatmul.mubr.f32.gmra.mxu0 %v3203
        %v4139 = vpop.f32.mrf.mxu0
        %v4140 = vadd.f32 0.0, %v4139
        %v4141 = vpop.f32.mrf.mxu0
        %4142 = vdwg.mxu0
        %s4143 = scalar_lea.vmem %s19, 256
        %v4144 = vld [vmem:[%s4143] sm:$0xff]
        %v4145 = vld [vmem:[%s4143 + $0x8] sm:$0xff]
        %v4146 = vld [vmem:[%s4143 + $0x10] sm:$0xff]
        %v4147 = vld [vmem:[%s4143 + $0x18] sm:$0xff]
        %v4148 = vld [vmem:[%s4143 + $0x20] sm:$0xff]
        %v4149 = vld [vmem:[%s4143 + $0x28] sm:$0xff]
        %v4150 = vld [vmem:[%s4143 + $0x30] sm:$0xff]
        %v4151 = vld [vmem:[%s4143 + $0x38] sm:$0xff]
        %v4152 = vld [vmem:[%s4143 + $0x40] sm:$0xff]
        %v4153 = vld [vmem:[%s4143 + $0x48] sm:$0xff]
        %v4154 = vld [vmem:[%s4143 + $0x50] sm:$0xff]
        %v4155 = vld [vmem:[%s4143 + $0x58] sm:$0xff]
        %v4156 = vld [vmem:[%s4143 + $0x60] sm:$0xff]
        %v4157 = vld [vmem:[%s4143 + $0x68] sm:$0xff]
        %v4158 = vld [vmem:[%s4143 + $0x70] sm:$0xff]
        %v4159 = vld [vmem:[%s4143 + $0x78] sm:$0xff]
        %4160 = vmatprep.subr.mxu0 0.0
        %4161 = vmatpush1.msra.mxu0 %v4159
        %4162 = vmatprep.subr.mxu0 0.0
        %4163 = vmatpush1.msra.mxu0 %v4158
        %4164 = vmatprep.subr.mxu0 0.0
        %4165 = vmatpush1.msra.mxu0 %v4157
        %4166 = vmatprep.subr.mxu0 0.0
        %4167 = vmatpush1.msra.mxu0 %v4156
        %4168 = vmatprep.subr.mxu0 0.0
        %4169 = vmatpush1.msra.mxu0 %v4155
        %4170 = vmatprep.subr.mxu0 0.0
        %4171 = vmatpush1.msra.mxu0 %v4154
        %4172 = vmatprep.subr.mxu0 0.0
        %4173 = vmatpush1.msra.mxu0 %v4153
        %4174 = vmatprep.subr.mxu0 0.0
        %4175 = vmatpush1.msra.mxu0 %v4152
        %4176 = vmatprep.subr.mxu0 0.0
        %4177 = vmatpush1.msra.mxu0 %v4151
        %4178 = vmatprep.subr.mxu0 0.0
        %4179 = vmatpush1.msra.mxu0 %v4150
        %4180 = vmatprep.subr.mxu0 0.0
        %4181 = vmatpush1.msra.mxu0 %v4149
        %4182 = vmatprep.subr.mxu0 0.0
        %4183 = vmatpush1.msra.mxu0 %v4148
        %4184 = vmatprep.subr.mxu0 0.0
        %4185 = vmatpush1.msra.mxu0 %v4147
        %4186 = vmatprep.subr.mxu0 0.0
        %4187 = vmatpush1.msra.mxu0 %v4146
        %4188 = vmatprep.subr.mxu0 0.0
        %4189 = vmatpush1.msra.mxu0 %v4145
        %4190 = vmatprep.subr.mxu0 0.0
        %4191 = vmatpush1.msra.mxu0 %v4144
        %4192 = vmatprep.subr.mxu0 0.0
        %4193 = vmatpush2.msra.mxu0 0.0
        %4194 = vmatprep.subr.mxu0 0.0
        %4195 = vmatpush2.msra.mxu0 0.0
        %4196 = vmatprep.subr.mxu0 0.0
        %4197 = vmatpush2.msra.mxu0 0.0
        %4198 = vmatprep.subr.mxu0 0.0
        %4199 = vmatpush2.msra.mxu0 0.0
        %4200 = vmatprep.subr.mxu0 0.0
        %4201 = vmatpush2.msra.mxu0 0.0
        %4202 = vmatprep.subr.mxu0 0.0
        %4203 = vmatpush2.msra.mxu0 0.0
        %4204 = vmatprep.subr.mxu0 0.0
        %4205 = vmatpush2.msra.mxu0 0.0
        %4206 = vmatprep.subr.mxu0 0.0
        %4207 = vmatpush2.msra.mxu0 0.0
        %4208 = vmatprep.subr.mxu0 0.0
        %4209 = vmatpush2.msra.mxu0 0.0
        %4210 = vmatprep.subr.mxu0 0.0
        %4211 = vmatpush2.msra.mxu0 0.0
        %4212 = vmatprep.subr.mxu0 0.0
        %4213 = vmatpush2.msra.mxu0 0.0
        %4214 = vmatprep.subr.mxu0 0.0
        %4215 = vmatpush2.msra.mxu0 0.0
        %4216 = vmatprep.subr.mxu0 0.0
        %4217 = vmatpush2.msra.mxu0 0.0
        %4218 = vmatprep.subr.mxu0 0.0
        %4219 = vmatpush2.msra.mxu0 0.0
        %4220 = vmatprep.subr.mxu0 0.0
        %4221 = vmatpush2.msra.mxu0 0.0
        %4222 = vmatprep.subr.mxu0 0.0
        %4223 = vmatpush2.msra.mxu0 0.0
        %4224 = vmatprep.mubr.f32.mxu0 0.0
        %4225 = vmatmul.mubr.f32.gmra.mxu0 %v4135
        %v4226 = vpop.f32.mrf.mxu0
        %v4227 = vadd.f32 0.0, %v4226
        %v4228 = vpop.f32.mrf.mxu0
        %4229 = vmatprep.mubr.f32.mxu0 0.0
        %4230 = vmatmul.mubr.f32.gmra.mxu0 %v4140
        %v4231 = vpop.f32.mrf.mxu0
        %v4232 = vadd.f32 0.0, %v4231
        %v4233 = vpop.f32.mrf.mxu0
        %4234 = vdwg.mxu0
        %v4235 = vadd.f32 %v4060, %v4227
        %v4236 = vadd.f32 %v4065, %v4232
        %v4237 = vld [vmem:[%s20] sm:$0x1]
        %v4239 = vlaneseq
        %v4240 = vshrl.u32 %v4239, 7
        %v4241 = vsub.s32 0, %v4240
        %v4242 = vrot.slane %v4237, %v4241
        %v4244 = vadd.f32 %v4235, %v4242
        %v4245 = vadd.f32 %v4236, %v4242
        %v4246 = vmax.f32 %v4244, 0.0
        %v4247 = vmax.f32 %v4245, 0.0
        %v4248 = vld [vmem:[%s21] sm:$0xff]
        %v4249 = vld [vmem:[%s21 + $0x8] sm:$0xff]
        %v4250 = vld [vmem:[%s21 + $0x10] sm:$0xff]
        %v4251 = vld [vmem:[%s21 + $0x18] sm:$0xff]
        %v4252 = vld [vmem:[%s21 + $0x20] sm:$0xff]
        %v4253 = vld [vmem:[%s21 + $0x28] sm:$0xff]
        %v4254 = vld [vmem:[%s21 + $0x30] sm:$0xff]
        %v4255 = vld [vmem:[%s21 + $0x38] sm:$0xff]
        %v4256 = vld [vmem:[%s22] sm:$0x1]
        %v4258 = vlaneseq
        %v4259 = vshrl.u32 %v4258, 7
        %v4260 = vsub.s32 0, %v4259
        %v4261 = vrot.slane %v4256, %v4260
        %vm4263 = vcmask 523264
        %v4265 = vsel %vm4263, %v4246, 0
        %v4268 = vsel %vm4263, %v4247, 0
        %4270 = vmatprep.subr.mxu0 0.0
        %4271 = vmatpush1.msra.mxu0 0.0
        %4272 = vmatprep.subr.mxu0 0.0
        %4273 = vmatpush1.msra.mxu0 0.0
        %4274 = vmatprep.subr.mxu0 0.0
        %4275 = vmatpush1.msra.mxu0 0.0
        %4276 = vmatprep.subr.mxu0 0.0
        %4277 = vmatpush1.msra.mxu0 0.0
        %4278 = vmatprep.subr.mxu0 0.0
        %4279 = vmatpush1.msra.mxu0 0.0
        %4280 = vmatprep.subr.mxu0 0.0
        %4281 = vmatpush1.msra.mxu0 0.0
        %4282 = vmatprep.subr.mxu0 0.0
        %4283 = vmatpush1.msra.mxu0 0.0
        %4284 = vmatprep.subr.mxu0 0.0
        %4285 = vmatpush1.msra.mxu0 0.0
        %4286 = vmatprep.subr.mxu0 0.0
        %4287 = vmatpush1.msra.mxu0 %v4255
        %4288 = vmatprep.subr.mxu0 0.0
        %4289 = vmatpush1.msra.mxu0 %v4254
        %4290 = vmatprep.subr.mxu0 0.0
        %4291 = vmatpush1.msra.mxu0 %v4253
        %4292 = vmatprep.subr.mxu0 0.0
        %4293 = vmatpush1.msra.mxu0 %v4252
        %4294 = vmatprep.subr.mxu0 0.0
        %4295 = vmatpush1.msra.mxu0 %v4251
        %4296 = vmatprep.subr.mxu0 0.0
        %4297 = vmatpush1.msra.mxu0 %v4250
        %4298 = vmatprep.subr.mxu0 0.0
        %4299 = vmatpush1.msra.mxu0 %v4249
        %4300 = vmatprep.subr.mxu0 0.0
        %4301 = vmatpush1.msra.mxu0 %v4248
        %4302 = vmatprep.subr.mxu0 0.0
        %4303 = vmatpush2.msra.mxu0 0.0
        %4304 = vmatprep.subr.mxu0 0.0
        %4305 = vmatpush2.msra.mxu0 0.0
        %4306 = vmatprep.subr.mxu0 0.0
        %4307 = vmatpush2.msra.mxu0 0.0
        %4308 = vmatprep.subr.mxu0 0.0
        %4309 = vmatpush2.msra.mxu0 0.0
        %4310 = vmatprep.subr.mxu0 0.0
        %4311 = vmatpush2.msra.mxu0 0.0
        %4312 = vmatprep.subr.mxu0 0.0
        %4313 = vmatpush2.msra.mxu0 0.0
        %4314 = vmatprep.subr.mxu0 0.0
        %4315 = vmatpush2.msra.mxu0 0.0
        %4316 = vmatprep.subr.mxu0 0.0
        %4317 = vmatpush2.msra.mxu0 0.0
        %4318 = vmatprep.subr.mxu0 0.0
        %4319 = vmatpush2.msra.mxu0 0.0
        %4320 = vmatprep.subr.mxu0 0.0
        %4321 = vmatpush2.msra.mxu0 0.0
        %4322 = vmatprep.subr.mxu0 0.0
        %4323 = vmatpush2.msra.mxu0 0.0
        %4324 = vmatprep.subr.mxu0 0.0
        %4325 = vmatpush2.msra.mxu0 0.0
        %4326 = vmatprep.subr.mxu0 0.0
        %4327 = vmatpush2.msra.mxu0 0.0
        %4328 = vmatprep.subr.mxu0 0.0
        %4329 = vmatpush2.msra.mxu0 0.0
        %4330 = vmatprep.subr.mxu0 0.0
        %4331 = vmatpush2.msra.mxu0 0.0
        %4332 = vmatprep.subr.mxu0 0.0
        %4333 = vmatpush2.msra.mxu0 0.0
        %4334 = vmatprep.mubr.f32.mxu0 0.0
        %4335 = vmatmul.mubr.f32.gmra.mxu0 %v4265
        %v4336 = vpop.f32.mrf.mxu0
        %v4337 = vadd.f32 %v4261, %v4336
        %v4338 = vpop.f32.mrf.mxu0
        %4339 = vmatprep.mubr.f32.mxu0 0.0
        %4340 = vmatmul.mubr.f32.gmra.mxu0 %v4268
        %v4341 = vpop.f32.mrf.mxu0
        %v4342 = vadd.f32 %v4261, %v4341
        %v4343 = vpop.f32.mrf.mxu0
        %4344 = vdwg.mxu0
        %v4345 = vsub.f32 0.0, %v4337
        %v4346 = vsub.f32 0.0, %v4342
        %v4347 = vmul.f32 %v4345, 1.442695
        %v4348 = vpow.pop %v4347
        %v4349 = vmul.f32 %v4346, 1.442695
        %v4350 = vpow.pop %v4349
        %v4351 = vadd.f32 %v4348, 1.0
        %v4352 = vadd.f32 %v4350, 1.0
        %v4353 = vrcp.pop %v4351
        %v4354 = vmul.f32 1.0, %v4353
        %v4355 = vrcp.pop %v4352
        %v4356 = vmul.f32 1.0, %v4355
        %4357 = vst.msk [vmem:[%s774] sm:$0xff] %vm864, %v4354
        %4358 = vst.msk [vmem:[%s774 + $0x8] sm:$0xff] %vm864, %v4356
        %p4359 = scmp.lt.s32.totalorder %s36, 1
        %s4360 = scalar_select %p4359, %s36, 1
        %s4361 = smul.addr %s4360, 2
        %s4362 = smul.addr %s4361, 8
        %s4363 = scalar_lea.vmem %s23, %s4362
        // Predicated region
        $region121: #{unet_forward_pallas.1} parent=111 // pred_check
          %p4364 = pneg %p552
        $region122: #{unet_forward_pallas.1} parent=111 // pred_check_branch
          %4366 = sbr.rel (%p4364) target = $region124
        $region123: #{unet_forward_pallas.1} parent=111 // pred_region
          _
        $region124: #{unet_forward_pallas.1} parent=111 // pred_fallthru
          _
      $region112: #{unet_forward_pallas.1} parent=5 // pred_fallthru
        _
      %p4367 = scmp.le.s32.totalorder 2, %s31
      // Predicated region
      $region125: #{unet_forward_pallas.1} parent=5 // pred_check
        %p4368 = pneg %p4367
      $region126: #{unet_forward_pallas.1} parent=5 // pred_check_branch
        %4370 = sbr.rel (%p4368) target = $region128
      $region127: #{unet_forward_pallas.1} parent=5 // pred_region
        %s4371 = ssub.s32 %s31, 2
        // Predicated region
        $region129: #{unet_forward_pallas.1} parent=127 // pred_check
          %p4372 = pneg %p558
        $region130: #{unet_forward_pallas.1} parent=127 // pred_check_branch
          %4374 = sbr.rel (%p4372) target = $region132
        $region131: #{unet_forward_pallas.1} parent=127 // pred_region
          %p4375 = scmp.lt.s32.totalorder %s37, 1
          %s4376 = scalar_select %p4375, %s37, 1
          %s4377 = smul.addr %s4376, 2
          %s4378 = smul.addr %s4377, 8
          %s4379 = scalar_lea.vmem %s23, %s4378
        $region132: #{unet_forward_pallas.1} parent=127 // pred_fallthru
          _
      $region128: #{unet_forward_pallas.1} parent=5 // pred_fallthru
        _
    $region6: #{unet_forward_pallas.1} parent=1 // loop_footer
      %s35 = sadd.s32 1, %s31
    $region7: #{unet_forward_pallas.1} parent=1 // loop_footer_branch
      %30 = sbr.rel target = $region3
    $region8: #{unet_forward_pallas.1} parent=1 // loop_exit
      _
    %4380 = vsyncpa [#allocation3], 1
    %s4381 = scalar_lea.sflag [#allocation3], 1
    %4382 = vsyncpa %s4381, 1
    %4383 = vsyncpa [#allocation5], 1

</llo_original>
